<compile_context>
chip_gen: v6e
topology: v6e:2x2x1
jax: 0.10.0
libtpu: 0.0.40
codegen_flags: <defaults>
</compile_context>

<pallas_src>
import numpy as np
import jax
import jax.numpy as jnp
from jax.experimental import pallas as pl
from jax.experimental.pallas import tpu as pltpu  # noqa: F401  (no TPU-specific scratch needed in this version)

# ---- sizes implied by the module -------------------------------------------
C_IN = 65           # bn_l0 / conv_3 in_channels
C_MID = 64          # conv_3 out_channels
C_HEAD = 2          # conv_1 out_channels
L_IN = 250          # conv3(k=3) -> 248, maxpool(3, stride=2) -> 123
L_CONV = 248
L_WIN = 246         # number of length-3 window start positions (0..245)
L_POOL = 123
FEAT = C_HEAD * L_POOL   # 246 == bn_l1 features
H = 200             # 2 * input_size (input_size hard-coded to 100 in __init__)
H3 = 100
SEG = 256           # 128-aligned per-sample lane segment (250 -> 256)
BN_EPS = 1e-5


def _elu(x):
    # F.elu with alpha=1.0
    return jnp.where(x > 0, x, jnp.exp(jnp.minimum(x, 0.0)) - 1.0)


# ---- fused kernel: conv head + MLP, whole batch per invocation --------------
def fused_kernel(xim_ref, w3s_ref, b3_ref, w1c_ref, b1c_ref,
                 w1a_ref, w1b_ref, bl1_ref,
                 w2_ref, bl2_ref, w3l_ref, bl3_ref,
                 w4_ref, bl4_ref, out_ref):
    B = out_ref.shape[0]
    W = xim_ref.shape[1]                       # == B * SEG

    # ---- conv_3 (bn_l0 folded): ONE wide bf16 matmul over the whole batch
    # (im2col K = 3*65 = 195, N = B*256 lanes; single K pass, full lane fill).
    acc = jnp.dot(w3s_ref[...], xim_ref[...],
                  preferred_element_type=jnp.float32)            # (64, W) f32

    # ---- MaxPool1d(3, stride=2), window-max part. ELU is monotone and the
    # conv bias is a per-channel constant, so pooling happens BEFORE bias+ELU.
    m = jnp.maximum(jnp.maximum(acc[:, 0:W - 2], acc[:, 1:W - 1]),
                    acc[:, 2:W])                                 # (64, W-2)

    # ---- conv3 bias + ELU at pooled resolution, then the 1x1 conv over
    # channels on the full window-position axis; the stride-2 pick commutes
    # with the per-position linear conv_1 and is applied afterwards (cheap).
    h1 = _elu(m + b3_ref[...])                                   # (64, W-2)
    z = jnp.dot(w1c_ref[...], h1,
                preferred_element_type=jnp.float32)              # (2,  W-2)

    # stride-2 window selection (0/1 matrix built in-kernel -> no operand DMA)
    rows = jax.lax.broadcasted_iota(jnp.int32, (L_WIN, L_POOL), 0)
    cols = jax.lax.broadcasted_iota(jnp.int32, (L_WIN, L_POOL), 1)
    sel = (rows == 2 * cols).astype(jnp.float32)                 # (246, 123)
    b1c = b1c_ref[...]                                           # (2, 1)

    # Per-sample tail: 128-aligned lane slice, tiny (2x246x123) select matmul,
    # conv_1 bias + ELU, then a register-level sublane scatter into (B, 123)
    # feature rows (no VMEM scratch round trip, no masked single-sublane stores).
    row_ids = jax.lax.broadcasted_iota(jnp.int32, (B, L_POOL), 0)
    f0 = jnp.zeros((B, L_POOL), jnp.float32)     # conv_1 channel-0 features
    f1 = jnp.zeros((B, L_POOL), jnp.float32)     # conv_1 channel-1 features
    for b in range(B):                           # B=4; per-iter live set is tiny
        zb = z[:, b * SEG:b * SEG + L_WIN]                       # (2, 246)
        yb = _elu(jnp.dot(zb, sel, preferred_element_type=jnp.float32) + b1c)
        f0 = jnp.where(row_ids == b, yb[0:1, :], f0)
        f1 = jnp.where(row_ids == b, yb[1:2, :], f1)

    # ---- MLP: bn_l1/2/3 folded into l1/l2/l3, dropout = identity (eval).
    # Weights stored bf16 (halved DMA); activations kept f32 for accuracy.
    def dot_f32(a, w_ref):
        return jnp.dot(a, w_ref[...].astype(jnp.float32),
                       preferred_element_type=jnp.float32)

    # x.view(B,-1) channel-major flatten realised by splitting the bn_l1-folded
    # l1 weight by conv_1 output channel (W1a for channel 0, W1b for channel 1).
    h = _elu(dot_f32(f0, w1a_ref) + dot_f32(f1, w1b_ref) + bl1_ref[...])
    h = _elu(dot_f32(h, w2_ref) + bl2_ref[...])
    h = _elu(dot_f32(h, w3l_ref) + bl3_ref[...])
    out_ref[...] = dot_f32(h, w4_ref) + bl4_ref[...]


# ---- trace-time BN folding helpers ------------------------------------------
def _fold_bn(p):
    g, b, m, v = p
    s = g / jnp.sqrt(v + BN_EPS)
    return s, b - m * s


def _fold_bn_into_linear(w_t, b, bn):
    # l(bn(f)) = (f*s + t) @ w_t.T + b = f @ (w_t.T * s[:,None]) + (b + w_t @ t)
    s, t = _fold_bn(bn)
    return (w_t.T * s[:, None]).astype(jnp.float32), (b + w_t @ t).astype(jnp.float32)


def nn_forward(x_ncl, params):
    B = x_ncl.shape[0]
    x = x_ncl.astype(jnp.float32)                        # native (B, 65, 250) NCL layout

    # bn_l0 folded into conv_3:  w3'[o,c,k] = w3[o,c,k]*s0[c],
    #                            b3' = b3 + sum_{c,k} w3[o,c,k]*t0[c]
    s0, t0 = _fold_bn(params["bn0"])
    w3 = params["conv3_w"]                               # (64, 65, 3)
    w3f = w3 * s0[None, :, None]
    b3f = params["conv3_b"] + jnp.einsum("ock,c->o", w3, t0)
    # im2col-merged conv_3 weight: K index = k*65 + c  -> (64, 195), bf16
    w3s = jnp.transpose(w3f, (0, 2, 1)).reshape(C_MID, 3 * C_IN).astype(jnp.bfloat16)
    b3col = b3f.reshape(C_MID, 1).astype(jnp.float32)

    # im2col input, batched on the lane axis with 128-aligned 256-wide segments:
    # row k*65 + c, column b*256 + p  ==  x[b, c, p + k]   (zero padded past 250)
    xt = jnp.transpose(x, (1, 0, 2))                     # (65, B, 250)
    taps = []
    for k in range(3):
        tap = xt[:, :, k:L_IN]                           # (65, B, 250-k)
        tap = jnp.pad(tap, ((0, 0), (0, 0), (0, SEG - (L_IN - k))))
        taps.append(tap)                                 # (65, B, 256)
    xim = jnp.concatenate(taps, axis=0).reshape(3 * C_IN, B * SEG).astype(jnp.bfloat16)

    w1cT = params["conv1_w"][:, :, 0].astype(jnp.float32)     # (2, 64)
    b1col = params["conv1_b"].reshape(C_HEAD, 1).astype(jnp.float32)

    # bn_l1/2/3 folded into l1/l2/l3; l1 split by conv_1 output channel so the
    # channel-major flatten never has to be materialised in-kernel.
    W1f, b1f = _fold_bn_into_linear(params["l1_w"], params["l1_b"], params["bn1"])
    W1a = W1f[:L_POOL].astype(jnp.bfloat16)              # rows for channel 0
    W1b = W1f[L_POOL:].astype(jnp.bfloat16)              # rows for channel 1
    W2f, b2f = _fold_bn_into_linear(params["l2_w"], params["l2_b"], params["bn2"])
    W3f, b3fl = _fold_bn_into_linear(params["l3_w"], params["l3_b"], params["bn3"])
    out_size = params["l4_w"].shape[0]
    W4f = params["l4_w"].T.astype(jnp.bfloat16)
    b4f = params["l4_b"].astype(jnp.float32)

    # Single fused, grid-less pallas_call; all operands resident in VMEM (<1.5 MiB).
    # TODO(synk): for large B add a leading batch grid axis with
    # dimension_semantics=("parallel",) so v7x's two TensorCores split the work;
    # at B=4 the per-step grid overhead would dominate.
    return pl.pallas_call(
        fused_kernel,
        out_shape=jax.ShapeDtypeStruct((B, out_size), jnp.float32),
    )(xim, w3s, b3col, w1cT, b1col,
      W1a, W1b, b1f.reshape(1, H),
      W2f.astype(jnp.bfloat16), b2f.reshape(1, H),
      W3f.astype(jnp.bfloat16), b3fl.reshape(1, H3),
      W4f, b4f.reshape(1, out_size))


# ---- deterministic parameter init (PyTorch shapes) --------------------------
def init_params(key, out_size):
    ks = jax.random.split(key, 16)

    def n(k, shape, scale):
        return (scale * jax.random.normal(k, shape)).astype(jnp.float32)

    def bn(k, c):
        k1, k2, k3, k4 = jax.random.split(k, 4)
        gamma = (1.0 + 0.1 * jax.random.normal(k1, (c,))).astype(jnp.float32)
        beta = (0.1 * jax.random.normal(k2, (c,))).astype(jnp.float32)
        mean = (0.1 * jax.random.normal(k3, (c,))).astype(jnp.float32)
        var = jax.random.uniform(k4, (c,), minval=0.5, maxval=1.5).astype(jnp.float32)
        return (gamma, beta, mean, var)

    p = {}
    p["bn0"] = bn(ks[0], C_IN)
    p["conv3_w"] = n(ks[1], (C_MID, C_IN, 3), 1.0 / np.sqrt(C_IN * 3))
    p["conv3_b"] = n(ks[2], (C_MID,), 0.05)
    p["conv1_w"] = n(ks[3], (C_HEAD, C_MID, 1), 1.0 / np.sqrt(C_MID))
    p["conv1_b"] = n(ks[4], (C_HEAD,), 0.05)
    p["bn1"] = bn(ks[5], FEAT)
    p["l1_w"] = n(ks[6], (H, FEAT), 1.0 / np.sqrt(FEAT))
    p["l1_b"] = n(ks[7], (H,), 0.05)
    p["bn2"] = bn(ks[8], H)
    p["l2_w"] = n(ks[9], (H, H), 1.0 / np.sqrt(H))
    p["l2_b"] = n(ks[10], (H,), 0.05)
    p["bn3"] = bn(ks[11], H)
    p["l3_w"] = n(ks[12], (H3, H), 1.0 / np.sqrt(H))
    p["l3_b"] = n(ks[13], (H3,), 0.05)
    p["l4_w"] = n(ks[14], (out_size, H3), 1.0 / np.sqrt(H3))
    p["l4_b"] = n(ks[15], (out_size,), 0.05)
    return p


# ---- pure-JAX reference (eval-mode semantics) for verification ---------------
def reference_forward(x, params):
    g, b, m, v = params["bn0"]
    y = (x - m[None, :, None]) / jnp.sqrt(v[None, :, None] + BN_EPS) \
        * g[None, :, None] + b[None, :, None]
    y = jax.lax.conv_general_dilated(y, params["conv3_w"], (1,), "VALID",
                                     dimension_numbers=("NCH", "OIH", "NCH"))
    y = _elu(y + params["conv3_b"][None, :, None])
    y = jax.lax.reduce_window(y, -jnp.inf, jax.lax.max, (1, 1, 3), (1, 1, 2), "VALID")
    y = jax.lax.conv_general_dilated(y, params["conv1_w"], (1,), "VALID",
                                     dimension_numbers=("NCH", "OIH", "NCH"))
    y = _elu(y + params["conv1_b"][None, :, None])
    f = y.reshape(y.shape[0], -1)

    def fbn(f, p):
        g, b, m, v = p
        return (f - m) / jnp.sqrt(v + BN_EPS) * g + b

    f = _elu(fbn(f, params["bn1"]) @ params["l1_w"].T + params["l1_b"])
    f = _elu(fbn(f, params["bn2"]) @ params["l2_w"].T + params["l2_b"])
    f = _elu(fbn(f, params["bn3"]) @ params["l3_w"].T + params["l3_b"])
    return f @ params["l4_w"].T + params["l4_b"]


if __name__ == "__main__":
    key = jax.random.PRNGKey(0)
    kx, kp = jax.random.split(key)
    B, OUT = 4, 10
    x = jax.random.normal(kx, (B, C_IN, L_IN), jnp.float32)   # PyTorch NCL input
    params = init_params(kp, OUT)

    out = jax.block_until_ready(nn_forward(x, params))
    ref = jax.block_until_ready(reference_forward(x, params))
    np.testing.assert_allclose(np.asarray(out), np.asarray(ref), rtol=5e-2, atol=5e-2)
    # TODO(synk): dropout / BatchNorm batch-stat updates are training-only; this
    # kernel implements eval-mode (inference) semantics.
    print("KERNEL_OK")
</pallas_src>

<mosaic_0001>
module attributes {stable_mosaic.version = 11 : i64} {
  func.func @fused_kernel(%arg0: memref<195x1024xbf16, #tpu.memory_space<vmem>>, %arg1: memref<64x195xbf16, #tpu.memory_space<vmem>>, %arg2: memref<64x1xf32, #tpu.memory_space<vmem>>, %arg3: memref<2x64xf32, #tpu.memory_space<vmem>>, %arg4: memref<2x1xf32, #tpu.memory_space<vmem>>, %arg5: memref<123x200xbf16, #tpu.memory_space<vmem>>, %arg6: memref<123x200xbf16, #tpu.memory_space<vmem>>, %arg7: memref<1x200xf32, #tpu.memory_space<vmem>>, %arg8: memref<200x200xbf16, #tpu.memory_space<vmem>>, %arg9: memref<1x200xf32, #tpu.memory_space<vmem>>, %arg10: memref<200x100xbf16, #tpu.memory_space<vmem>>, %arg11: memref<1x100xf32, #tpu.memory_space<vmem>>, %arg12: memref<100x10xbf16, #tpu.memory_space<vmem>>, %arg13: memref<1x10xf32, #tpu.memory_space<vmem>>, %arg14: memref<4x10xf32, #tpu.memory_space<vmem>>) attributes {dimension_semantics = [], scalar_prefetch = 0 : i64, scratch_operands = 0 : i64, tpu.core_type = #tpu.core_type<tc>} {
    %c0 = arith.constant 0 : index
    %c0_0 = arith.constant 0 : index
    %0 = vector.load %arg1[%c0, %c0_0] : memref<64x195xbf16, #tpu.memory_space<vmem>>, vector<64x195xbf16>
    %c0_1 = arith.constant 0 : index
    %c0_2 = arith.constant 0 : index
    %1 = vector.load %arg0[%c0_1, %c0_2] : memref<195x1024xbf16, #tpu.memory_space<vmem>>, vector<195x1024xbf16>
    %cst = arith.constant dense<0.000000e+00> : vector<64x1024xf32>
    %2 = tpu.matmul %0, %1, %cst {dimension_numbers = #tpu.dot_dimension_numbers<[1], [0], [0], [1], [0, 0, 1, 1], [], []>} : vector<64x195xbf16>, vector<195x1024xbf16>, vector<64x1024xf32> -> vector<64x1024xf32>
    %3 = vector.extract_strided_slice %2 {offsets = [0, 0], sizes = [64, 1022], strides = [1, 1]} : vector<64x1024xf32> to vector<64x1022xf32>
    %4 = vector.extract_strided_slice %2 {offsets = [0, 1], sizes = [64, 1022], strides = [1, 1]} : vector<64x1024xf32> to vector<64x1022xf32>
    %5 = arith.maximumf %3, %4 : vector<64x1022xf32>
    %6 = vector.extract_strided_slice %2 {offsets = [0, 2], sizes = [64, 1022], strides = [1, 1]} : vector<64x1024xf32> to vector<64x1022xf32>
    %7 = arith.maximumf %5, %6 : vector<64x1022xf32>
    %c0_3 = arith.constant 0 : index
    %c0_4 = arith.constant 0 : index
    %8 = vector.load %arg2[%c0_3, %c0_4] : memref<64x1xf32, #tpu.memory_space<vmem>>, vector<64x1xf32>
    %9 = vector.broadcast %8 : vector<64x1xf32> to vector<64x1022xf32>
    %10 = arith.addf %7, %9 : vector<64x1022xf32>
    %cst_5 = arith.constant 0.000000e+00 : f32
    %11 = vector.broadcast %cst_5 : f32 to vector<64x1022xf32>
    %12 = arith.cmpf ogt, %10, %11 : vector<64x1022xf32>
    %cst_6 = arith.constant 0.000000e+00 : f32
    %13 = vector.broadcast %cst_6 : f32 to vector<64x1022xf32>
    %14 = arith.minimumf %10, %13 : vector<64x1022xf32>
    %15 = math.exp %14 : vector<64x1022xf32>
    %cst_7 = arith.constant 1.000000e+00 : f32
    %16 = vector.broadcast %cst_7 : f32 to vector<64x1022xf32>
    %17 = arith.subf %15, %16 : vector<64x1022xf32>
    %18 = arith.select %12, %10, %17 : vector<64x1022xi1>, vector<64x1022xf32>
    %c0_8 = arith.constant 0 : index
    %c0_9 = arith.constant 0 : index
    %19 = vector.load %arg3[%c0_8, %c0_9] : memref<2x64xf32, #tpu.memory_space<vmem>>, vector<2x64xf32>
    %cst_10 = arith.constant dense<0.000000e+00> : vector<2x1022xf32>
    %20 = tpu.matmul %19, %18, %cst_10 {dimension_numbers = #tpu.dot_dimension_numbers<[1], [0], [0], [1], [0, 0, 1, 1], [], []>} : vector<2x64xf32>, vector<64x1022xf32>, vector<2x1022xf32> -> vector<2x1022xf32>
    %21 = tpu.iota {dimensions = array<i32: 0>} : vector<246x123xi32>
    %22 = tpu.iota {dimensions = array<i32: 1>} : vector<246x123xi32>
    %c2_i32 = arith.constant 2 : i32
    %23 = vector.broadcast %c2_i32 : i32 to vector<246x123xi32>
    %24 = arith.muli %23, %22 : vector<246x123xi32>
    %25 = arith.cmpi eq, %21, %24 : vector<246x123xi32>
    %26 = arith.extui %25 : vector<246x123xi1> to vector<246x123xi32>
    %27 = arith.sitofp %26 : vector<246x123xi32> to vector<246x123xf32>
    %c0_11 = arith.constant 0 : index
    %c0_12 = arith.constant 0 : index
    %28 = vector.load %arg4[%c0_11, %c0_12] : memref<2x1xf32, #tpu.memory_space<vmem>>, vector<2x1xf32>
    %29 = tpu.iota {dimensions = array<i32: 0>} : vector<4x123xi32>
    %cst_13 = arith.constant 0.000000e+00 : f32
    %30 = vector.broadcast %cst_13 : f32 to vector<4x123xf32>
    %cst_14 = arith.constant 0.000000e+00 : f32
    %31 = vector.broadcast %cst_14 : f32 to vector<4x123xf32>
    %32 = vector.extract_strided_slice %20 {offsets = [0, 0], sizes = [2, 246], strides = [1, 1]} : vector<2x1022xf32> to vector<2x246xf32>
    %cst_15 = arith.constant dense<0.000000e+00> : vector<2x123xf32>
    %33 = tpu.matmul %32, %27, %cst_15 {dimension_numbers = #tpu.dot_dimension_numbers<[1], [0], [0], [1], [0, 0, 1, 1], [], []>} : vector<2x246xf32>, vector<246x123xf32>, vector<2x123xf32> -> vector<2x123xf32>
    %34 = vector.broadcast %28 : vector<2x1xf32> to vector<2x123xf32>
    %35 = arith.addf %33, %34 : vector<2x123xf32>
    %cst_16 = arith.constant 0.000000e+00 : f32
    %36 = vector.broadcast %cst_16 : f32 to vector<2x123xf32>
    %37 = arith.cmpf ogt, %35, %36 : vector<2x123xf32>
    %cst_17 = arith.constant 0.000000e+00 : f32
    %38 = vector.broadcast %cst_17 : f32 to vector<2x123xf32>
    %39 = arith.minimumf %35, %38 : vector<2x123xf32>
    %40 = math.exp %39 : vector<2x123xf32>
    %cst_18 = arith.constant 1.000000e+00 : f32
    %41 = vector.broadcast %cst_18 : f32 to vector<2x123xf32>
    %42 = arith.subf %40, %41 : vector<2x123xf32>
    %43 = arith.select %37, %35, %42 : vector<2x123xi1>, vector<2x123xf32>
    %c0_i32 = arith.constant 0 : i32
    %44 = vector.broadcast %c0_i32 : i32 to vector<4x123xi32>
    %45 = arith.cmpi eq, %29, %44 : vector<4x123xi32>
    %46 = vector.extract_strided_slice %43 {offsets = [0, 0], sizes = [1, 123], strides = [1, 1]} : vector<2x123xf32> to vector<1x123xf32>
    %47 = vector.shape_cast %46 : vector<1x123xf32> to vector<1x123xf32>
    %48 = vector.broadcast %47 : vector<1x123xf32> to vector<4x123xf32>
    %49 = arith.select %45, %48, %30 : vector<4x123xi1>, vector<4x123xf32>
    %c0_i32_19 = arith.constant 0 : i32
    %50 = vector.broadcast %c0_i32_19 : i32 to vector<4x123xi32>
    %51 = arith.cmpi eq, %29, %50 : vector<4x123xi32>
    %52 = vector.extract_strided_slice %43 {offsets = [1, 0], sizes = [1, 123], strides = [1, 1]} : vector<2x123xf32> to vector<1x123xf32>
    %53 = vector.shape_cast %52 : vector<1x123xf32> to vector<1x123xf32>
    %54 = vector.broadcast %53 : vector<1x123xf32> to vector<4x123xf32>
    %55 = arith.select %51, %54, %31 : vector<4x123xi1>, vector<4x123xf32>
    %56 = vector.extract_strided_slice %20 {offsets = [0, 256], sizes = [2, 246], strides = [1, 1]} : vector<2x1022xf32> to vector<2x246xf32>
    %cst_20 = arith.constant dense<0.000000e+00> : vector<2x123xf32>
    %57 = tpu.matmul %56, %27, %cst_20 {dimension_numbers = #tpu.dot_dimension_numbers<[1], [0], [0], [1], [0, 0, 1, 1], [], []>} : vector<2x246xf32>, vector<246x123xf32>, vector<2x123xf32> -> vector<2x123xf32>
    %58 = vector.broadcast %28 : vector<2x1xf32> to vector<2x123xf32>
    %59 = arith.addf %57, %58 : vector<2x123xf32>
    %cst_21 = arith.constant 0.000000e+00 : f32
    %60 = vector.broadcast %cst_21 : f32 to vector<2x123xf32>
    %61 = arith.cmpf ogt, %59, %60 : vector<2x123xf32>
    %cst_22 = arith.constant 0.000000e+00 : f32
    %62 = vector.broadcast %cst_22 : f32 to vector<2x123xf32>
    %63 = arith.minimumf %59, %62 : vector<2x123xf32>
    %64 = math.exp %63 : vector<2x123xf32>
    %cst_23 = arith.constant 1.000000e+00 : f32
    %65 = vector.broadcast %cst_23 : f32 to vector<2x123xf32>
    %66 = arith.subf %64, %65 : vector<2x123xf32>
    %67 = arith.select %61, %59, %66 : vector<2x123xi1>, vector<2x123xf32>
    %c1_i32 = arith.constant 1 : i32
    %68 = vector.broadcast %c1_i32 : i32 to vector<4x123xi32>
    %69 = arith.cmpi eq, %29, %68 : vector<4x123xi32>
    %70 = vector.extract_strided_slice %67 {offsets = [0, 0], sizes = [1, 123], strides = [1, 1]} : vector<2x123xf32> to vector<1x123xf32>
    %71 = vector.shape_cast %70 : vector<1x123xf32> to vector<1x123xf32>
    %72 = vector.broadcast %71 : vector<1x123xf32> to vector<4x123xf32>
    %73 = arith.select %69, %72, %49 : vector<4x123xi1>, vector<4x123xf32>
    %c1_i32_24 = arith.constant 1 : i32
    %74 = vector.broadcast %c1_i32_24 : i32 to vector<4x123xi32>
    %75 = arith.cmpi eq, %29, %74 : vector<4x123xi32>
    %76 = vector.extract_strided_slice %67 {offsets = [1, 0], sizes = [1, 123], strides = [1, 1]} : vector<2x123xf32> to vector<1x123xf32>
    %77 = vector.shape_cast %76 : vector<1x123xf32> to vector<1x123xf32>
    %78 = vector.broadcast %77 : vector<1x123xf32> to vector<4x123xf32>
    %79 = arith.select %75, %78, %55 : vector<4x123xi1>, vector<4x123xf32>
    %80 = vector.extract_strided_slice %20 {offsets = [0, 512], sizes = [2, 246], strides = [1, 1]} : vector<2x1022xf32> to vector<2x246xf32>
    %cst_25 = arith.constant dense<0.000000e+00> : vector<2x123xf32>
    %81 = tpu.matmul %80, %27, %cst_25 {dimension_numbers = #tpu.dot_dimension_numbers<[1], [0], [0], [1], [0, 0, 1, 1], [], []>} : vector<2x246xf32>, vector<246x123xf32>, vector<2x123xf32> -> vector<2x123xf32>
    %82 = vector.broadcast %28 : vector<2x1xf32> to vector<2x123xf32>
    %83 = arith.addf %81, %82 : vector<2x123xf32>
    %cst_26 = arith.constant 0.000000e+00 : f32
    %84 = vector.broadcast %cst_26 : f32 to vector<2x123xf32>
    %85 = arith.cmpf ogt, %83, %84 : vector<2x123xf32>
    %cst_27 = arith.constant 0.000000e+00 : f32
    %86 = vector.broadcast %cst_27 : f32 to vector<2x123xf32>
    %87 = arith.minimumf %83, %86 : vector<2x123xf32>
    %88 = math.exp %87 : vector<2x123xf32>
    %cst_28 = arith.constant 1.000000e+00 : f32
    %89 = vector.broadcast %cst_28 : f32 to vector<2x123xf32>
    %90 = arith.subf %88, %89 : vector<2x123xf32>
    %91 = arith.select %85, %83, %90 : vector<2x123xi1>, vector<2x123xf32>
    %c2_i32_29 = arith.constant 2 : i32
    %92 = vector.broadcast %c2_i32_29 : i32 to vector<4x123xi32>
    %93 = arith.cmpi eq, %29, %92 : vector<4x123xi32>
    %94 = vector.extract_strided_slice %91 {offsets = [0, 0], sizes = [1, 123], strides = [1, 1]} : vector<2x123xf32> to vector<1x123xf32>
    %95 = vector.shape_cast %94 : vector<1x123xf32> to vector<1x123xf32>
    %96 = vector.broadcast %95 : vector<1x123xf32> to vector<4x123xf32>
    %97 = arith.select %93, %96, %73 : vector<4x123xi1>, vector<4x123xf32>
    %c2_i32_30 = arith.constant 2 : i32
    %98 = vector.broadcast %c2_i32_30 : i32 to vector<4x123xi32>
    %99 = arith.cmpi eq, %29, %98 : vector<4x123xi32>
    %100 = vector.extract_strided_slice %91 {offsets = [1, 0], sizes = [1, 123], strides = [1, 1]} : vector<2x123xf32> to vector<1x123xf32>
    %101 = vector.shape_cast %100 : vector<1x123xf32> to vector<1x123xf32>
    %102 = vector.broadcast %101 : vector<1x123xf32> to vector<4x123xf32>
    %103 = arith.select %99, %102, %79 : vector<4x123xi1>, vector<4x123xf32>
    %104 = vector.extract_strided_slice %20 {offsets = [0, 768], sizes = [2, 246], strides = [1, 1]} : vector<2x1022xf32> to vector<2x246xf32>
    %cst_31 = arith.constant dense<0.000000e+00> : vector<2x123xf32>
    %105 = tpu.matmul %104, %27, %cst_31 {dimension_numbers = #tpu.dot_dimension_numbers<[1], [0], [0], [1], [0, 0, 1, 1], [], []>} : vector<2x246xf32>, vector<246x123xf32>, vector<2x123xf32> -> vector<2x123xf32>
    %106 = vector.broadcast %28 : vector<2x1xf32> to vector<2x123xf32>
    %107 = arith.addf %105, %106 : vector<2x123xf32>
    %cst_32 = arith.constant 0.000000e+00 : f32
    %108 = vector.broadcast %cst_32 : f32 to vector<2x123xf32>
    %109 = arith.cmpf ogt, %107, %108 : vector<2x123xf32>
    %cst_33 = arith.constant 0.000000e+00 : f32
    %110 = vector.broadcast %cst_33 : f32 to vector<2x123xf32>
    %111 = arith.minimumf %107, %110 : vector<2x123xf32>
    %112 = math.exp %111 : vector<2x123xf32>
    %cst_34 = arith.constant 1.000000e+00 : f32
    %113 = vector.broadcast %cst_34 : f32 to vector<2x123xf32>
    %114 = arith.subf %112, %113 : vector<2x123xf32>
    %115 = arith.select %109, %107, %114 : vector<2x123xi1>, vector<2x123xf32>
    %c3_i32 = arith.constant 3 : i32
    %116 = vector.broadcast %c3_i32 : i32 to vector<4x123xi32>
    %117 = arith.cmpi eq, %29, %116 : vector<4x123xi32>
    %118 = vector.extract_strided_slice %115 {offsets = [0, 0], sizes = [1, 123], strides = [1, 1]} : vector<2x123xf32> to vector<1x123xf32>
    %119 = vector.shape_cast %118 : vector<1x123xf32> to vector<1x123xf32>
    %120 = vector.broadcast %119 : vector<1x123xf32> to vector<4x123xf32>
    %121 = arith.select %117, %120, %97 : vector<4x123xi1>, vector<4x123xf32>
    %c3_i32_35 = arith.constant 3 : i32
    %122 = vector.broadcast %c3_i32_35 : i32 to vector<4x123xi32>
    %123 = arith.cmpi eq, %29, %122 : vector<4x123xi32>
    %124 = vector.extract_strided_slice %115 {offsets = [1, 0], sizes = [1, 123], strides = [1, 1]} : vector<2x123xf32> to vector<1x123xf32>
    %125 = vector.shape_cast %124 : vector<1x123xf32> to vector<1x123xf32>
    %126 = vector.broadcast %125 : vector<1x123xf32> to vector<4x123xf32>
    %127 = arith.select %123, %126, %103 : vector<4x123xi1>, vector<4x123xf32>
    %c0_36 = arith.constant 0 : index
    %c0_37 = arith.constant 0 : index
    %128 = vector.load %arg5[%c0_36, %c0_37] : memref<123x200xbf16, #tpu.memory_space<vmem>>, vector<123x200xbf16>
    %129 = arith.extf %128 : vector<123x200xbf16> to vector<123x200xf32>
    %cst_38 = arith.constant dense<0.000000e+00> : vector<4x200xf32>
    %130 = tpu.matmul %121, %129, %cst_38 {dimension_numbers = #tpu.dot_dimension_numbers<[1], [0], [0], [1], [0, 0, 1, 1], [], []>} : vector<4x123xf32>, vector<123x200xf32>, vector<4x200xf32> -> vector<4x200xf32>
    %c0_39 = arith.constant 0 : index
    %c0_40 = arith.constant 0 : index
    %131 = vector.load %arg6[%c0_39, %c0_40] : memref<123x200xbf16, #tpu.memory_space<vmem>>, vector<123x200xbf16>
    %132 = arith.extf %131 : vector<123x200xbf16> to vector<123x200xf32>
    %cst_41 = arith.constant dense<0.000000e+00> : vector<4x200xf32>
    %133 = tpu.matmul %127, %132, %cst_41 {dimension_numbers = #tpu.dot_dimension_numbers<[1], [0], [0], [1], [0, 0, 1, 1], [], []>} : vector<4x123xf32>, vector<123x200xf32>, vector<4x200xf32> -> vector<4x200xf32>
    %134 = arith.addf %130, %133 : vector<4x200xf32>
    %c0_42 = arith.constant 0 : index
    %c0_43 = arith.constant 0 : index
    %135 = vector.load %arg7[%c0_42, %c0_43] : memref<1x200xf32, #tpu.memory_space<vmem>>, vector<1x200xf32>
    %136 = vector.broadcast %135 : vector<1x200xf32> to vector<4x200xf32>
    %137 = arith.addf %134, %136 : vector<4x200xf32>
    %cst_44 = arith.constant 0.000000e+00 : f32
    %138 = vector.broadcast %cst_44 : f32 to vector<4x200xf32>
    %139 = arith.cmpf ogt, %137, %138 : vector<4x200xf32>
    %cst_45 = arith.constant 0.000000e+00 : f32
    %140 = vector.broadcast %cst_45 : f32 to vector<4x200xf32>
    %141 = arith.minimumf %137, %140 : vector<4x200xf32>
    %142 = math.exp %141 : vector<4x200xf32>
    %cst_46 = arith.constant 1.000000e+00 : f32
    %143 = vector.broadcast %cst_46 : f32 to vector<4x200xf32>
    %144 = arith.subf %142, %143 : vector<4x200xf32>
    %145 = arith.select %139, %137, %144 : vector<4x200xi1>, vector<4x200xf32>
    %c0_47 = arith.constant 0 : index
    %c0_48 = arith.constant 0 : index
    %146 = vector.load %arg8[%c0_47, %c0_48] : memref<200x200xbf16, #tpu.memory_space<vmem>>, vector<200x200xbf16>
    %147 = arith.extf %146 : vector<200x200xbf16> to vector<200x200xf32>
    %cst_49 = arith.constant dense<0.000000e+00> : vector<4x200xf32>
    %148 = tpu.matmul %145, %147, %cst_49 {dimension_numbers = #tpu.dot_dimension_numbers<[1], [0], [0], [1], [0, 0, 1, 1], [], []>} : vector<4x200xf32>, vector<200x200xf32>, vector<4x200xf32> -> vector<4x200xf32>
    %c0_50 = arith.constant 0 : index
    %c0_51 = arith.constant 0 : index
    %149 = vector.load %arg9[%c0_50, %c0_51] : memref<1x200xf32, #tpu.memory_space<vmem>>, vector<1x200xf32>
    %150 = vector.broadcast %149 : vector<1x200xf32> to vector<4x200xf32>
    %151 = arith.addf %148, %150 : vector<4x200xf32>
    %cst_52 = arith.constant 0.000000e+00 : f32
    %152 = vector.broadcast %cst_52 : f32 to vector<4x200xf32>
    %153 = arith.cmpf ogt, %151, %152 : vector<4x200xf32>
    %cst_53 = arith.constant 0.000000e+00 : f32
    %154 = vector.broadcast %cst_53 : f32 to vector<4x200xf32>
    %155 = arith.minimumf %151, %154 : vector<4x200xf32>
    %156 = math.exp %155 : vector<4x200xf32>
    %cst_54 = arith.constant 1.000000e+00 : f32
    %157 = vector.broadcast %cst_54 : f32 to vector<4x200xf32>
    %158 = arith.subf %156, %157 : vector<4x200xf32>
    %159 = arith.select %153, %151, %158 : vector<4x200xi1>, vector<4x200xf32>
    %c0_55 = arith.constant 0 : index
    %c0_56 = arith.constant 0 : index
    %160 = vector.load %arg10[%c0_55, %c0_56] : memref<200x100xbf16, #tpu.memory_space<vmem>>, vector<200x100xbf16>
    %161 = arith.extf %160 : vector<200x100xbf16> to vector<200x100xf32>
    %cst_57 = arith.constant dense<0.000000e+00> : vector<4x100xf32>
    %162 = tpu.matmul %159, %161, %cst_57 {dimension_numbers = #tpu.dot_dimension_numbers<[1], [0], [0], [1], [0, 0, 1, 1], [], []>} : vector<4x200xf32>, vector<200x100xf32>, vector<4x100xf32> -> vector<4x100xf32>
    %c0_58 = arith.constant 0 : index
    %c0_59 = arith.constant 0 : index
    %163 = vector.load %arg11[%c0_58, %c0_59] : memref<1x100xf32, #tpu.memory_space<vmem>>, vector<1x100xf32>
    %164 = vector.broadcast %163 : vector<1x100xf32> to vector<4x100xf32>
    %165 = arith.addf %162, %164 : vector<4x100xf32>
    %cst_60 = arith.constant 0.000000e+00 : f32
    %166 = vector.broadcast %cst_60 : f32 to vector<4x100xf32>
    %167 = arith.cmpf ogt, %165, %166 : vector<4x100xf32>
    %cst_61 = arith.constant 0.000000e+00 : f32
    %168 = vector.broadcast %cst_61 : f32 to vector<4x100xf32>
    %169 = arith.minimumf %165, %168 : vector<4x100xf32>
    %170 = math.exp %169 : vector<4x100xf32>
    %cst_62 = arith.constant 1.000000e+00 : f32
    %171 = vector.broadcast %cst_62 : f32 to vector<4x100xf32>
    %172 = arith.subf %170, %171 : vector<4x100xf32>
    %173 = arith.select %167, %165, %172 : vector<4x100xi1>, vector<4x100xf32>
    %c0_63 = arith.constant 0 : index
    %c0_64 = arith.constant 0 : index
    %174 = vector.load %arg12[%c0_63, %c0_64] : memref<100x10xbf16, #tpu.memory_space<vmem>>, vector<100x10xbf16>
    %175 = arith.extf %174 : vector<100x10xbf16> to vector<100x10xf32>
    %cst_65 = arith.constant dense<0.000000e+00> : vector<4x10xf32>
    %176 = tpu.matmul %173, %175, %cst_65 {dimension_numbers = #tpu.dot_dimension_numbers<[1], [0], [0], [1], [0, 0, 1, 1], [], []>} : vector<4x100xf32>, vector<100x10xf32>, vector<4x10xf32> -> vector<4x10xf32>
    %c0_66 = arith.constant 0 : index
    %c0_67 = arith.constant 0 : index
    %177 = vector.load %arg13[%c0_66, %c0_67] : memref<1x10xf32, #tpu.memory_space<vmem>>, vector<1x10xf32>
    %178 = vector.broadcast %177 : vector<1x10xf32> to vector<4x10xf32>
    %179 = arith.addf %176, %178 : vector<4x10xf32>
    %c0_68 = arith.constant 0 : index
    %c0_69 = arith.constant 0 : index
    %180 = vector.load %arg14[%c0_68, %c0_69] : memref<4x10xf32, #tpu.memory_space<vmem>>, vector<4x10xf32>
    tpu.vector_store %arg14[%c0_68, %c0_69], %179 {strides = array<i32>} : memref<4x10xf32, #tpu.memory_space<vmem>>, vector<4x10xf32>,
    return
  }
}

</mosaic_0001>

<llo_original>
// kernel: tpu_custom_call.1
$region0: #{tpu_custom_call.1}
  #allocation0 [shape = 'u32[]', space=smem, size = 0x4, offset = 0x4, fixed_abs, tag = 'smem constant byte address 0x4 - core index']
  #allocation1 [shape = 'u32[144,128]{1,0:T(1,128)}', space=vmem, size = 0x12000, scoped, tag = 'internal scratch']
  %s0 = inlined_call_operand.hbm [shape: bf16[195,1024], index: 0, kind: input, shape index: {}]
  %s1 = inlined_call_operand.vmem [shape: bf16[64,195], index: 1, kind: input, shape index: {}]
  %s2 = inlined_call_operand.vmem [shape: f32[64,1], index: 2, kind: input, shape index: {}]
  %s3 = inlined_call_operand.vmem [shape: f32[2,64], index: 3, kind: input, shape index: {}]
  %s4 = inlined_call_operand.vmem [shape: f32[2,1], index: 4, kind: input, shape index: {}]
  %s5 = inlined_call_operand.vmem [shape: bf16[123,200], index: 5, kind: input, shape index: {}]
  %s6 = inlined_call_operand.vmem [shape: bf16[123,200], index: 6, kind: input, shape index: {}]
  %s7 = inlined_call_operand.vmem [shape: f32[1,200], index: 7, kind: input, shape index: {}]
  %s8 = inlined_call_operand.vmem [shape: bf16[200,200], index: 8, kind: input, shape index: {}]
  %s9 = inlined_call_operand.vmem [shape: f32[1,200], index: 9, kind: input, shape index: {}]
  %s10 = inlined_call_operand.vmem [shape: bf16[200,100], index: 10, kind: input, shape index: {}]
  %s11 = inlined_call_operand.vmem [shape: f32[1,100], index: 11, kind: input, shape index: {}]
  %s12 = inlined_call_operand.vmem [shape: bf16[100,10], index: 12, kind: input, shape index: {}]
  %s13 = inlined_call_operand.vmem [shape: f32[1,10], index: 13, kind: input, shape index: {}]
  %s14 = inlined_call_operand.hbm [shape: f32[4,10], index: 14, kind: output, shape index: {}]
  %s15 = sld [smem:[#allocation0]]
  $region70: #{tpu_custom_call.1} parent=0
    _
  %s17 = ssub.s32 1, %s15
  %s18 = scalar_select 0, %s17, %s15
  $region1: #{tpu_custom_call.1} parent=0
    #allocation2 [shape = 'u8[409600]{0}', space=vmem, size = 0x64000, scoped, tag = 'input window, operand 0, single buffered']
    #allocation3 [shape = 's32[1]{0}', space=sflag, size = 0x4, scoped, tag = 'scoped memory for tpu_custom_call.1']
    #allocation4 [shape = 's32[1]{0}', space=sflag, size = 0x4, scoped, tag = 'scoped memory for tpu_custom_call.1']
    #allocation5 [shape = 'u8[2048]{0}', space=vmem, size = 0x800, scoped, tag = 'output window, operand 0, single buffered']
    %19 = vsyncpa [#allocation3], 0
    %20 = vsyncpa [#allocation4], 0
    // Predicated region
    $region2: #{tpu_custom_call.1} parent=1 // pred_check
      _
    $region3: #{tpu_custom_call.1} parent=1 // pred_check_branch
      %22 = sbr.rel (0) target = $region5
    $region4: #{tpu_custom_call.1} parent=1 // pred_region
      %s24 = ssub.s32 12800, 12800
      %25 = vsyncadd [#allocation3], %s24
      %s26 = sshll.u32 [#allocation2], 4
      %s27 = int_to_ptr.vmem [resolvable:$true] %s26
      %32 = dma.hbm_to_vmem [thread:$0]  %s0, 12800, %s27, [#allocation3], 512, 512, 32
    $region5: #{tpu_custom_call.1} parent=1 // pred_fallthru
      _
    // Predicated region
    $region6: #{tpu_custom_call.1} parent=1 // pred_check
      _
    $region7: #{tpu_custom_call.1} parent=1 // pred_check_branch
      %34 = sbr.rel (0) target = $region9
    $region8: #{tpu_custom_call.1} parent=1 // pred_region
      _
    $region9: #{tpu_custom_call.1} parent=1 // pred_fallthru
      _
    // Predicated region
    $region10: #{tpu_custom_call.1} parent=1 // pred_check
      _
    $region11: #{tpu_custom_call.1} parent=1 // pred_check_branch
      %36 = sbr.rel (0) target = $region13
    $region12: #{tpu_custom_call.1} parent=1 // pred_region
      _
    $region13: #{tpu_custom_call.1} parent=1 // pred_fallthru
      _
    // Predicated region
    $region14: #{tpu_custom_call.1} parent=1 // pred_check
      _
    $region15: #{tpu_custom_call.1} parent=1 // pred_check_branch
      %38 = sbr.rel (0) target = $region17
    $region16: #{tpu_custom_call.1} parent=1 // pred_region
      _
    $region17: #{tpu_custom_call.1} parent=1 // pred_fallthru
      _
    // Predicated region
    $region18: #{tpu_custom_call.1} parent=1 // pred_check
      _
    $region19: #{tpu_custom_call.1} parent=1 // pred_check_branch
      %40 = sbr.rel (0) target = $region21
    $region20: #{tpu_custom_call.1} parent=1 // pred_region
      _
    $region21: #{tpu_custom_call.1} parent=1 // pred_fallthru
      _
    // Predicated region
    $region22: #{tpu_custom_call.1} parent=1 // pred_check
      _
    $region23: #{tpu_custom_call.1} parent=1 // pred_check_branch
      %42 = sbr.rel (0) target = $region25
    $region24: #{tpu_custom_call.1} parent=1 // pred_region
      _
    $region25: #{tpu_custom_call.1} parent=1 // pred_fallthru
      _
    // Predicated region
    $region26: #{tpu_custom_call.1} parent=1 // pred_check
      _
    $region27: #{tpu_custom_call.1} parent=1 // pred_check_branch
      %44 = sbr.rel (0) target = $region29
    $region28: #{tpu_custom_call.1} parent=1 // pred_region
      _
    $region29: #{tpu_custom_call.1} parent=1 // pred_fallthru
      _
    // Predicated region
    $region30: #{tpu_custom_call.1} parent=1 // pred_check
      _
    $region31: #{tpu_custom_call.1} parent=1 // pred_check_branch
      %46 = sbr.rel (0) target = $region33
    $region32: #{tpu_custom_call.1} parent=1 // pred_region
      _
    $region33: #{tpu_custom_call.1} parent=1 // pred_fallthru
      _
    // Predicated region
    $region34: #{tpu_custom_call.1} parent=1 // pred_check
      _
    $region35: #{tpu_custom_call.1} parent=1 // pred_check_branch
      %48 = sbr.rel (0) target = $region37
    $region36: #{tpu_custom_call.1} parent=1 // pred_region
      _
    $region37: #{tpu_custom_call.1} parent=1 // pred_fallthru
      _
    // Predicated region
    $region38: #{tpu_custom_call.1} parent=1 // pred_check
      _
    $region39: #{tpu_custom_call.1} parent=1 // pred_check_branch
      %50 = sbr.rel (0) target = $region41
    $region40: #{tpu_custom_call.1} parent=1 // pred_region
      _
    $region41: #{tpu_custom_call.1} parent=1 // pred_fallthru
      _
    // Predicated region
    $region42: #{tpu_custom_call.1} parent=1 // pred_check
      _
    $region43: #{tpu_custom_call.1} parent=1 // pred_check_branch
      %52 = sbr.rel (0) target = $region45
    $region44: #{tpu_custom_call.1} parent=1 // pred_region
      _
    $region45: #{tpu_custom_call.1} parent=1 // pred_fallthru
      _
    // Predicated region
    $region46: #{tpu_custom_call.1} parent=1 // pred_check
      _
    $region47: #{tpu_custom_call.1} parent=1 // pred_check_branch
      %54 = sbr.rel (0) target = $region49
    $region48: #{tpu_custom_call.1} parent=1 // pred_region
      _
    $region49: #{tpu_custom_call.1} parent=1 // pred_fallthru
      _
    // Predicated region
    $region50: #{tpu_custom_call.1} parent=1 // pred_check
      _
    $region51: #{tpu_custom_call.1} parent=1 // pred_check_branch
      %56 = sbr.rel (0) target = $region53
    $region52: #{tpu_custom_call.1} parent=1 // pred_region
      _
    $region53: #{tpu_custom_call.1} parent=1 // pred_fallthru
      _
    // Predicated region
    $region54: #{tpu_custom_call.1} parent=1 // pred_check
      _
    $region55: #{tpu_custom_call.1} parent=1 // pred_check_branch
      %58 = sbr.rel (0) target = $region57
    $region56: #{tpu_custom_call.1} parent=1 // pred_region
      _
    $region57: #{tpu_custom_call.1} parent=1 // pred_fallthru
      _
    // Predicated region
    $region58: #{tpu_custom_call.1} parent=1 // pred_check
      _
    $region59: #{tpu_custom_call.1} parent=1 // pred_check_branch
      %60 = sbr.rel (0) target = $region61
    $region60: #{tpu_custom_call.1} parent=1 // pred_region
      %61 = dma.done [#allocation3], 12800
    $region61: #{tpu_custom_call.1} parent=1 // pred_fallthru
      _
    %v63 = vld [vmem:[%s1] sm:$0xff]
    %v64 = vld [vmem:[%s1 + $0x8] sm:$0xff]
    %v65 = vld [vmem:[%s1 + $0x10] sm:$0xff]
    %v66 = vld [vmem:[%s1 + $0x18] sm:$0xff]
    %v67 = vld [vmem:[%s1 + $0x20] sm:$0xff]
    %v68 = vld [vmem:[%s1 + $0x28] sm:$0xff]
    %v69 = vld [vmem:[%s1 + $0x30] sm:$0xff]
    %v70 = vld [vmem:[%s1 + $0x38] sm:$0xff]
    %v71 = vld [vmem:[#allocation2] sm:$0xff]
    %v72 = vld [vmem:[#allocation2 + $0x8] sm:$0xff]
    %v73 = vld [vmem:[#allocation2 + $0x10] sm:$0xff]
    %v74 = vld [vmem:[#allocation2 + $0x18] sm:$0xff]
    %v75 = vld [vmem:[#allocation2 + $0x20] sm:$0xff]
    %v76 = vld [vmem:[#allocation2 + $0x28] sm:$0xff]
    %v77 = vld [vmem:[#allocation2 + $0x30] sm:$0xff]
    %v78 = vld [vmem:[#allocation2 + $0x38] sm:$0xff]
    %v79 = vld [vmem:[#allocation2 + $0x40] sm:$0xff]
    %v80 = vld [vmem:[#allocation2 + $0x48] sm:$0xff]
    %v81 = vld [vmem:[#allocation2 + $0x50] sm:$0xff]
    %v82 = vld [vmem:[#allocation2 + $0x58] sm:$0xff]
    %v83 = vld [vmem:[#allocation2 + $0x60] sm:$0xff]
    %v84 = vld [vmem:[#allocation2 + $0x68] sm:$0xff]
    %v85 = vld [vmem:[#allocation2 + $0x70] sm:$0xff]
    %v86 = vld [vmem:[#allocation2 + $0x78] sm:$0xff]
    %v87 = vld [vmem:[#allocation2 + $0x80] sm:$0xff]
    %v88 = vld [vmem:[#allocation2 + $0x88] sm:$0xff]
    %v89 = vld [vmem:[#allocation2 + $0x90] sm:$0xff]
    %v90 = vld [vmem:[#allocation2 + $0x98] sm:$0xff]
    %v91 = vld [vmem:[#allocation2 + $0xa0] sm:$0xff]
    %v92 = vld [vmem:[#allocation2 + $0xa8] sm:$0xff]
    %v93 = vld [vmem:[#allocation2 + $0xb0] sm:$0xff]
    %v94 = vld [vmem:[#allocation2 + $0xb8] sm:$0xff]
    %v95 = vld [vmem:[#allocation2 + $0xc0] sm:$0xff]
    %v96 = vld [vmem:[#allocation2 + $0xc8] sm:$0xff]
    %v97 = vld [vmem:[#allocation2 + $0xd0] sm:$0xff]
    %v98 = vld [vmem:[#allocation2 + $0xd8] sm:$0xff]
    %v99 = vld [vmem:[#allocation2 + $0xe0] sm:$0xff]
    %v100 = vld [vmem:[#allocation2 + $0xe8] sm:$0xff]
    %v101 = vld [vmem:[#allocation2 + $0xf0] sm:$0xff]
    %v102 = vld [vmem:[#allocation2 + $0xf8] sm:$0xff]
    %v103 = vld [vmem:[#allocation2 + $0x100] sm:$0xff]
    %v104 = vld [vmem:[#allocation2 + $0x108] sm:$0xff]
    %v105 = vld [vmem:[#allocation2 + $0x110] sm:$0xff]
    %v106 = vld [vmem:[#allocation2 + $0x118] sm:$0xff]
    %v107 = vld [vmem:[#allocation2 + $0x120] sm:$0xff]
    %v108 = vld [vmem:[#allocation2 + $0x128] sm:$0xff]
    %v109 = vld [vmem:[#allocation2 + $0x130] sm:$0xff]
    %v110 = vld [vmem:[#allocation2 + $0x138] sm:$0xff]
    %v111 = vld [vmem:[#allocation2 + $0x140] sm:$0xff]
    %v112 = vld [vmem:[#allocation2 + $0x148] sm:$0xff]
    %v113 = vld [vmem:[#allocation2 + $0x150] sm:$0xff]
    %v114 = vld [vmem:[#allocation2 + $0x158] sm:$0xff]
    %v115 = vld [vmem:[#allocation2 + $0x160] sm:$0xff]
    %v116 = vld [vmem:[#allocation2 + $0x168] sm:$0xff]
    %v117 = vld [vmem:[#allocation2 + $0x170] sm:$0xff]
    %v118 = vld [vmem:[#allocation2 + $0x178] sm:$0xff]
    %v119 = vld [vmem:[#allocation2 + $0x180] sm:$0xff]
    %v120 = vld [vmem:[#allocation2 + $0x188] sm:$0xff]
    %v121 = vld [vmem:[#allocation2 + $0x190] sm:$0xff]
    %v122 = vld [vmem:[#allocation2 + $0x198] sm:$0xff]
    %v123 = vld [vmem:[#allocation2 + $0x1a0] sm:$0xff]
    %v124 = vld [vmem:[#allocation2 + $0x1a8] sm:$0xff]
    %v125 = vld [vmem:[#allocation2 + $0x1b0] sm:$0xff]
    %v126 = vld [vmem:[#allocation2 + $0x1b8] sm:$0xff]
    %v127 = vld [vmem:[#allocation2 + $0x1c0] sm:$0xff]
    %v128 = vld [vmem:[#allocation2 + $0x1c8] sm:$0xff]
    %v129 = vld [vmem:[#allocation2 + $0x1d0] sm:$0xff]
    %v130 = vld [vmem:[#allocation2 + $0x1d8] sm:$0xff]
    %v131 = vld [vmem:[#allocation2 + $0x1e0] sm:$0xff]
    %v132 = vld [vmem:[#allocation2 + $0x1e8] sm:$0xff]
    %v133 = vld [vmem:[#allocation2 + $0x1f0] sm:$0xff]
    %v134 = vld [vmem:[#allocation2 + $0x1f8] sm:$0xff]
    %v135 = vld [vmem:[#allocation2 + $0x200] sm:$0xff]
    %v136 = vld [vmem:[#allocation2 + $0x208] sm:$0xff]
    %v137 = vld [vmem:[#allocation2 + $0x210] sm:$0xff]
    %v138 = vld [vmem:[#allocation2 + $0x218] sm:$0xff]
    %v139 = vld [vmem:[#allocation2 + $0x220] sm:$0xff]
    %v140 = vld [vmem:[#allocation2 + $0x228] sm:$0xff]
    %v141 = vld [vmem:[#allocation2 + $0x230] sm:$0xff]
    %v142 = vld [vmem:[#allocation2 + $0x238] sm:$0xff]
    %v143 = vld [vmem:[#allocation2 + $0x240] sm:$0xff]
    %v144 = vld [vmem:[#allocation2 + $0x248] sm:$0xff]
    %v145 = vld [vmem:[#allocation2 + $0x250] sm:$0xff]
    %v146 = vld [vmem:[#allocation2 + $0x258] sm:$0xff]
    %v147 = vld [vmem:[#allocation2 + $0x260] sm:$0xff]
    %v148 = vld [vmem:[#allocation2 + $0x268] sm:$0xff]
    %v149 = vld [vmem:[#allocation2 + $0x270] sm:$0xff]
    %v150 = vld [vmem:[#allocation2 + $0x278] sm:$0xff]
    %v151 = vld [vmem:[#allocation2 + $0x280] sm:$0xff]
    %v152 = vld [vmem:[#allocation2 + $0x288] sm:$0xff]
    %v153 = vld [vmem:[#allocation2 + $0x290] sm:$0xff]
    %v154 = vld [vmem:[#allocation2 + $0x298] sm:$0xff]
    %v155 = vld [vmem:[#allocation2 + $0x2a0] sm:$0xff]
    %v156 = vld [vmem:[#allocation2 + $0x2a8] sm:$0xff]
    %v157 = vld [vmem:[#allocation2 + $0x2b0] sm:$0xff]
    %v158 = vld [vmem:[#allocation2 + $0x2b8] sm:$0xff]
    %v159 = vld [vmem:[#allocation2 + $0x2c0] sm:$0xff]
    %v160 = vld [vmem:[#allocation2 + $0x2c8] sm:$0xff]
    %v161 = vld [vmem:[#allocation2 + $0x2d0] sm:$0xff]
    %v162 = vld [vmem:[#allocation2 + $0x2d8] sm:$0xff]
    %v163 = vld [vmem:[#allocation2 + $0x2e0] sm:$0xff]
    %v164 = vld [vmem:[#allocation2 + $0x2e8] sm:$0xff]
    %v165 = vld [vmem:[#allocation2 + $0x2f0] sm:$0xff]
    %v166 = vld [vmem:[#allocation2 + $0x2f8] sm:$0xff]
    %v167 = vld [vmem:[#allocation2 + $0x300] sm:$0x33]
    %v168 = vld [vmem:[#allocation2 + $0x308] sm:$0x33]
    %v169 = vld [vmem:[#allocation2 + $0x310] sm:$0x33]
    %v170 = vld [vmem:[#allocation2 + $0x318] sm:$0x33]
    %v179 = vunpack.c.l.b16 %v63
    %v180 = vunpack.c.h.b16 %v63
    %v181 = vunpack.c.l.b16 %v64
    %v182 = vunpack.c.h.b16 %v64
    %v183 = vunpack.c.l.b16 %v65
    %v184 = vunpack.c.h.b16 %v65
    %v185 = vunpack.c.l.b16 %v66
    %v186 = vunpack.c.h.b16 %v66
    %v187 = vunpack.c.l.b16 %v67
    %v188 = vunpack.c.h.b16 %v67
    %v189 = vunpack.c.l.b16 %v68
    %v190 = vunpack.c.h.b16 %v68
    %v191 = vunpack.c.l.b16 %v69
    %v192 = vunpack.c.h.b16 %v69
    %v193 = vunpack.c.l.b16 %v70
    %v194 = vunpack.c.h.b16 %v70
    %v195 = vpack.c.b16 %v181, %v179
    %v196 = vpack.c.b16 %v182, %v180
    %v197 = vpack.c.b16 %v185, %v183
    %v198 = vpack.c.b16 %v186, %v184
    %v199 = vpack.c.b16 %v189, %v187
    %v200 = vpack.c.b16 %v190, %v188
    %v201 = vpack.c.b16 %v193, %v191
    %v202 = vpack.c.b16 %v194, %v192
    %v307 = vunpack.c.l.b16 %v71
    %v308 = vunpack.c.h.b16 %v71
    %v309 = vunpack.c.l.b16 %v72
    %v310 = vunpack.c.h.b16 %v72
    %v311 = vunpack.c.l.b16 %v73
    %v312 = vunpack.c.h.b16 %v73
    %v313 = vunpack.c.l.b16 %v74
    %v314 = vunpack.c.h.b16 %v74
    %v315 = vunpack.c.l.b16 %v75
    %v316 = vunpack.c.h.b16 %v75
    %v317 = vunpack.c.l.b16 %v76
    %v318 = vunpack.c.h.b16 %v76
    %v319 = vunpack.c.l.b16 %v77
    %v320 = vunpack.c.h.b16 %v77
    %v321 = vunpack.c.l.b16 %v78
    %v322 = vunpack.c.h.b16 %v78
    %v323 = vunpack.c.l.b16 %v79
    %v324 = vunpack.c.h.b16 %v79
    %v325 = vunpack.c.l.b16 %v80
    %v326 = vunpack.c.h.b16 %v80
    %v327 = vunpack.c.l.b16 %v81
    %v328 = vunpack.c.h.b16 %v81
    %v329 = vunpack.c.l.b16 %v82
    %v330 = vunpack.c.h.b16 %v82
    %v331 = vunpack.c.l.b16 %v83
    %v332 = vunpack.c.h.b16 %v83
    %v333 = vunpack.c.l.b16 %v84
    %v334 = vunpack.c.h.b16 %v84
    %v335 = vunpack.c.l.b16 %v85
    %v336 = vunpack.c.h.b16 %v85
    %v337 = vunpack.c.l.b16 %v86
    %v338 = vunpack.c.h.b16 %v86
    %v339 = vunpack.c.l.b16 %v87
    %v340 = vunpack.c.h.b16 %v87
    %v341 = vunpack.c.l.b16 %v88
    %v342 = vunpack.c.h.b16 %v88
    %v343 = vunpack.c.l.b16 %v89
    %v344 = vunpack.c.h.b16 %v89
    %v345 = vunpack.c.l.b16 %v90
    %v346 = vunpack.c.h.b16 %v90
    %v347 = vunpack.c.l.b16 %v91
    %v348 = vunpack.c.h.b16 %v91
    %v349 = vunpack.c.l.b16 %v92
    %v350 = vunpack.c.h.b16 %v92
    %v351 = vunpack.c.l.b16 %v93
    %v352 = vunpack.c.h.b16 %v93
    %v353 = vunpack.c.l.b16 %v94
    %v354 = vunpack.c.h.b16 %v94
    %v355 = vunpack.c.l.b16 %v95
    %v356 = vunpack.c.h.b16 %v95
    %v357 = vunpack.c.l.b16 %v96
    %v358 = vunpack.c.h.b16 %v96
    %v359 = vunpack.c.l.b16 %v97
    %v360 = vunpack.c.h.b16 %v97
    %v361 = vunpack.c.l.b16 %v98
    %v362 = vunpack.c.h.b16 %v98
    %v363 = vunpack.c.l.b16 %v99
    %v364 = vunpack.c.h.b16 %v99
    %v365 = vunpack.c.l.b16 %v100
    %v366 = vunpack.c.h.b16 %v100
    %v367 = vunpack.c.l.b16 %v101
    %v368 = vunpack.c.h.b16 %v101
    %v369 = vunpack.c.l.b16 %v102
    %v370 = vunpack.c.h.b16 %v102
    %v371 = vunpack.c.l.b16 %v103
    %v372 = vunpack.c.h.b16 %v103
    %v373 = vunpack.c.l.b16 %v104
    %v374 = vunpack.c.h.b16 %v104
    %v375 = vunpack.c.l.b16 %v105
    %v376 = vunpack.c.h.b16 %v105
    %v377 = vunpack.c.l.b16 %v106
    %v378 = vunpack.c.h.b16 %v106
    %v379 = vunpack.c.l.b16 %v107
    %v380 = vunpack.c.h.b16 %v107
    %v381 = vunpack.c.l.b16 %v108
    %v382 = vunpack.c.h.b16 %v108
    %v383 = vunpack.c.l.b16 %v109
    %v384 = vunpack.c.h.b16 %v109
    %v385 = vunpack.c.l.b16 %v110
    %v386 = vunpack.c.h.b16 %v110
    %v387 = vunpack.c.l.b16 %v111
    %v388 = vunpack.c.h.b16 %v111
    %v389 = vunpack.c.l.b16 %v112
    %v390 = vunpack.c.h.b16 %v112
    %v391 = vunpack.c.l.b16 %v113
    %v392 = vunpack.c.h.b16 %v113
    %v393 = vunpack.c.l.b16 %v114
    %v394 = vunpack.c.h.b16 %v114
    %v395 = vunpack.c.l.b16 %v115
    %v396 = vunpack.c.h.b16 %v115
    %v397 = vunpack.c.l.b16 %v116
    %v398 = vunpack.c.h.b16 %v116
    %v399 = vunpack.c.l.b16 %v117
    %v400 = vunpack.c.h.b16 %v117
    %v401 = vunpack.c.l.b16 %v118
    %v402 = vunpack.c.h.b16 %v118
    %v403 = vunpack.c.l.b16 %v119
    %v404 = vunpack.c.h.b16 %v119
    %v405 = vunpack.c.l.b16 %v120
    %v406 = vunpack.c.h.b16 %v120
    %v407 = vunpack.c.l.b16 %v121
    %v408 = vunpack.c.h.b16 %v121
    %v409 = vunpack.c.l.b16 %v122
    %v410 = vunpack.c.h.b16 %v122
    %v411 = vunpack.c.l.b16 %v123
    %v412 = vunpack.c.h.b16 %v123
    %v413 = vunpack.c.l.b16 %v124
    %v414 = vunpack.c.h.b16 %v124
    %v415 = vunpack.c.l.b16 %v125
    %v416 = vunpack.c.h.b16 %v125
    %v417 = vunpack.c.l.b16 %v126
    %v418 = vunpack.c.h.b16 %v126
    %v419 = vunpack.c.l.b16 %v127
    %v420 = vunpack.c.h.b16 %v127
    %v421 = vunpack.c.l.b16 %v128
    %v422 = vunpack.c.h.b16 %v128
    %v423 = vunpack.c.l.b16 %v129
    %v424 = vunpack.c.h.b16 %v129
    %v425 = vunpack.c.l.b16 %v130
    %v426 = vunpack.c.h.b16 %v130
    %v427 = vunpack.c.l.b16 %v131
    %v428 = vunpack.c.h.b16 %v131
    %v429 = vunpack.c.l.b16 %v132
    %v430 = vunpack.c.h.b16 %v132
    %v431 = vunpack.c.l.b16 %v133
    %v432 = vunpack.c.h.b16 %v133
    %v433 = vunpack.c.l.b16 %v134
    %v434 = vunpack.c.h.b16 %v134
    %v435 = vunpack.c.l.b16 %v135
    %v436 = vunpack.c.h.b16 %v135
    %v437 = vunpack.c.l.b16 %v136
    %v438 = vunpack.c.h.b16 %v136
    %v439 = vunpack.c.l.b16 %v137
    %v440 = vunpack.c.h.b16 %v137
    %v441 = vunpack.c.l.b16 %v138
    %v442 = vunpack.c.h.b16 %v138
    %v443 = vunpack.c.l.b16 %v139
    %v444 = vunpack.c.h.b16 %v139
    %v445 = vunpack.c.l.b16 %v140
    %v446 = vunpack.c.h.b16 %v140
    %v447 = vunpack.c.l.b16 %v141
    %v448 = vunpack.c.h.b16 %v141
    %v449 = vunpack.c.l.b16 %v142
    %v450 = vunpack.c.h.b16 %v142
    %v451 = vunpack.c.l.b16 %v143
    %v452 = vunpack.c.h.b16 %v143
    %v453 = vunpack.c.l.b16 %v144
    %v454 = vunpack.c.h.b16 %v144
    %v455 = vunpack.c.l.b16 %v145
    %v456 = vunpack.c.h.b16 %v145
    %v457 = vunpack.c.l.b16 %v146
    %v458 = vunpack.c.h.b16 %v146
    %v459 = vunpack.c.l.b16 %v147
    %v460 = vunpack.c.h.b16 %v147
    %v461 = vunpack.c.l.b16 %v148
    %v462 = vunpack.c.h.b16 %v148
    %v463 = vunpack.c.l.b16 %v149
    %v464 = vunpack.c.h.b16 %v149
    %v465 = vunpack.c.l.b16 %v150
    %v466 = vunpack.c.h.b16 %v150
    %v467 = vunpack.c.l.b16 %v151
    %v468 = vunpack.c.h.b16 %v151
    %v469 = vunpack.c.l.b16 %v152
    %v470 = vunpack.c.h.b16 %v152
    %v471 = vunpack.c.l.b16 %v153
    %v472 = vunpack.c.h.b16 %v153
    %v473 = vunpack.c.l.b16 %v154
    %v474 = vunpack.c.h.b16 %v154
    %v475 = vunpack.c.l.b16 %v155
    %v476 = vunpack.c.h.b16 %v155
    %v477 = vunpack.c.l.b16 %v156
    %v478 = vunpack.c.h.b16 %v156
    %v479 = vunpack.c.l.b16 %v157
    %v480 = vunpack.c.h.b16 %v157
    %v481 = vunpack.c.l.b16 %v158
    %v482 = vunpack.c.h.b16 %v158
    %v483 = vunpack.c.l.b16 %v159
    %v484 = vunpack.c.h.b16 %v159
    %v485 = vunpack.c.l.b16 %v160
    %v486 = vunpack.c.h.b16 %v160
    %v487 = vunpack.c.l.b16 %v161
    %v488 = vunpack.c.h.b16 %v161
    %v489 = vunpack.c.l.b16 %v162
    %v490 = vunpack.c.h.b16 %v162
    %v491 = vunpack.c.l.b16 %v163
    %v492 = vunpack.c.h.b16 %v163
    %v493 = vunpack.c.l.b16 %v164
    %v494 = vunpack.c.h.b16 %v164
    %v495 = vunpack.c.l.b16 %v165
    %v496 = vunpack.c.h.b16 %v165
    %v497 = vunpack.c.l.b16 %v166
    %v498 = vunpack.c.h.b16 %v166
    %v499 = vunpack.c.l.b16 %v167
    %v500 = vunpack.c.h.b16 %v167
    %v501 = vunpack.c.l.b16 %v168
    %v502 = vunpack.c.h.b16 %v168
    %v503 = vunpack.c.l.b16 %v169
    %v504 = vunpack.c.h.b16 %v169
    %v505 = vunpack.c.l.b16 %v170
    %v506 = vunpack.c.h.b16 %v170
    %v507 = vpack.c.b16 %v315, %v307
    %v508 = vpack.c.b16 %v316, %v308
    %v509 = vpack.c.b16 %v317, %v309
    %v510 = vpack.c.b16 %v318, %v310
    %v511 = vpack.c.b16 %v319, %v311
    %v512 = vpack.c.b16 %v320, %v312
    %v513 = vpack.c.b16 %v321, %v313
    %v514 = vpack.c.b16 %v322, %v314
    %v515 = vpack.c.b16 %v331, %v323
    %v516 = vpack.c.b16 %v332, %v324
    %v517 = vpack.c.b16 %v333, %v325
    %v518 = vpack.c.b16 %v334, %v326
    %v519 = vpack.c.b16 %v335, %v327
    %v520 = vpack.c.b16 %v336, %v328
    %v521 = vpack.c.b16 %v337, %v329
    %v522 = vpack.c.b16 %v338, %v330
    %v523 = vpack.c.b16 %v347, %v339
    %v524 = vpack.c.b16 %v348, %v340
    %v525 = vpack.c.b16 %v349, %v341
    %v526 = vpack.c.b16 %v350, %v342
    %v527 = vpack.c.b16 %v351, %v343
    %v528 = vpack.c.b16 %v352, %v344
    %v529 = vpack.c.b16 %v353, %v345
    %v530 = vpack.c.b16 %v354, %v346
    %v531 = vpack.c.b16 %v363, %v355
    %v532 = vpack.c.b16 %v364, %v356
    %v533 = vpack.c.b16 %v365, %v357
    %v534 = vpack.c.b16 %v366, %v358
    %v535 = vpack.c.b16 %v367, %v359
    %v536 = vpack.c.b16 %v368, %v360
    %v537 = vpack.c.b16 %v369, %v361
    %v538 = vpack.c.b16 %v370, %v362
    %v539 = vpack.c.b16 %v379, %v371
    %v540 = vpack.c.b16 %v380, %v372
    %v541 = vpack.c.b16 %v381, %v373
    %v542 = vpack.c.b16 %v382, %v374
    %v543 = vpack.c.b16 %v383, %v375
    %v544 = vpack.c.b16 %v384, %v376
    %v545 = vpack.c.b16 %v385, %v377
    %v546 = vpack.c.b16 %v386, %v378
    %v547 = vpack.c.b16 %v395, %v387
    %v548 = vpack.c.b16 %v396, %v388
    %v549 = vpack.c.b16 %v397, %v389
    %v550 = vpack.c.b16 %v398, %v390
    %v551 = vpack.c.b16 %v399, %v391
    %v552 = vpack.c.b16 %v400, %v392
    %v553 = vpack.c.b16 %v401, %v393
    %v554 = vpack.c.b16 %v402, %v394
    %v555 = vpack.c.b16 %v411, %v403
    %v556 = vpack.c.b16 %v412, %v404
    %v557 = vpack.c.b16 %v413, %v405
    %v558 = vpack.c.b16 %v414, %v406
    %v559 = vpack.c.b16 %v415, %v407
    %v560 = vpack.c.b16 %v416, %v408
    %v561 = vpack.c.b16 %v417, %v409
    %v562 = vpack.c.b16 %v418, %v410
    %v563 = vpack.c.b16 %v427, %v419
    %v564 = vpack.c.b16 %v428, %v420
    %v565 = vpack.c.b16 %v429, %v421
    %v566 = vpack.c.b16 %v430, %v422
    %v567 = vpack.c.b16 %v431, %v423
    %v568 = vpack.c.b16 %v432, %v424
    %v569 = vpack.c.b16 %v433, %v425
    %v570 = vpack.c.b16 %v434, %v426
    %v571 = vpack.c.b16 %v443, %v435
    %v572 = vpack.c.b16 %v444, %v436
    %v573 = vpack.c.b16 %v445, %v437
    %v574 = vpack.c.b16 %v446, %v438
    %v575 = vpack.c.b16 %v447, %v439
    %v576 = vpack.c.b16 %v448, %v440
    %v577 = vpack.c.b16 %v449, %v441
    %v578 = vpack.c.b16 %v450, %v442
    %v579 = vpack.c.b16 %v459, %v451
    %v580 = vpack.c.b16 %v460, %v452
    %v581 = vpack.c.b16 %v461, %v453
    %v582 = vpack.c.b16 %v462, %v454
    %v583 = vpack.c.b16 %v463, %v455
    %v584 = vpack.c.b16 %v464, %v456
    %v585 = vpack.c.b16 %v465, %v457
    %v586 = vpack.c.b16 %v466, %v458
    %v587 = vpack.c.b16 %v475, %v467
    %v588 = vpack.c.b16 %v476, %v468
    %v589 = vpack.c.b16 %v477, %v469
    %v590 = vpack.c.b16 %v478, %v470
    %v591 = vpack.c.b16 %v479, %v471
    %v592 = vpack.c.b16 %v480, %v472
    %v593 = vpack.c.b16 %v481, %v473
    %v594 = vpack.c.b16 %v482, %v474
    %v595 = vpack.c.b16 %v491, %v483
    %v596 = vpack.c.b16 %v492, %v484
    %v597 = vpack.c.b16 %v493, %v485
    %v598 = vpack.c.b16 %v494, %v486
    %v599 = vpack.c.b16 %v495, %v487
    %v600 = vpack.c.b16 %v496, %v488
    %v601 = vpack.c.b16 %v497, %v489
    %v602 = vpack.c.b16 %v498, %v490
    %v603 = vpack.c.b16 %v499, %v499
    %v604 = vpack.c.b16 %v500, %v500
    %v605 = vpack.c.b16 %v501, %v501
    %v606 = vpack.c.b16 %v502, %v502
    %v607 = vpack.c.b16 %v503, %v503
    %v608 = vpack.c.b16 %v504, %v504
    %v609 = vpack.c.b16 %v505, %v505
    %v610 = vpack.c.b16 %v506, %v506
    %vm707 = vcmask 547840
    %v709 = vsel %vm707, %v196, 0
    %v712 = vsel %vm707, %v198, 0
    %v715 = vsel %vm707, %v200, 0
    %v718 = vsel %vm707, %v202, 0
    %vm720 = vcmask 1040384
    %vm721 = vcmask 1041408
    %v722 = vsel %vm720, 4294967295, 65535
    %v723 = vsel %vm721, %v722, 0
    %v725 = vand.u32 %v603, %v723
    %v728 = vand.u32 %v604, %v723
    %v731 = vand.u32 %v605, %v723
    %v734 = vand.u32 %v606, %v723
    %v737 = vand.u32 %v607, %v723
    %v740 = vand.u32 %v608, %v723
    %v743 = vand.u32 %v609, %v723
    %v746 = vand.u32 %v610, %v723
    %748 = vmatprep.subr.bf16.mxu0 %v564
    %749 = vmatpush1.bf16.msra.mxu0 %v563
    %750 = vmatprep.subr.bf16.mxu0 %v556
    %751 = vmatpush1.bf16.msra.mxu0 %v555
    %752 = vmatprep.subr.bf16.mxu0 %v548
    %753 = vmatpush1.bf16.msra.mxu0 %v547
    %754 = vmatprep.subr.bf16.mxu0 %v540
    %755 = vmatpush1.bf16.msra.mxu0 %v539
    %756 = vmatprep.subr.bf16.mxu0 %v532
    %757 = vmatpush1.bf16.msra.mxu0 %v531
    %758 = vmatprep.subr.bf16.mxu0 %v524
    %759 = vmatpush1.bf16.msra.mxu0 %v523
    %760 = vmatprep.subr.bf16.mxu0 %v516
    %761 = vmatpush1.bf16.msra.mxu0 %v515
    %762 = vmatprep.subr.bf16.mxu0 %v508
    %763 = vmatpush1.bf16.msra.mxu0 %v507
    %764 = vmatprep.subr.bf16.mxu0 0
    %765 = vmatpush2.bf16.msra.mxu0 0
    %766 = vmatprep.subr.bf16.mxu0 0
    %767 = vmatpush2.bf16.msra.mxu0 0
    %768 = vmatprep.subr.bf16.mxu0 0
    %769 = vmatpush2.bf16.msra.mxu0 0
    %770 = vmatprep.subr.bf16.mxu0 %v728
    %771 = vmatpush2.bf16.msra.mxu0 %v725
    %772 = vmatprep.subr.bf16.mxu0 %v596
    %773 = vmatpush2.bf16.msra.mxu0 %v595
    %774 = vmatprep.subr.bf16.mxu0 %v588
    %775 = vmatpush2.bf16.msra.mxu0 %v587
    %776 = vmatprep.subr.bf16.mxu0 %v580
    %777 = vmatpush2.bf16.msra.mxu0 %v579
    %778 = vmatprep.subr.bf16.mxu0 %v572
    %779 = vmatpush2.bf16.msra.mxu0 %v571
    %780 = vmatprep.mubr.bf16.mxu0 %v709
    %781 = vmatmul.mubr.bf16.gmra.mxu0 %v195
    %v782 = vpop.f32.mrf.mxu0
    %v783 = vadd.f32 0.0, %v782
    %v784 = vpop.f32.mrf.mxu0
    %v785 = vadd.f32 0.0, %v784
    %v786 = vpop.f32.mrf.mxu0
    %v787 = vadd.f32 0.0, %v786
    %v788 = vpop.f32.mrf.mxu0
    %v789 = vadd.f32 0.0, %v788
    %790 = vmatprep.mubr.bf16.mxu0 %v712
    %791 = vmatmul.mubr.bf16.gmra.mxu0 %v197
    %v792 = vpop.f32.mrf.mxu0
    %v793 = vadd.f32 0.0, %v792
    %v794 = vpop.f32.mrf.mxu0
    %v795 = vadd.f32 0.0, %v794
    %v796 = vpop.f32.mrf.mxu0
    %v797 = vadd.f32 0.0, %v796
    %v798 = vpop.f32.mrf.mxu0
    %v799 = vadd.f32 0.0, %v798
    %800 = vmatprep.mubr.bf16.mxu0 %v715
    %801 = vmatmul.mubr.bf16.gmra.mxu0 %v199
    %v802 = vpop.f32.mrf.mxu0
    %v803 = vadd.f32 0.0, %v802
    %v804 = vpop.f32.mrf.mxu0
    %v805 = vadd.f32 0.0, %v804
    %v806 = vpop.f32.mrf.mxu0
    %v807 = vadd.f32 0.0, %v806
    %v808 = vpop.f32.mrf.mxu0
    %v809 = vadd.f32 0.0, %v808
    %810 = vmatprep.mubr.bf16.mxu0 %v718
    %811 = vmatmul.mubr.bf16.gmra.mxu0 %v201
    %v812 = vpop.f32.mrf.mxu0
    %v813 = vadd.f32 0.0, %v812
    %v814 = vpop.f32.mrf.mxu0
    %v815 = vadd.f32 0.0, %v814
    %v816 = vpop.f32.mrf.mxu0
    %v817 = vadd.f32 0.0, %v816
    %v818 = vpop.f32.mrf.mxu0
    %v819 = vadd.f32 0.0, %v818
    %820 = vdwg.mxu0
    %821 = vmatprep.subr.bf16.mxu0 %v566
    %822 = vmatpush1.bf16.msra.mxu0 %v565
    %823 = vmatprep.subr.bf16.mxu0 %v558
    %824 = vmatpush1.bf16.msra.mxu0 %v557
    %825 = vmatprep.subr.bf16.mxu0 %v550
    %826 = vmatpush1.bf16.msra.mxu0 %v549
    %827 = vmatprep.subr.bf16.mxu0 %v542
    %828 = vmatpush1.bf16.msra.mxu0 %v541
    %829 = vmatprep.subr.bf16.mxu0 %v534
    %830 = vmatpush1.bf16.msra.mxu0 %v533
    %831 = vmatprep.subr.bf16.mxu0 %v526
    %832 = vmatpush1.bf16.msra.mxu0 %v525
    %833 = vmatprep.subr.bf16.mxu0 %v518
    %834 = vmatpush1.bf16.msra.mxu0 %v517
    %835 = vmatprep.subr.bf16.mxu0 %v510
    %836 = vmatpush1.bf16.msra.mxu0 %v509
    %837 = vmatprep.subr.bf16.mxu0 0
    %838 = vmatpush2.bf16.msra.mxu0 0
    %839 = vmatprep.subr.bf16.mxu0 0
    %840 = vmatpush2.bf16.msra.mxu0 0
    %841 = vmatprep.subr.bf16.mxu0 0
    %842 = vmatpush2.bf16.msra.mxu0 0
    %843 = vmatprep.subr.bf16.mxu0 %v734
    %844 = vmatpush2.bf16.msra.mxu0 %v731
    %845 = vmatprep.subr.bf16.mxu0 %v598
    %846 = vmatpush2.bf16.msra.mxu0 %v597
    %847 = vmatprep.subr.bf16.mxu0 %v590
    %848 = vmatpush2.bf16.msra.mxu0 %v589
    %849 = vmatprep.subr.bf16.mxu0 %v582
    %850 = vmatpush2.bf16.msra.mxu0 %v581
    %851 = vmatprep.subr.bf16.mxu0 %v574
    %852 = vmatpush2.bf16.msra.mxu0 %v573
    %853 = vmatprep.mubr.bf16.mxu0 %v709
    %854 = vmatmul.mubr.bf16.gmra.mxu0 %v195
    %v855 = vpop.f32.mrf.mxu0
    %v856 = vadd.f32 0.0, %v855
    %v857 = vpop.f32.mrf.mxu0
    %v858 = vadd.f32 0.0, %v857
    %v859 = vpop.f32.mrf.mxu0
    %v860 = vadd.f32 0.0, %v859
    %v861 = vpop.f32.mrf.mxu0
    %v862 = vadd.f32 0.0, %v861
    %863 = vmatprep.mubr.bf16.mxu0 %v712
    %864 = vmatmul.mubr.bf16.gmra.mxu0 %v197
    %v865 = vpop.f32.mrf.mxu0
    %v866 = vadd.f32 0.0, %v865
    %v867 = vpop.f32.mrf.mxu0
    %v868 = vadd.f32 0.0, %v867
    %v869 = vpop.f32.mrf.mxu0
    %v870 = vadd.f32 0.0, %v869
    %v871 = vpop.f32.mrf.mxu0
    %v872 = vadd.f32 0.0, %v871
    %873 = vmatprep.mubr.bf16.mxu0 %v715
    %874 = vmatmul.mubr.bf16.gmra.mxu0 %v199
    %v875 = vpop.f32.mrf.mxu0
    %v876 = vadd.f32 0.0, %v875
    %v877 = vpop.f32.mrf.mxu0
    %v878 = vadd.f32 0.0, %v877
    %v879 = vpop.f32.mrf.mxu0
    %v880 = vadd.f32 0.0, %v879
    %v881 = vpop.f32.mrf.mxu0
    %v882 = vadd.f32 0.0, %v881
    %883 = vmatprep.mubr.bf16.mxu0 %v718
    %884 = vmatmul.mubr.bf16.gmra.mxu0 %v201
    %v885 = vpop.f32.mrf.mxu0
    %v886 = vadd.f32 0.0, %v885
    %v887 = vpop.f32.mrf.mxu0
    %v888 = vadd.f32 0.0, %v887
    %v889 = vpop.f32.mrf.mxu0
    %v890 = vadd.f32 0.0, %v889
    %v891 = vpop.f32.mrf.mxu0
    %v892 = vadd.f32 0.0, %v891
    %893 = vdwg.mxu0
    %894 = vmatprep.subr.bf16.mxu0 %v568
    %895 = vmatpush1.bf16.msra.mxu0 %v567
    %896 = vmatprep.subr.bf16.mxu0 %v560
    %897 = vmatpush1.bf16.msra.mxu0 %v559
    %898 = vmatprep.subr.bf16.mxu0 %v552
    %899 = vmatpush1.bf16.msra.mxu0 %v551
    %900 = vmatprep.subr.bf16.mxu0 %v544
    %901 = vmatpush1.bf16.msra.mxu0 %v543
    %902 = vmatprep.subr.bf16.mxu0 %v536
    %903 = vmatpush1.bf16.msra.mxu0 %v535
    %904 = vmatprep.subr.bf16.mxu0 %v528
    %905 = vmatpush1.bf16.msra.mxu0 %v527
    %906 = vmatprep.subr.bf16.mxu0 %v520
    %907 = vmatpush1.bf16.msra.mxu0 %v519
    %908 = vmatprep.subr.bf16.mxu0 %v512
    %909 = vmatpush1.bf16.msra.mxu0 %v511
    %910 = vmatprep.subr.bf16.mxu0 0
    %911 = vmatpush2.bf16.msra.mxu0 0
    %912 = vmatprep.subr.bf16.mxu0 0
    %913 = vmatpush2.bf16.msra.mxu0 0
    %914 = vmatprep.subr.bf16.mxu0 0
    %915 = vmatpush2.bf16.msra.mxu0 0
    %916 = vmatprep.subr.bf16.mxu0 %v740
    %917 = vmatpush2.bf16.msra.mxu0 %v737
    %918 = vmatprep.subr.bf16.mxu0 %v600
    %919 = vmatpush2.bf16.msra.mxu0 %v599
    %920 = vmatprep.subr.bf16.mxu0 %v592
    %921 = vmatpush2.bf16.msra.mxu0 %v591
    %922 = vmatprep.subr.bf16.mxu0 %v584
    %923 = vmatpush2.bf16.msra.mxu0 %v583
    %924 = vmatprep.subr.bf16.mxu0 %v576
    %925 = vmatpush2.bf16.msra.mxu0 %v575
    %926 = vmatprep.mubr.bf16.mxu0 %v709
    %927 = vmatmul.mubr.bf16.gmra.mxu0 %v195
    %v928 = vpop.f32.mrf.mxu0
    %v929 = vadd.f32 0.0, %v928
    %v930 = vpop.f32.mrf.mxu0
    %v931 = vadd.f32 0.0, %v930
    %v932 = vpop.f32.mrf.mxu0
    %v933 = vadd.f32 0.0, %v932
    %v934 = vpop.f32.mrf.mxu0
    %v935 = vadd.f32 0.0, %v934
    %936 = vmatprep.mubr.bf16.mxu0 %v712
    %937 = vmatmul.mubr.bf16.gmra.mxu0 %v197
    %v938 = vpop.f32.mrf.mxu0
    %v939 = vadd.f32 0.0, %v938
    %v940 = vpop.f32.mrf.mxu0
    %v941 = vadd.f32 0.0, %v940
    %v942 = vpop.f32.mrf.mxu0
    %v943 = vadd.f32 0.0, %v942
    %v944 = vpop.f32.mrf.mxu0
    %v945 = vadd.f32 0.0, %v944
    %946 = vmatprep.mubr.bf16.mxu0 %v715
    %947 = vmatmul.mubr.bf16.gmra.mxu0 %v199
    %v948 = vpop.f32.mrf.mxu0
    %v949 = vadd.f32 0.0, %v948
    %v950 = vpop.f32.mrf.mxu0
    %v951 = vadd.f32 0.0, %v950
    %v952 = vpop.f32.mrf.mxu0
    %v953 = vadd.f32 0.0, %v952
    %v954 = vpop.f32.mrf.mxu0
    %v955 = vadd.f32 0.0, %v954
    %956 = vmatprep.mubr.bf16.mxu0 %v718
    %957 = vmatmul.mubr.bf16.gmra.mxu0 %v201
    %v958 = vpop.f32.mrf.mxu0
    %v959 = vadd.f32 0.0, %v958
    %v960 = vpop.f32.mrf.mxu0
    %v961 = vadd.f32 0.0, %v960
    %v962 = vpop.f32.mrf.mxu0
    %v963 = vadd.f32 0.0, %v962
    %v964 = vpop.f32.mrf.mxu0
    %v965 = vadd.f32 0.0, %v964
    %966 = vdwg.mxu0
    %967 = vmatprep.subr.bf16.mxu0 %v570
    %968 = vmatpush1.bf16.msra.mxu0 %v569
    %969 = vmatprep.subr.bf16.mxu0 %v562
    %970 = vmatpush1.bf16.msra.mxu0 %v561
    %971 = vmatprep.subr.bf16.mxu0 %v554
    %972 = vmatpush1.bf16.msra.mxu0 %v553
    %973 = vmatprep.subr.bf16.mxu0 %v546
    %974 = vmatpush1.bf16.msra.mxu0 %v545
    %975 = vmatprep.subr.bf16.mxu0 %v538
    %976 = vmatpush1.bf16.msra.mxu0 %v537
    %977 = vmatprep.subr.bf16.mxu0 %v530
    %978 = vmatpush1.bf16.msra.mxu0 %v529
    %979 = vmatprep.subr.bf16.mxu0 %v522
    %980 = vmatpush1.bf16.msra.mxu0 %v521
    %981 = vmatprep.subr.bf16.mxu0 %v514
    %982 = vmatpush1.bf16.msra.mxu0 %v513
    %983 = vmatprep.subr.bf16.mxu0 0
    %984 = vmatpush2.bf16.msra.mxu0 0
    %985 = vmatprep.subr.bf16.mxu0 0
    %986 = vmatpush2.bf16.msra.mxu0 0
    %987 = vmatprep.subr.bf16.mxu0 0
    %988 = vmatpush2.bf16.msra.mxu0 0
    %989 = vmatprep.subr.bf16.mxu0 %v746
    %990 = vmatpush2.bf16.msra.mxu0 %v743
    %991 = vmatprep.subr.bf16.mxu0 %v602
    %992 = vmatpush2.bf16.msra.mxu0 %v601
    %993 = vmatprep.subr.bf16.mxu0 %v594
    %994 = vmatpush2.bf16.msra.mxu0 %v593
    %995 = vmatprep.subr.bf16.mxu0 %v586
    %996 = vmatpush2.bf16.msra.mxu0 %v585
    %997 = vmatprep.subr.bf16.mxu0 %v578
    %998 = vmatpush2.bf16.msra.mxu0 %v577
    %999 = vmatprep.mubr.bf16.mxu0 %v709
    %1000 = vmatmul.mubr.bf16.gmra.mxu0 %v195
    %v1001 = vpop.f32.mrf.mxu0
    %v1002 = vadd.f32 0.0, %v1001
    %v1003 = vpop.f32.mrf.mxu0
    %v1004 = vadd.f32 0.0, %v1003
    %v1005 = vpop.f32.mrf.mxu0
    %v1006 = vadd.f32 0.0, %v1005
    %v1007 = vpop.f32.mrf.mxu0
    %v1008 = vadd.f32 0.0, %v1007
    %1009 = vmatprep.mubr.bf16.mxu0 %v712
    %1010 = vmatmul.mubr.bf16.gmra.mxu0 %v197
    %v1011 = vpop.f32.mrf.mxu0
    %v1012 = vadd.f32 0.0, %v1011
    %v1013 = vpop.f32.mrf.mxu0
    %v1014 = vadd.f32 0.0, %v1013
    %v1015 = vpop.f32.mrf.mxu0
    %v1016 = vadd.f32 0.0, %v1015
    %v1017 = vpop.f32.mrf.mxu0
    %v1018 = vadd.f32 0.0, %v1017
    %1019 = vmatprep.mubr.bf16.mxu0 %v715
    %1020 = vmatmul.mubr.bf16.gmra.mxu0 %v199
    %v1021 = vpop.f32.mrf.mxu0
    %v1022 = vadd.f32 0.0, %v1021
    %v1023 = vpop.f32.mrf.mxu0
    %v1024 = vadd.f32 0.0, %v1023
    %v1025 = vpop.f32.mrf.mxu0
    %v1026 = vadd.f32 0.0, %v1025
    %v1027 = vpop.f32.mrf.mxu0
    %v1028 = vadd.f32 0.0, %v1027
    %1029 = vmatprep.mubr.bf16.mxu0 %v718
    %1030 = vmatmul.mubr.bf16.gmra.mxu0 %v201
    %v1031 = vpop.f32.mrf.mxu0
    %v1032 = vadd.f32 0.0, %v1031
    %v1033 = vpop.f32.mrf.mxu0
    %v1034 = vadd.f32 0.0, %v1033
    %v1035 = vpop.f32.mrf.mxu0
    %v1036 = vadd.f32 0.0, %v1035
    %v1037 = vpop.f32.mrf.mxu0
    %v1038 = vadd.f32 0.0, %v1037
    %1039 = vdwg.mxu0
    %1104 = vrot.lane.b32.xlu0 %v783, 127
    %v1105 = vpop.permute.xlu0 %1104
    %1106 = vrot.lane.b32.xlu0 %v785, 127
    %v1107 = vpop.permute.xlu0 %1106
    %1108 = vrot.lane.b32.xlu0 %v856, 127
    %v1109 = vpop.permute.xlu0 %1108
    %1110 = vrot.lane.b32.xlu0 %v858, 127
    %v1111 = vpop.permute.xlu0 %1110
    %1112 = vrot.lane.b32.xlu0 %v929, 127
    %v1113 = vpop.permute.xlu0 %1112
    %1114 = vrot.lane.b32.xlu0 %v931, 127
    %v1115 = vpop.permute.xlu0 %1114
    %1116 = vrot.lane.b32.xlu0 %v1002, 127
    %v1117 = vpop.permute.xlu0 %1116
    %1118 = vrot.lane.b32.xlu0 %v1004, 127
    %v1119 = vpop.permute.xlu0 %1118
    %1120 = vrot.lane.b32.xlu0 %v787, 127
    %v1121 = vpop.permute.xlu0 %1120
    %1122 = vrot.lane.b32.xlu0 %v789, 127
    %v1123 = vpop.permute.xlu0 %1122
    %1124 = vrot.lane.b32.xlu0 %v860, 127
    %v1125 = vpop.permute.xlu0 %1124
    %1126 = vrot.lane.b32.xlu0 %v862, 127
    %v1127 = vpop.permute.xlu0 %1126
    %1128 = vrot.lane.b32.xlu0 %v933, 127
    %v1129 = vpop.permute.xlu0 %1128
    %1130 = vrot.lane.b32.xlu0 %v935, 127
    %v1131 = vpop.permute.xlu0 %1130
    %1132 = vrot.lane.b32.xlu0 %v1006, 127
    %v1133 = vpop.permute.xlu0 %1132
    %1134 = vrot.lane.b32.xlu0 %v1008, 127
    %v1135 = vpop.permute.xlu0 %1134
    %1136 = vrot.lane.b32.xlu0 %v793, 127
    %v1137 = vpop.permute.xlu0 %1136
    %1138 = vrot.lane.b32.xlu0 %v795, 127
    %v1139 = vpop.permute.xlu0 %1138
    %1140 = vrot.lane.b32.xlu0 %v866, 127
    %v1141 = vpop.permute.xlu0 %1140
    %1142 = vrot.lane.b32.xlu0 %v868, 127
    %v1143 = vpop.permute.xlu0 %1142
    %1144 = vrot.lane.b32.xlu0 %v939, 127
    %v1145 = vpop.permute.xlu0 %1144
    %1146 = vrot.lane.b32.xlu0 %v941, 127
    %v1147 = vpop.permute.xlu0 %1146
    %1148 = vrot.lane.b32.xlu0 %v1012, 127
    %v1149 = vpop.permute.xlu0 %1148
    %1150 = vrot.lane.b32.xlu0 %v1014, 127
    %v1151 = vpop.permute.xlu0 %1150
    %1152 = vrot.lane.b32.xlu0 %v797, 127
    %v1153 = vpop.permute.xlu0 %1152
    %1154 = vrot.lane.b32.xlu0 %v799, 127
    %v1155 = vpop.permute.xlu0 %1154
    %1156 = vrot.lane.b32.xlu0 %v870, 127
    %v1157 = vpop.permute.xlu0 %1156
    %1158 = vrot.lane.b32.xlu0 %v872, 127
    %v1159 = vpop.permute.xlu0 %1158
    %1160 = vrot.lane.b32.xlu0 %v943, 127
    %v1161 = vpop.permute.xlu0 %1160
    %1162 = vrot.lane.b32.xlu0 %v945, 127
    %v1163 = vpop.permute.xlu0 %1162
    %1164 = vrot.lane.b32.xlu0 %v1016, 127
    %v1165 = vpop.permute.xlu0 %1164
    %1166 = vrot.lane.b32.xlu0 %v1018, 127
    %v1167 = vpop.permute.xlu0 %1166
    %1168 = vrot.lane.b32.xlu0 %v803, 127
    %v1169 = vpop.permute.xlu0 %1168
    %1170 = vrot.lane.b32.xlu0 %v805, 127
    %v1171 = vpop.permute.xlu0 %1170
    %1172 = vrot.lane.b32.xlu0 %v876, 127
    %v1173 = vpop.permute.xlu0 %1172
    %1174 = vrot.lane.b32.xlu0 %v878, 127
    %v1175 = vpop.permute.xlu0 %1174
    %1176 = vrot.lane.b32.xlu0 %v949, 127
    %v1177 = vpop.permute.xlu0 %1176
    %1178 = vrot.lane.b32.xlu0 %v951, 127
    %v1179 = vpop.permute.xlu0 %1178
    %1180 = vrot.lane.b32.xlu0 %v1022, 127
    %v1181 = vpop.permute.xlu0 %1180
    %1182 = vrot.lane.b32.xlu0 %v1024, 127
    %v1183 = vpop.permute.xlu0 %1182
    %1184 = vrot.lane.b32.xlu0 %v807, 127
    %v1185 = vpop.permute.xlu0 %1184
    %1186 = vrot.lane.b32.xlu0 %v809, 127
    %v1187 = vpop.permute.xlu0 %1186
    %1188 = vrot.lane.b32.xlu0 %v880, 127
    %v1189 = vpop.permute.xlu0 %1188
    %1190 = vrot.lane.b32.xlu0 %v882, 127
    %v1191 = vpop.permute.xlu0 %1190
    %1192 = vrot.lane.b32.xlu0 %v953, 127
    %v1193 = vpop.permute.xlu0 %1192
    %1194 = vrot.lane.b32.xlu0 %v955, 127
    %v1195 = vpop.permute.xlu0 %1194
    %1196 = vrot.lane.b32.xlu0 %v1026, 127
    %v1197 = vpop.permute.xlu0 %1196
    %1198 = vrot.lane.b32.xlu0 %v1028, 127
    %v1199 = vpop.permute.xlu0 %1198
    %1200 = vrot.lane.b32.xlu0 %v813, 127
    %v1201 = vpop.permute.xlu0 %1200
    %1202 = vrot.lane.b32.xlu0 %v815, 127
    %v1203 = vpop.permute.xlu0 %1202
    %1204 = vrot.lane.b32.xlu0 %v886, 127
    %v1205 = vpop.permute.xlu0 %1204
    %1206 = vrot.lane.b32.xlu0 %v888, 127
    %v1207 = vpop.permute.xlu0 %1206
    %1208 = vrot.lane.b32.xlu0 %v959, 127
    %v1209 = vpop.permute.xlu0 %1208
    %1210 = vrot.lane.b32.xlu0 %v961, 127
    %v1211 = vpop.permute.xlu0 %1210
    %1212 = vrot.lane.b32.xlu0 %v1032, 127
    %v1213 = vpop.permute.xlu0 %1212
    %1214 = vrot.lane.b32.xlu0 %v1034, 127
    %v1215 = vpop.permute.xlu0 %1214
    %1216 = vrot.lane.b32.xlu0 %v817, 127
    %v1217 = vpop.permute.xlu0 %1216
    %1218 = vrot.lane.b32.xlu0 %v819, 127
    %v1219 = vpop.permute.xlu0 %1218
    %1220 = vrot.lane.b32.xlu0 %v890, 127
    %v1221 = vpop.permute.xlu0 %1220
    %1222 = vrot.lane.b32.xlu0 %v892, 127
    %v1223 = vpop.permute.xlu0 %1222
    %1224 = vrot.lane.b32.xlu0 %v963, 127
    %v1225 = vpop.permute.xlu0 %1224
    %1226 = vrot.lane.b32.xlu0 %v965, 127
    %v1227 = vpop.permute.xlu0 %1226
    %1228 = vrot.lane.b32.xlu0 %v1036, 127
    %v1229 = vpop.permute.xlu0 %1228
    %1230 = vrot.lane.b32.xlu0 %v1038, 127
    %v1231 = vpop.permute.xlu0 %1230
    %vm1232 = vcmask 1039360
    %v1233 = vsel %vm1232, %v1105, %v1107
    %v1234 = vsel %vm1232, %v1107, %v1109
    %v1235 = vsel %vm1232, %v1109, %v1111
    %v1236 = vsel %vm1232, %v1111, %v1113
    %v1237 = vsel %vm1232, %v1113, %v1115
    %v1238 = vsel %vm1232, %v1115, %v1117
    %v1239 = vsel %vm1232, %v1117, %v1119
    %v1240 = vsel %vm1232, %v1121, %v1123
    %v1241 = vsel %vm1232, %v1123, %v1125
    %v1242 = vsel %vm1232, %v1125, %v1127
    %v1243 = vsel %vm1232, %v1127, %v1129
    %v1244 = vsel %vm1232, %v1129, %v1131
    %v1245 = vsel %vm1232, %v1131, %v1133
    %v1246 = vsel %vm1232, %v1133, %v1135
    %v1247 = vsel %vm1232, %v1137, %v1139
    %v1248 = vsel %vm1232, %v1139, %v1141
    %v1249 = vsel %vm1232, %v1141, %v1143
    %v1250 = vsel %vm1232, %v1143, %v1145
    %v1251 = vsel %vm1232, %v1145, %v1147
    %v1252 = vsel %vm1232, %v1147, %v1149
    %v1253 = vsel %vm1232, %v1149, %v1151
    %v1254 = vsel %vm1232, %v1153, %v1155
    %v1255 = vsel %vm1232, %v1155, %v1157
    %v1256 = vsel %vm1232, %v1157, %v1159
    %v1257 = vsel %vm1232, %v1159, %v1161
    %v1258 = vsel %vm1232, %v1161, %v1163
    %v1259 = vsel %vm1232, %v1163, %v1165
    %v1260 = vsel %vm1232, %v1165, %v1167
    %v1261 = vsel %vm1232, %v1169, %v1171
    %v1262 = vsel %vm1232, %v1171, %v1173
    %v1263 = vsel %vm1232, %v1173, %v1175
    %v1264 = vsel %vm1232, %v1175, %v1177
    %v1265 = vsel %vm1232, %v1177, %v1179
    %v1266 = vsel %vm1232, %v1179, %v1181
    %v1267 = vsel %vm1232, %v1181, %v1183
    %v1268 = vsel %vm1232, %v1185, %v1187
    %v1269 = vsel %vm1232, %v1187, %v1189
    %v1270 = vsel %vm1232, %v1189, %v1191
    %v1271 = vsel %vm1232, %v1191, %v1193
    %v1272 = vsel %vm1232, %v1193, %v1195
    %v1273 = vsel %vm1232, %v1195, %v1197
    %v1274 = vsel %vm1232, %v1197, %v1199
    %v1275 = vsel %vm1232, %v1201, %v1203
    %v1276 = vsel %vm1232, %v1203, %v1205
    %v1277 = vsel %vm1232, %v1205, %v1207
    %v1278 = vsel %vm1232, %v1207, %v1209
    %v1279 = vsel %vm1232, %v1209, %v1211
    %v1280 = vsel %vm1232, %v1211, %v1213
    %v1281 = vsel %vm1232, %v1213, %v1215
    %v1282 = vsel %vm1232, %v1217, %v1219
    %v1283 = vsel %vm1232, %v1219, %v1221
    %v1284 = vsel %vm1232, %v1221, %v1223
    %v1285 = vsel %vm1232, %v1223, %v1225
    %v1286 = vsel %vm1232, %v1225, %v1227
    %v1287 = vsel %vm1232, %v1227, %v1229
    %v1288 = vsel %vm1232, %v1229, %v1231
    %v1353 = vmax.f32 %v783, %v1233
    %v1354 = vmax.f32 %v785, %v1234
    %v1355 = vmax.f32 %v856, %v1235
    %v1356 = vmax.f32 %v858, %v1236
    %v1357 = vmax.f32 %v929, %v1237
    %v1358 = vmax.f32 %v931, %v1238
    %v1359 = vmax.f32 %v1002, %v1239
    %v1360 = vmax.f32 %v1004, %v1119
    %v1361 = vmax.f32 %v787, %v1240
    %v1362 = vmax.f32 %v789, %v1241
    %v1363 = vmax.f32 %v860, %v1242
    %v1364 = vmax.f32 %v862, %v1243
    %v1365 = vmax.f32 %v933, %v1244
    %v1366 = vmax.f32 %v935, %v1245
    %v1367 = vmax.f32 %v1006, %v1246
    %v1368 = vmax.f32 %v1008, %v1135
    %v1369 = vmax.f32 %v793, %v1247
    %v1370 = vmax.f32 %v795, %v1248
    %v1371 = vmax.f32 %v866, %v1249
    %v1372 = vmax.f32 %v868, %v1250
    %v1373 = vmax.f32 %v939, %v1251
    %v1374 = vmax.f32 %v941, %v1252
    %v1375 = vmax.f32 %v1012, %v1253
    %v1376 = vmax.f32 %v1014, %v1151
    %v1377 = vmax.f32 %v797, %v1254
    %v1378 = vmax.f32 %v799, %v1255
    %v1379 = vmax.f32 %v870, %v1256
    %v1380 = vmax.f32 %v872, %v1257
    %v1381 = vmax.f32 %v943, %v1258
    %v1382 = vmax.f32 %v945, %v1259
    %v1383 = vmax.f32 %v1016, %v1260
    %v1384 = vmax.f32 %v1018, %v1167
    %v1385 = vmax.f32 %v803, %v1261
    %v1386 = vmax.f32 %v805, %v1262
    %v1387 = vmax.f32 %v876, %v1263
    %v1388 = vmax.f32 %v878, %v1264
    %v1389 = vmax.f32 %v949, %v1265
    %v1390 = vmax.f32 %v951, %v1266
    %v1391 = vmax.f32 %v1022, %v1267
    %v1392 = vmax.f32 %v1024, %v1183
    %v1393 = vmax.f32 %v807, %v1268
    %v1394 = vmax.f32 %v809, %v1269
    %v1395 = vmax.f32 %v880, %v1270
    %v1396 = vmax.f32 %v882, %v1271
    %v1397 = vmax.f32 %v953, %v1272
    %v1398 = vmax.f32 %v955, %v1273
    %v1399 = vmax.f32 %v1026, %v1274
    %v1400 = vmax.f32 %v1028, %v1199
    %v1401 = vmax.f32 %v813, %v1275
    %v1402 = vmax.f32 %v815, %v1276
    %v1403 = vmax.f32 %v886, %v1277
    %v1404 = vmax.f32 %v888, %v1278
    %v1405 = vmax.f32 %v959, %v1279
    %v1406 = vmax.f32 %v961, %v1280
    %v1407 = vmax.f32 %v1032, %v1281
    %v1408 = vmax.f32 %v1034, %v1215
    %v1409 = vmax.f32 %v817, %v1282
    %v1410 = vmax.f32 %v819, %v1283
    %v1411 = vmax.f32 %v890, %v1284
    %v1412 = vmax.f32 %v892, %v1285
    %v1413 = vmax.f32 %v963, %v1286
    %v1414 = vmax.f32 %v965, %v1287
    %v1415 = vmax.f32 %v1036, %v1288
    %v1416 = vmax.f32 %v1038, %v1231
    %1417 = vrot.lane.b32.xlu0 %v783, 126
    %v1418 = vpop.permute.xlu0 %1417
    %1419 = vrot.lane.b32.xlu0 %v785, 126
    %v1420 = vpop.permute.xlu0 %1419
    %1421 = vrot.lane.b32.xlu0 %v856, 126
    %v1422 = vpop.permute.xlu0 %1421
    %1423 = vrot.lane.b32.xlu0 %v858, 126
    %v1424 = vpop.permute.xlu0 %1423
    %1425 = vrot.lane.b32.xlu0 %v929, 126
    %v1426 = vpop.permute.xlu0 %1425
    %1427 = vrot.lane.b32.xlu0 %v931, 126
    %v1428 = vpop.permute.xlu0 %1427
    %1429 = vrot.lane.b32.xlu0 %v1002, 126
    %v1430 = vpop.permute.xlu0 %1429
    %1431 = vrot.lane.b32.xlu0 %v1004, 126
    %v1432 = vpop.permute.xlu0 %1431
    %1433 = vrot.lane.b32.xlu0 %v787, 126
    %v1434 = vpop.permute.xlu0 %1433
    %1435 = vrot.lane.b32.xlu0 %v789, 126
    %v1436 = vpop.permute.xlu0 %1435
    %1437 = vrot.lane.b32.xlu0 %v860, 126
    %v1438 = vpop.permute.xlu0 %1437
    %1439 = vrot.lane.b32.xlu0 %v862, 126
    %v1440 = vpop.permute.xlu0 %1439
    %1441 = vrot.lane.b32.xlu0 %v933, 126
    %v1442 = vpop.permute.xlu0 %1441
    %1443 = vrot.lane.b32.xlu0 %v935, 126
    %v1444 = vpop.permute.xlu0 %1443
    %1445 = vrot.lane.b32.xlu0 %v1006, 126
    %v1446 = vpop.permute.xlu0 %1445
    %1447 = vrot.lane.b32.xlu0 %v1008, 126
    %v1448 = vpop.permute.xlu0 %1447
    %1449 = vrot.lane.b32.xlu0 %v793, 126
    %v1450 = vpop.permute.xlu0 %1449
    %1451 = vrot.lane.b32.xlu0 %v795, 126
    %v1452 = vpop.permute.xlu0 %1451
    %1453 = vrot.lane.b32.xlu0 %v866, 126
    %v1454 = vpop.permute.xlu0 %1453
    %1455 = vrot.lane.b32.xlu0 %v868, 126
    %v1456 = vpop.permute.xlu0 %1455
    %1457 = vrot.lane.b32.xlu0 %v939, 126
    %v1458 = vpop.permute.xlu0 %1457
    %1459 = vrot.lane.b32.xlu0 %v941, 126
    %v1460 = vpop.permute.xlu0 %1459
    %1461 = vrot.lane.b32.xlu0 %v1012, 126
    %v1462 = vpop.permute.xlu0 %1461
    %1463 = vrot.lane.b32.xlu0 %v1014, 126
    %v1464 = vpop.permute.xlu0 %1463
    %1465 = vrot.lane.b32.xlu0 %v797, 126
    %v1466 = vpop.permute.xlu0 %1465
    %1467 = vrot.lane.b32.xlu0 %v799, 126
    %v1468 = vpop.permute.xlu0 %1467
    %1469 = vrot.lane.b32.xlu0 %v870, 126
    %v1470 = vpop.permute.xlu0 %1469
    %1471 = vrot.lane.b32.xlu0 %v872, 126
    %v1472 = vpop.permute.xlu0 %1471
    %1473 = vrot.lane.b32.xlu0 %v943, 126
    %v1474 = vpop.permute.xlu0 %1473
    %1475 = vrot.lane.b32.xlu0 %v945, 126
    %v1476 = vpop.permute.xlu0 %1475
    %1477 = vrot.lane.b32.xlu0 %v1016, 126
    %v1478 = vpop.permute.xlu0 %1477
    %1479 = vrot.lane.b32.xlu0 %v1018, 126
    %v1480 = vpop.permute.xlu0 %1479
    %1481 = vrot.lane.b32.xlu0 %v803, 126
    %v1482 = vpop.permute.xlu0 %1481
    %1483 = vrot.lane.b32.xlu0 %v805, 126
    %v1484 = vpop.permute.xlu0 %1483
    %1485 = vrot.lane.b32.xlu0 %v876, 126
    %v1486 = vpop.permute.xlu0 %1485
    %1487 = vrot.lane.b32.xlu0 %v878, 126
    %v1488 = vpop.permute.xlu0 %1487
    %1489 = vrot.lane.b32.xlu0 %v949, 126
    %v1490 = vpop.permute.xlu0 %1489
    %1491 = vrot.lane.b32.xlu0 %v951, 126
    %v1492 = vpop.permute.xlu0 %1491
    %1493 = vrot.lane.b32.xlu0 %v1022, 126
    %v1494 = vpop.permute.xlu0 %1493
    %1495 = vrot.lane.b32.xlu0 %v1024, 126
    %v1496 = vpop.permute.xlu0 %1495
    %1497 = vrot.lane.b32.xlu0 %v807, 126
    %v1498 = vpop.permute.xlu0 %1497
    %1499 = vrot.lane.b32.xlu0 %v809, 126
    %v1500 = vpop.permute.xlu0 %1499
    %1501 = vrot.lane.b32.xlu0 %v880, 126
    %v1502 = vpop.permute.xlu0 %1501
    %1503 = vrot.lane.b32.xlu0 %v882, 126
    %v1504 = vpop.permute.xlu0 %1503
    %1505 = vrot.lane.b32.xlu0 %v953, 126
    %v1506 = vpop.permute.xlu0 %1505
    %1507 = vrot.lane.b32.xlu0 %v955, 126
    %v1508 = vpop.permute.xlu0 %1507
    %1509 = vrot.lane.b32.xlu0 %v1026, 126
    %v1510 = vpop.permute.xlu0 %1509
    %1511 = vrot.lane.b32.xlu0 %v1028, 126
    %v1512 = vpop.permute.xlu0 %1511
    %1513 = vrot.lane.b32.xlu0 %v813, 126
    %v1514 = vpop.permute.xlu0 %1513
    %1515 = vrot.lane.b32.xlu0 %v815, 126
    %v1516 = vpop.permute.xlu0 %1515
    %1517 = vrot.lane.b32.xlu0 %v886, 126
    %v1518 = vpop.permute.xlu0 %1517
    %1519 = vrot.lane.b32.xlu0 %v888, 126
    %v1520 = vpop.permute.xlu0 %1519
    %1521 = vrot.lane.b32.xlu0 %v959, 126
    %v1522 = vpop.permute.xlu0 %1521
    %1523 = vrot.lane.b32.xlu0 %v961, 126
    %v1524 = vpop.permute.xlu0 %1523
    %1525 = vrot.lane.b32.xlu0 %v1032, 126
    %v1526 = vpop.permute.xlu0 %1525
    %1527 = vrot.lane.b32.xlu0 %v1034, 126
    %v1528 = vpop.permute.xlu0 %1527
    %1529 = vrot.lane.b32.xlu0 %v817, 126
    %v1530 = vpop.permute.xlu0 %1529
    %1531 = vrot.lane.b32.xlu0 %v819, 126
    %v1532 = vpop.permute.xlu0 %1531
    %1533 = vrot.lane.b32.xlu0 %v890, 126
    %v1534 = vpop.permute.xlu0 %1533
    %1535 = vrot.lane.b32.xlu0 %v892, 126
    %v1536 = vpop.permute.xlu0 %1535
    %1537 = vrot.lane.b32.xlu0 %v963, 126
    %v1538 = vpop.permute.xlu0 %1537
    %1539 = vrot.lane.b32.xlu0 %v965, 126
    %v1540 = vpop.permute.xlu0 %1539
    %1541 = vrot.lane.b32.xlu0 %v1036, 126
    %v1542 = vpop.permute.xlu0 %1541
    %1543 = vrot.lane.b32.xlu0 %v1038, 126
    %v1544 = vpop.permute.xlu0 %1543
    %vm1545 = vcmask 1031168
    %v1546 = vsel %vm1545, %v1418, %v1420
    %v1547 = vsel %vm1545, %v1420, %v1422
    %v1548 = vsel %vm1545, %v1422, %v1424
    %v1549 = vsel %vm1545, %v1424, %v1426
    %v1550 = vsel %vm1545, %v1426, %v1428
    %v1551 = vsel %vm1545, %v1428, %v1430
    %v1552 = vsel %vm1545, %v1430, %v1432
    %v1553 = vsel %vm1545, %v1434, %v1436
    %v1554 = vsel %vm1545, %v1436, %v1438
    %v1555 = vsel %vm1545, %v1438, %v1440
    %v1556 = vsel %vm1545, %v1440, %v1442
    %v1557 = vsel %vm1545, %v1442, %v1444
    %v1558 = vsel %vm1545, %v1444, %v1446
    %v1559 = vsel %vm1545, %v1446, %v1448
    %v1560 = vsel %vm1545, %v1450, %v1452
    %v1561 = vsel %vm1545, %v1452, %v1454
    %v1562 = vsel %vm1545, %v1454, %v1456
    %v1563 = vsel %vm1545, %v1456, %v1458
    %v1564 = vsel %vm1545, %v1458, %v1460
    %v1565 = vsel %vm1545, %v1460, %v1462
    %v1566 = vsel %vm1545, %v1462, %v1464
    %v1567 = vsel %vm1545, %v1466, %v1468
    %v1568 = vsel %vm1545, %v1468, %v1470
    %v1569 = vsel %vm1545, %v1470, %v1472
    %v1570 = vsel %vm1545, %v1472, %v1474
    %v1571 = vsel %vm1545, %v1474, %v1476
    %v1572 = vsel %vm1545, %v1476, %v1478
    %v1573 = vsel %vm1545, %v1478, %v1480
    %v1574 = vsel %vm1545, %v1482, %v1484
    %v1575 = vsel %vm1545, %v1484, %v1486
    %v1576 = vsel %vm1545, %v1486, %v1488
    %v1577 = vsel %vm1545, %v1488, %v1490
    %v1578 = vsel %vm1545, %v1490, %v1492
    %v1579 = vsel %vm1545, %v1492, %v1494
    %v1580 = vsel %vm1545, %v1494, %v1496
    %v1581 = vsel %vm1545, %v1498, %v1500
    %v1582 = vsel %vm1545, %v1500, %v1502
    %v1583 = vsel %vm1545, %v1502, %v1504
    %v1584 = vsel %vm1545, %v1504, %v1506
    %v1585 = vsel %vm1545, %v1506, %v1508
    %v1586 = vsel %vm1545, %v1508, %v1510
    %v1587 = vsel %vm1545, %v1510, %v1512
    %v1588 = vsel %vm1545, %v1514, %v1516
    %v1589 = vsel %vm1545, %v1516, %v1518
    %v1590 = vsel %vm1545, %v1518, %v1520
    %v1591 = vsel %vm1545, %v1520, %v1522
    %v1592 = vsel %vm1545, %v1522, %v1524
    %v1593 = vsel %vm1545, %v1524, %v1526
    %v1594 = vsel %vm1545, %v1526, %v1528
    %v1595 = vsel %vm1545, %v1530, %v1532
    %v1596 = vsel %vm1545, %v1532, %v1534
    %v1597 = vsel %vm1545, %v1534, %v1536
    %v1598 = vsel %vm1545, %v1536, %v1538
    %v1599 = vsel %vm1545, %v1538, %v1540
    %v1600 = vsel %vm1545, %v1540, %v1542
    %v1601 = vsel %vm1545, %v1542, %v1544
    %v1666 = vmax.f32 %v1353, %v1546
    %v1667 = vmax.f32 %v1354, %v1547
    %v1668 = vmax.f32 %v1355, %v1548
    %v1669 = vmax.f32 %v1356, %v1549
    %v1670 = vmax.f32 %v1357, %v1550
    %v1671 = vmax.f32 %v1358, %v1551
    %v1672 = vmax.f32 %v1359, %v1552
    %v1673 = vmax.f32 %v1360, %v1432
    %v1674 = vmax.f32 %v1361, %v1553
    %v1675 = vmax.f32 %v1362, %v1554
    %v1676 = vmax.f32 %v1363, %v1555
    %v1677 = vmax.f32 %v1364, %v1556
    %v1678 = vmax.f32 %v1365, %v1557
    %v1679 = vmax.f32 %v1366, %v1558
    %v1680 = vmax.f32 %v1367, %v1559
    %v1681 = vmax.f32 %v1368, %v1448
    %v1682 = vmax.f32 %v1369, %v1560
    %v1683 = vmax.f32 %v1370, %v1561
    %v1684 = vmax.f32 %v1371, %v1562
    %v1685 = vmax.f32 %v1372, %v1563
    %v1686 = vmax.f32 %v1373, %v1564
    %v1687 = vmax.f32 %v1374, %v1565
    %v1688 = vmax.f32 %v1375, %v1566
    %v1689 = vmax.f32 %v1376, %v1464
    %v1690 = vmax.f32 %v1377, %v1567
    %v1691 = vmax.f32 %v1378, %v1568
    %v1692 = vmax.f32 %v1379, %v1569
    %v1693 = vmax.f32 %v1380, %v1570
    %v1694 = vmax.f32 %v1381, %v1571
    %v1695 = vmax.f32 %v1382, %v1572
    %v1696 = vmax.f32 %v1383, %v1573
    %v1697 = vmax.f32 %v1384, %v1480
    %v1698 = vmax.f32 %v1385, %v1574
    %v1699 = vmax.f32 %v1386, %v1575
    %v1700 = vmax.f32 %v1387, %v1576
    %v1701 = vmax.f32 %v1388, %v1577
    %v1702 = vmax.f32 %v1389, %v1578
    %v1703 = vmax.f32 %v1390, %v1579
    %v1704 = vmax.f32 %v1391, %v1580
    %v1705 = vmax.f32 %v1392, %v1496
    %v1706 = vmax.f32 %v1393, %v1581
    %v1707 = vmax.f32 %v1394, %v1582
    %v1708 = vmax.f32 %v1395, %v1583
    %v1709 = vmax.f32 %v1396, %v1584
    %v1710 = vmax.f32 %v1397, %v1585
    %v1711 = vmax.f32 %v1398, %v1586
    %v1712 = vmax.f32 %v1399, %v1587
    %v1713 = vmax.f32 %v1400, %v1512
    %v1714 = vmax.f32 %v1401, %v1588
    %v1715 = vmax.f32 %v1402, %v1589
    %v1716 = vmax.f32 %v1403, %v1590
    %v1717 = vmax.f32 %v1404, %v1591
    %v1718 = vmax.f32 %v1405, %v1592
    %v1719 = vmax.f32 %v1406, %v1593
    %v1720 = vmax.f32 %v1407, %v1594
    %v1721 = vmax.f32 %v1408, %v1528
    %v1722 = vmax.f32 %v1409, %v1595
    %v1723 = vmax.f32 %v1410, %v1596
    %v1724 = vmax.f32 %v1411, %v1597
    %v1725 = vmax.f32 %v1412, %v1598
    %v1726 = vmax.f32 %v1413, %v1599
    %v1727 = vmax.f32 %v1414, %v1600
    %v1728 = vmax.f32 %v1415, %v1601
    %v1729 = vmax.f32 %v1416, %v1544
    %v1730 = vld [vmem:[%s2] sm:$0xff]
    %v1731 = vld [vmem:[%s2 + $0x8] sm:$0xff]
    %v1732 = vld [vmem:[%s2 + $0x10] sm:$0xff]
    %v1733 = vld [vmem:[%s2 + $0x18] sm:$0xff]
    %v1734 = vld [vmem:[%s2 + $0x20] sm:$0xff]
    %v1735 = vld [vmem:[%s2 + $0x28] sm:$0xff]
    %v1736 = vld [vmem:[%s2 + $0x30] sm:$0xff]
    %v1737 = vld [vmem:[%s2 + $0x38] sm:$0xff]
    %1739 = vset.pattern.permute.xlu0 0
    %1740 = vperm.xlu0 %1739, %v1730
    %v1741 = vpop.permute.xlu0 %1740
    %1744 = vset.pattern.permute.xlu0 0
    %1745 = vperm.xlu0 %1744, %v1731
    %v1746 = vpop.permute.xlu0 %1745
    %1749 = vset.pattern.permute.xlu0 0
    %1750 = vperm.xlu0 %1749, %v1732
    %v1751 = vpop.permute.xlu0 %1750
    %1754 = vset.pattern.permute.xlu0 0
    %1755 = vperm.xlu0 %1754, %v1733
    %v1756 = vpop.permute.xlu0 %1755
    %1759 = vset.pattern.permute.xlu0 0
    %1760 = vperm.xlu0 %1759, %v1734
    %v1761 = vpop.permute.xlu0 %1760
    %1764 = vset.pattern.permute.xlu0 0
    %1765 = vperm.xlu0 %1764, %v1735
    %v1766 = vpop.permute.xlu0 %1765
    %1769 = vset.pattern.permute.xlu0 0
    %1770 = vperm.xlu0 %1769, %v1736
    %v1771 = vpop.permute.xlu0 %1770
    %1774 = vset.pattern.permute.xlu0 0
    %1775 = vperm.xlu0 %1774, %v1737
    %v1776 = vpop.permute.xlu0 %1775
    %v1778 = vadd.f32 %v1666, %v1741
    %v1779 = vadd.f32 %v1667, %v1741
    %v1780 = vadd.f32 %v1668, %v1741
    %v1781 = vadd.f32 %v1669, %v1741
    %v1782 = vadd.f32 %v1670, %v1741
    %v1783 = vadd.f32 %v1671, %v1741
    %v1784 = vadd.f32 %v1672, %v1741
    %v1785 = vadd.f32 %v1673, %v1741
    %v1786 = vadd.f32 %v1674, %v1746
    %v1787 = vadd.f32 %v1675, %v1746
    %v1788 = vadd.f32 %v1676, %v1746
    %v1789 = vadd.f32 %v1677, %v1746
    %v1790 = vadd.f32 %v1678, %v1746
    %v1791 = vadd.f32 %v1679, %v1746
    %v1792 = vadd.f32 %v1680, %v1746
    %v1793 = vadd.f32 %v1681, %v1746
    %v1794 = vadd.f32 %v1682, %v1751
    %v1795 = vadd.f32 %v1683, %v1751
    %v1796 = vadd.f32 %v1684, %v1751
    %v1797 = vadd.f32 %v1685, %v1751
    %v1798 = vadd.f32 %v1686, %v1751
    %v1799 = vadd.f32 %v1687, %v1751
    %v1800 = vadd.f32 %v1688, %v1751
    %v1801 = vadd.f32 %v1689, %v1751
    %v1802 = vadd.f32 %v1690, %v1756
    %v1803 = vadd.f32 %v1691, %v1756
    %v1804 = vadd.f32 %v1692, %v1756
    %v1805 = vadd.f32 %v1693, %v1756
    %v1806 = vadd.f32 %v1694, %v1756
    %v1807 = vadd.f32 %v1695, %v1756
    %v1808 = vadd.f32 %v1696, %v1756
    %v1809 = vadd.f32 %v1697, %v1756
    %v1810 = vadd.f32 %v1698, %v1761
    %v1811 = vadd.f32 %v1699, %v1761
    %v1812 = vadd.f32 %v1700, %v1761
    %v1813 = vadd.f32 %v1701, %v1761
    %v1814 = vadd.f32 %v1702, %v1761
    %v1815 = vadd.f32 %v1703, %v1761
    %v1816 = vadd.f32 %v1704, %v1761
    %v1817 = vadd.f32 %v1705, %v1761
    %v1818 = vadd.f32 %v1706, %v1766
    %v1819 = vadd.f32 %v1707, %v1766
    %v1820 = vadd.f32 %v1708, %v1766
    %v1821 = vadd.f32 %v1709, %v1766
    %v1822 = vadd.f32 %v1710, %v1766
    %v1823 = vadd.f32 %v1711, %v1766
    %v1824 = vadd.f32 %v1712, %v1766
    %v1825 = vadd.f32 %v1713, %v1766
    %v1826 = vadd.f32 %v1714, %v1771
    %v1827 = vadd.f32 %v1715, %v1771
    %v1828 = vadd.f32 %v1716, %v1771
    %v1829 = vadd.f32 %v1717, %v1771
    %v1830 = vadd.f32 %v1718, %v1771
    %v1831 = vadd.f32 %v1719, %v1771
    %v1832 = vadd.f32 %v1720, %v1771
    %v1833 = vadd.f32 %v1721, %v1771
    %v1834 = vadd.f32 %v1722, %v1776
    %v1835 = vadd.f32 %v1723, %v1776
    %v1836 = vadd.f32 %v1724, %v1776
    %v1837 = vadd.f32 %v1725, %v1776
    %v1838 = vadd.f32 %v1726, %v1776
    %v1839 = vadd.f32 %v1727, %v1776
    %v1840 = vadd.f32 %v1728, %v1776
    %v1841 = vadd.f32 %v1729, %v1776
    %vm1842 = vcmp.gt.f32.partialorder %v1778, 0.0
    %vm1843 = vcmp.gt.f32.partialorder %v1779, 0.0
    %vm1844 = vcmp.gt.f32.partialorder %v1780, 0.0
    %vm1845 = vcmp.gt.f32.partialorder %v1781, 0.0
    %vm1846 = vcmp.gt.f32.partialorder %v1782, 0.0
    %vm1847 = vcmp.gt.f32.partialorder %v1783, 0.0
    %vm1848 = vcmp.gt.f32.partialorder %v1784, 0.0
    %vm1849 = vcmp.gt.f32.partialorder %v1785, 0.0
    %vm1850 = vcmp.gt.f32.partialorder %v1786, 0.0
    %vm1851 = vcmp.gt.f32.partialorder %v1787, 0.0
    %vm1852 = vcmp.gt.f32.partialorder %v1788, 0.0
    %vm1853 = vcmp.gt.f32.partialorder %v1789, 0.0
    %vm1854 = vcmp.gt.f32.partialorder %v1790, 0.0
    %vm1855 = vcmp.gt.f32.partialorder %v1791, 0.0
    %vm1856 = vcmp.gt.f32.partialorder %v1792, 0.0
    %vm1857 = vcmp.gt.f32.partialorder %v1793, 0.0
    %vm1858 = vcmp.gt.f32.partialorder %v1794, 0.0
    %vm1859 = vcmp.gt.f32.partialorder %v1795, 0.0
    %vm1860 = vcmp.gt.f32.partialorder %v1796, 0.0
    %vm1861 = vcmp.gt.f32.partialorder %v1797, 0.0
    %vm1862 = vcmp.gt.f32.partialorder %v1798, 0.0
    %vm1863 = vcmp.gt.f32.partialorder %v1799, 0.0
    %vm1864 = vcmp.gt.f32.partialorder %v1800, 0.0
    %vm1865 = vcmp.gt.f32.partialorder %v1801, 0.0
    %vm1866 = vcmp.gt.f32.partialorder %v1802, 0.0
    %vm1867 = vcmp.gt.f32.partialorder %v1803, 0.0
    %vm1868 = vcmp.gt.f32.partialorder %v1804, 0.0
    %vm1869 = vcmp.gt.f32.partialorder %v1805, 0.0
    %vm1870 = vcmp.gt.f32.partialorder %v1806, 0.0
    %vm1871 = vcmp.gt.f32.partialorder %v1807, 0.0
    %vm1872 = vcmp.gt.f32.partialorder %v1808, 0.0
    %vm1873 = vcmp.gt.f32.partialorder %v1809, 0.0
    %vm1874 = vcmp.gt.f32.partialorder %v1810, 0.0
    %vm1875 = vcmp.gt.f32.partialorder %v1811, 0.0
    %vm1876 = vcmp.gt.f32.partialorder %v1812, 0.0
    %vm1877 = vcmp.gt.f32.partialorder %v1813, 0.0
    %vm1878 = vcmp.gt.f32.partialorder %v1814, 0.0
    %vm1879 = vcmp.gt.f32.partialorder %v1815, 0.0
    %vm1880 = vcmp.gt.f32.partialorder %v1816, 0.0
    %vm1881 = vcmp.gt.f32.partialorder %v1817, 0.0
    %vm1882 = vcmp.gt.f32.partialorder %v1818, 0.0
    %vm1883 = vcmp.gt.f32.partialorder %v1819, 0.0
    %vm1884 = vcmp.gt.f32.partialorder %v1820, 0.0
    %vm1885 = vcmp.gt.f32.partialorder %v1821, 0.0
    %vm1886 = vcmp.gt.f32.partialorder %v1822, 0.0
    %vm1887 = vcmp.gt.f32.partialorder %v1823, 0.0
    %vm1888 = vcmp.gt.f32.partialorder %v1824, 0.0
    %vm1889 = vcmp.gt.f32.partialorder %v1825, 0.0
    %vm1890 = vcmp.gt.f32.partialorder %v1826, 0.0
    %vm1891 = vcmp.gt.f32.partialorder %v1827, 0.0
    %vm1892 = vcmp.gt.f32.partialorder %v1828, 0.0
    %vm1893 = vcmp.gt.f32.partialorder %v1829, 0.0
    %vm1894 = vcmp.gt.f32.partialorder %v1830, 0.0
    %vm1895 = vcmp.gt.f32.partialorder %v1831, 0.0
    %vm1896 = vcmp.gt.f32.partialorder %v1832, 0.0
    %vm1897 = vcmp.gt.f32.partialorder %v1833, 0.0
    %vm1898 = vcmp.gt.f32.partialorder %v1834, 0.0
    %vm1899 = vcmp.gt.f32.partialorder %v1835, 0.0
    %vm1900 = vcmp.gt.f32.partialorder %v1836, 0.0
    %vm1901 = vcmp.gt.f32.partialorder %v1837, 0.0
    %vm1902 = vcmp.gt.f32.partialorder %v1838, 0.0
    %vm1903 = vcmp.gt.f32.partialorder %v1839, 0.0
    %vm1904 = vcmp.gt.f32.partialorder %v1840, 0.0
    %vm1905 = vcmp.gt.f32.partialorder %v1841, 0.0
    %v1906 = vmin.f32 %v1778, 0.0
    %v1907 = vmin.f32 %v1779, 0.0
    %v1908 = vmin.f32 %v1780, 0.0
    %v1909 = vmin.f32 %v1781, 0.0
    %v1910 = vmin.f32 %v1782, 0.0
    %v1911 = vmin.f32 %v1783, 0.0
    %v1912 = vmin.f32 %v1784, 0.0
    %v1913 = vmin.f32 %v1785, 0.0
    %v1914 = vmin.f32 %v1786, 0.0
    %v1915 = vmin.f32 %v1787, 0.0
    %v1916 = vmin.f32 %v1788, 0.0
    %v1917 = vmin.f32 %v1789, 0.0
    %v1918 = vmin.f32 %v1790, 0.0
    %v1919 = vmin.f32 %v1791, 0.0
    %v1920 = vmin.f32 %v1792, 0.0
    %v1921 = vmin.f32 %v1793, 0.0
    %v1922 = vmin.f32 %v1794, 0.0
    %v1923 = vmin.f32 %v1795, 0.0
    %v1924 = vmin.f32 %v1796, 0.0
    %v1925 = vmin.f32 %v1797, 0.0
    %v1926 = vmin.f32 %v1798, 0.0
    %v1927 = vmin.f32 %v1799, 0.0
    %v1928 = vmin.f32 %v1800, 0.0
    %v1929 = vmin.f32 %v1801, 0.0
    %v1930 = vmin.f32 %v1802, 0.0
    %v1931 = vmin.f32 %v1803, 0.0
    %v1932 = vmin.f32 %v1804, 0.0
    %v1933 = vmin.f32 %v1805, 0.0
    %v1934 = vmin.f32 %v1806, 0.0
    %v1935 = vmin.f32 %v1807, 0.0
    %v1936 = vmin.f32 %v1808, 0.0
    %v1937 = vmin.f32 %v1809, 0.0
    %v1938 = vmin.f32 %v1810, 0.0
    %v1939 = vmin.f32 %v1811, 0.0
    %v1940 = vmin.f32 %v1812, 0.0
    %v1941 = vmin.f32 %v1813, 0.0
    %v1942 = vmin.f32 %v1814, 0.0
    %v1943 = vmin.f32 %v1815, 0.0
    %v1944 = vmin.f32 %v1816, 0.0
    %v1945 = vmin.f32 %v1817, 0.0
    %v1946 = vmin.f32 %v1818, 0.0
    %v1947 = vmin.f32 %v1819, 0.0
    %v1948 = vmin.f32 %v1820, 0.0
    %v1949 = vmin.f32 %v1821, 0.0
    %v1950 = vmin.f32 %v1822, 0.0
    %v1951 = vmin.f32 %v1823, 0.0
    %v1952 = vmin.f32 %v1824, 0.0
    %v1953 = vmin.f32 %v1825, 0.0
    %v1954 = vmin.f32 %v1826, 0.0
    %v1955 = vmin.f32 %v1827, 0.0
    %v1956 = vmin.f32 %v1828, 0.0
    %v1957 = vmin.f32 %v1829, 0.0
    %v1958 = vmin.f32 %v1830, 0.0
    %v1959 = vmin.f32 %v1831, 0.0
    %v1960 = vmin.f32 %v1832, 0.0
    %v1961 = vmin.f32 %v1833, 0.0
    %v1962 = vmin.f32 %v1834, 0.0
    %v1963 = vmin.f32 %v1835, 0.0
    %v1964 = vmin.f32 %v1836, 0.0
    %v1965 = vmin.f32 %v1837, 0.0
    %v1966 = vmin.f32 %v1838, 0.0
    %v1967 = vmin.f32 %v1839, 0.0
    %v1968 = vmin.f32 %v1840, 0.0
    %v1969 = vmin.f32 %v1841, 0.0
    %v1970 = vmul.f32 %v1906, 1.442695
    %v1971 = vpow.pop %v1970
    %v1972 = vmul.f32 %v1907, 1.442695
    %v1973 = vpow.pop %v1972
    %v1974 = vmul.f32 %v1908, 1.442695
    %v1975 = vpow.pop %v1974
    %v1976 = vmul.f32 %v1909, 1.442695
    %v1977 = vpow.pop %v1976
    %v1978 = vmul.f32 %v1910, 1.442695
    %v1979 = vpow.pop %v1978
    %v1980 = vmul.f32 %v1911, 1.442695
    %v1981 = vpow.pop %v1980
    %v1982 = vmul.f32 %v1912, 1.442695
    %v1983 = vpow.pop %v1982
    %v1984 = vmul.f32 %v1913, 1.442695
    %v1985 = vpow.pop %v1984
    %v1986 = vmul.f32 %v1914, 1.442695
    %v1987 = vpow.pop %v1986
    %v1988 = vmul.f32 %v1915, 1.442695
    %v1989 = vpow.pop %v1988
    %v1990 = vmul.f32 %v1916, 1.442695
    %v1991 = vpow.pop %v1990
    %v1992 = vmul.f32 %v1917, 1.442695
    %v1993 = vpow.pop %v1992
    %v1994 = vmul.f32 %v1918, 1.442695
    %v1995 = vpow.pop %v1994
    %v1996 = vmul.f32 %v1919, 1.442695
    %v1997 = vpow.pop %v1996
    %v1998 = vmul.f32 %v1920, 1.442695
    %v1999 = vpow.pop %v1998
    %v2000 = vmul.f32 %v1921, 1.442695
    %v2001 = vpow.pop %v2000
    %v2002 = vmul.f32 %v1922, 1.442695
    %v2003 = vpow.pop %v2002
    %v2004 = vmul.f32 %v1923, 1.442695
    %v2005 = vpow.pop %v2004
    %v2006 = vmul.f32 %v1924, 1.442695
    %v2007 = vpow.pop %v2006
    %v2008 = vmul.f32 %v1925, 1.442695
    %v2009 = vpow.pop %v2008
    %v2010 = vmul.f32 %v1926, 1.442695
    %v2011 = vpow.pop %v2010
    %v2012 = vmul.f32 %v1927, 1.442695
    %v2013 = vpow.pop %v2012
    %v2014 = vmul.f32 %v1928, 1.442695
    %v2015 = vpow.pop %v2014
    %v2016 = vmul.f32 %v1929, 1.442695
    %v2017 = vpow.pop %v2016
    %v2018 = vmul.f32 %v1930, 1.442695
    %v2019 = vpow.pop %v2018
    %v2020 = vmul.f32 %v1931, 1.442695
    %v2021 = vpow.pop %v2020
    %v2022 = vmul.f32 %v1932, 1.442695
    %v2023 = vpow.pop %v2022
    %v2024 = vmul.f32 %v1933, 1.442695
    %v2025 = vpow.pop %v2024
    %v2026 = vmul.f32 %v1934, 1.442695
    %v2027 = vpow.pop %v2026
    %v2028 = vmul.f32 %v1935, 1.442695
    %v2029 = vpow.pop %v2028
    %v2030 = vmul.f32 %v1936, 1.442695
    %v2031 = vpow.pop %v2030
    %v2032 = vmul.f32 %v1937, 1.442695
    %v2033 = vpow.pop %v2032
    %v2034 = vmul.f32 %v1938, 1.442695
    %v2035 = vpow.pop %v2034
    %v2036 = vmul.f32 %v1939, 1.442695
    %v2037 = vpow.pop %v2036
    %v2038 = vmul.f32 %v1940, 1.442695
    %v2039 = vpow.pop %v2038
    %v2040 = vmul.f32 %v1941, 1.442695
    %v2041 = vpow.pop %v2040
    %v2042 = vmul.f32 %v1942, 1.442695
    %v2043 = vpow.pop %v2042
    %v2044 = vmul.f32 %v1943, 1.442695
    %v2045 = vpow.pop %v2044
    %v2046 = vmul.f32 %v1944, 1.442695
    %v2047 = vpow.pop %v2046
    %v2048 = vmul.f32 %v1945, 1.442695
    %v2049 = vpow.pop %v2048
    %v2050 = vmul.f32 %v1946, 1.442695
    %v2051 = vpow.pop %v2050
    %v2052 = vmul.f32 %v1947, 1.442695
    %v2053 = vpow.pop %v2052
    %v2054 = vmul.f32 %v1948, 1.442695
    %v2055 = vpow.pop %v2054
    %v2056 = vmul.f32 %v1949, 1.442695
    %v2057 = vpow.pop %v2056
    %v2058 = vmul.f32 %v1950, 1.442695
    %v2059 = vpow.pop %v2058
    %v2060 = vmul.f32 %v1951, 1.442695
    %v2061 = vpow.pop %v2060
    %v2062 = vmul.f32 %v1952, 1.442695
    %v2063 = vpow.pop %v2062
    %v2064 = vmul.f32 %v1953, 1.442695
    %v2065 = vpow.pop %v2064
    %v2066 = vmul.f32 %v1954, 1.442695
    %v2067 = vpow.pop %v2066
    %v2068 = vmul.f32 %v1955, 1.442695
    %v2069 = vpow.pop %v2068
    %v2070 = vmul.f32 %v1956, 1.442695
    %v2071 = vpow.pop %v2070
    %v2072 = vmul.f32 %v1957, 1.442695
    %v2073 = vpow.pop %v2072
    %v2074 = vmul.f32 %v1958, 1.442695
    %v2075 = vpow.pop %v2074
    %v2076 = vmul.f32 %v1959, 1.442695
    %v2077 = vpow.pop %v2076
    %v2078 = vmul.f32 %v1960, 1.442695
    %v2079 = vpow.pop %v2078
    %v2080 = vmul.f32 %v1961, 1.442695
    %v2081 = vpow.pop %v2080
    %v2082 = vmul.f32 %v1962, 1.442695
    %v2083 = vpow.pop %v2082
    %v2084 = vmul.f32 %v1963, 1.442695
    %v2085 = vpow.pop %v2084
    %v2086 = vmul.f32 %v1964, 1.442695
    %v2087 = vpow.pop %v2086
    %v2088 = vmul.f32 %v1965, 1.442695
    %v2089 = vpow.pop %v2088
    %v2090 = vmul.f32 %v1966, 1.442695
    %v2091 = vpow.pop %v2090
    %v2092 = vmul.f32 %v1967, 1.442695
    %v2093 = vpow.pop %v2092
    %v2094 = vmul.f32 %v1968, 1.442695
    %v2095 = vpow.pop %v2094
    %v2096 = vmul.f32 %v1969, 1.442695
    %v2097 = vpow.pop %v2096
    %v2098 = vsub.f32 %v1971, 1.0
    %v2099 = vsub.f32 %v1973, 1.0
    %v2100 = vsub.f32 %v1975, 1.0
    %v2101 = vsub.f32 %v1977, 1.0
    %v2102 = vsub.f32 %v1979, 1.0
    %v2103 = vsub.f32 %v1981, 1.0
    %v2104 = vsub.f32 %v1983, 1.0
    %v2105 = vsub.f32 %v1985, 1.0
    %v2106 = vsub.f32 %v1987, 1.0
    %v2107 = vsub.f32 %v1989, 1.0
    %v2108 = vsub.f32 %v1991, 1.0
    %v2109 = vsub.f32 %v1993, 1.0
    %v2110 = vsub.f32 %v1995, 1.0
    %v2111 = vsub.f32 %v1997, 1.0
    %v2112 = vsub.f32 %v1999, 1.0
    %v2113 = vsub.f32 %v2001, 1.0
    %v2114 = vsub.f32 %v2003, 1.0
    %v2115 = vsub.f32 %v2005, 1.0
    %v2116 = vsub.f32 %v2007, 1.0
    %v2117 = vsub.f32 %v2009, 1.0
    %v2118 = vsub.f32 %v2011, 1.0
    %v2119 = vsub.f32 %v2013, 1.0
    %v2120 = vsub.f32 %v2015, 1.0
    %v2121 = vsub.f32 %v2017, 1.0
    %v2122 = vsub.f32 %v2019, 1.0
    %v2123 = vsub.f32 %v2021, 1.0
    %v2124 = vsub.f32 %v2023, 1.0
    %v2125 = vsub.f32 %v2025, 1.0
    %v2126 = vsub.f32 %v2027, 1.0
    %v2127 = vsub.f32 %v2029, 1.0
    %v2128 = vsub.f32 %v2031, 1.0
    %v2129 = vsub.f32 %v2033, 1.0
    %v2130 = vsub.f32 %v2035, 1.0
    %v2131 = vsub.f32 %v2037, 1.0
    %v2132 = vsub.f32 %v2039, 1.0
    %v2133 = vsub.f32 %v2041, 1.0
    %v2134 = vsub.f32 %v2043, 1.0
    %v2135 = vsub.f32 %v2045, 1.0
    %v2136 = vsub.f32 %v2047, 1.0
    %v2137 = vsub.f32 %v2049, 1.0
    %v2138 = vsub.f32 %v2051, 1.0
    %v2139 = vsub.f32 %v2053, 1.0
    %v2140 = vsub.f32 %v2055, 1.0
    %v2141 = vsub.f32 %v2057, 1.0
    %v2142 = vsub.f32 %v2059, 1.0
    %v2143 = vsub.f32 %v2061, 1.0
    %v2144 = vsub.f32 %v2063, 1.0
    %v2145 = vsub.f32 %v2065, 1.0
    %v2146 = vsub.f32 %v2067, 1.0
    %v2147 = vsub.f32 %v2069, 1.0
    %v2148 = vsub.f32 %v2071, 1.0
    %v2149 = vsub.f32 %v2073, 1.0
    %v2150 = vsub.f32 %v2075, 1.0
    %v2151 = vsub.f32 %v2077, 1.0
    %v2152 = vsub.f32 %v2079, 1.0
    %v2153 = vsub.f32 %v2081, 1.0
    %v2154 = vsub.f32 %v2083, 1.0
    %v2155 = vsub.f32 %v2085, 1.0
    %v2156 = vsub.f32 %v2087, 1.0
    %v2157 = vsub.f32 %v2089, 1.0
    %v2158 = vsub.f32 %v2091, 1.0
    %v2159 = vsub.f32 %v2093, 1.0
    %v2160 = vsub.f32 %v2095, 1.0
    %v2161 = vsub.f32 %v2097, 1.0
    %v2162 = vsel %vm1842, %v1778, %v2098
    %v2163 = vsel %vm1843, %v1779, %v2099
    %v2164 = vsel %vm1844, %v1780, %v2100
    %v2165 = vsel %vm1845, %v1781, %v2101
    %v2166 = vsel %vm1846, %v1782, %v2102
    %v2167 = vsel %vm1847, %v1783, %v2103
    %v2168 = vsel %vm1848, %v1784, %v2104
    %v2169 = vsel %vm1849, %v1785, %v2105
    %v2170 = vsel %vm1850, %v1786, %v2106
    %v2171 = vsel %vm1851, %v1787, %v2107
    %v2172 = vsel %vm1852, %v1788, %v2108
    %v2173 = vsel %vm1853, %v1789, %v2109
    %v2174 = vsel %vm1854, %v1790, %v2110
    %v2175 = vsel %vm1855, %v1791, %v2111
    %v2176 = vsel %vm1856, %v1792, %v2112
    %v2177 = vsel %vm1857, %v1793, %v2113
    %v2178 = vsel %vm1858, %v1794, %v2114
    %v2179 = vsel %vm1859, %v1795, %v2115
    %v2180 = vsel %vm1860, %v1796, %v2116
    %v2181 = vsel %vm1861, %v1797, %v2117
    %v2182 = vsel %vm1862, %v1798, %v2118
    %v2183 = vsel %vm1863, %v1799, %v2119
    %v2184 = vsel %vm1864, %v1800, %v2120
    %v2185 = vsel %vm1865, %v1801, %v2121
    %v2186 = vsel %vm1866, %v1802, %v2122
    %v2187 = vsel %vm1867, %v1803, %v2123
    %v2188 = vsel %vm1868, %v1804, %v2124
    %v2189 = vsel %vm1869, %v1805, %v2125
    %v2190 = vsel %vm1870, %v1806, %v2126
    %v2191 = vsel %vm1871, %v1807, %v2127
    %v2192 = vsel %vm1872, %v1808, %v2128
    %v2193 = vsel %vm1873, %v1809, %v2129
    %v2194 = vsel %vm1874, %v1810, %v2130
    %v2195 = vsel %vm1875, %v1811, %v2131
    %v2196 = vsel %vm1876, %v1812, %v2132
    %v2197 = vsel %vm1877, %v1813, %v2133
    %v2198 = vsel %vm1878, %v1814, %v2134
    %v2199 = vsel %vm1879, %v1815, %v2135
    %v2200 = vsel %vm1880, %v1816, %v2136
    %v2201 = vsel %vm1881, %v1817, %v2137
    %v2202 = vsel %vm1882, %v1818, %v2138
    %v2203 = vsel %vm1883, %v1819, %v2139
    %v2204 = vsel %vm1884, %v1820, %v2140
    %v2205 = vsel %vm1885, %v1821, %v2141
    %v2206 = vsel %vm1886, %v1822, %v2142
    %v2207 = vsel %vm1887, %v1823, %v2143
    %v2208 = vsel %vm1888, %v1824, %v2144
    %v2209 = vsel %vm1889, %v1825, %v2145
    %v2210 = vsel %vm1890, %v1826, %v2146
    %v2211 = vsel %vm1891, %v1827, %v2147
    %v2212 = vsel %vm1892, %v1828, %v2148
    %v2213 = vsel %vm1893, %v1829, %v2149
    %v2214 = vsel %vm1894, %v1830, %v2150
    %v2215 = vsel %vm1895, %v1831, %v2151
    %v2216 = vsel %vm1896, %v1832, %v2152
    %v2217 = vsel %vm1897, %v1833, %v2153
    %v2218 = vsel %vm1898, %v1834, %v2154
    %v2219 = vsel %vm1899, %v1835, %v2155
    %v2220 = vsel %vm1900, %v1836, %v2156
    %v2221 = vsel %vm1901, %v1837, %v2157
    %v2222 = vsel %vm1902, %v1838, %v2158
    %v2223 = vsel %vm1903, %v1839, %v2159
    %v2224 = vsel %vm1904, %v1840, %v2160
    %v2225 = vsel %vm1905, %v1841, %v2161
    %v2226 = vld [vmem:[%s3] sm:$0x3]
    %vm2227 = vcmask 523264
    %v2229 = vsel %vm2227, %v2226, 0
    %2231 = vmatprep.subr.mxu0 0.0
    %2232 = vmatpush1.msra.mxu0 0.0
    %2233 = vmatprep.subr.mxu0 0.0
    %2234 = vmatpush1.msra.mxu0 0.0
    %2235 = vmatprep.subr.mxu0 0.0
    %2236 = vmatpush1.msra.mxu0 0.0
    %2237 = vmatprep.subr.mxu0 0.0
    %2238 = vmatpush1.msra.mxu0 0.0
    %2239 = vmatprep.subr.mxu0 0.0
    %2240 = vmatpush1.msra.mxu0 0.0
    %2241 = vmatprep.subr.mxu0 0.0
    %2242 = vmatpush1.msra.mxu0 0.0
    %2243 = vmatprep.subr.mxu0 0.0
    %2244 = vmatpush1.msra.mxu0 0.0
    %2245 = vmatprep.subr.mxu0 0.0
    %2246 = vmatpush1.msra.mxu0 0.0
    %2247 = vmatprep.subr.mxu0 %v2219
    %2248 = vmatpush1.msra.mxu0 %v2218
    %2249 = vmatprep.subr.mxu0 %v2211
    %2250 = vmatpush1.msra.mxu0 %v2210
    %2251 = vmatprep.subr.mxu0 %v2203
    %2252 = vmatpush1.msra.mxu0 %v2202
    %2253 = vmatprep.subr.mxu0 %v2195
    %2254 = vmatpush1.msra.mxu0 %v2194
    %2255 = vmatprep.subr.mxu0 %v2187
    %2256 = vmatpush1.msra.mxu0 %v2186
    %2257 = vmatprep.subr.mxu0 %v2179
    %2258 = vmatpush1.msra.mxu0 %v2178
    %2259 = vmatprep.subr.mxu0 %v2171
    %2260 = vmatpush1.msra.mxu0 %v2170
    %2261 = vmatprep.subr.mxu0 %v2163
    %2262 = vmatpush1.msra.mxu0 %v2162
    %2263 = vmatprep.subr.mxu0 0.0
    %2264 = vmatpush2.msra.mxu0 0.0
    %2265 = vmatprep.subr.mxu0 0.0
    %2266 = vmatpush2.msra.mxu0 0.0
    %2267 = vmatprep.subr.mxu0 0.0
    %2268 = vmatpush2.msra.mxu0 0.0
    %2269 = vmatprep.subr.mxu0 0.0
    %2270 = vmatpush2.msra.mxu0 0.0
    %2271 = vmatprep.subr.mxu0 0.0
    %2272 = vmatpush2.msra.mxu0 0.0
    %2273 = vmatprep.subr.mxu0 0.0
    %2274 = vmatpush2.msra.mxu0 0.0
    %2275 = vmatprep.subr.mxu0 0.0
    %2276 = vmatpush2.msra.mxu0 0.0
    %2277 = vmatprep.subr.mxu0 0.0
    %2278 = vmatpush2.msra.mxu0 0.0
    %2279 = vmatprep.subr.mxu0 0.0
    %2280 = vmatpush2.msra.mxu0 0.0
    %2281 = vmatprep.subr.mxu0 0.0
    %2282 = vmatpush2.msra.mxu0 0.0
    %2283 = vmatprep.subr.mxu0 0.0
    %2284 = vmatpush2.msra.mxu0 0.0
    %2285 = vmatprep.subr.mxu0 0.0
    %2286 = vmatpush2.msra.mxu0 0.0
    %2287 = vmatprep.subr.mxu0 0.0
    %2288 = vmatpush2.msra.mxu0 0.0
    %2289 = vmatprep.subr.mxu0 0.0
    %2290 = vmatpush2.msra.mxu0 0.0
    %2291 = vmatprep.subr.mxu0 0.0
    %2292 = vmatpush2.msra.mxu0 0.0
    %2293 = vmatprep.subr.mxu0 0.0
    %2294 = vmatpush2.msra.mxu0 0.0
    %2295 = vmatprep.mubr.f32.mxu0 0.0
    %2296 = vmatmul.mubr.f32.gmra.mxu0 %v2229
    %v2297 = vpop.f32.mrf.mxu0
    %v2298 = vadd.f32 0.0, %v2297
    %v2299 = vpop.f32.mrf.mxu0
    %v2300 = vadd.f32 0.0, %v2299
    %2301 = vdwg.mxu0
    %2302 = vmatprep.subr.mxu0 0.0
    %2303 = vmatpush1.msra.mxu0 0.0
    %2304 = vmatprep.subr.mxu0 0.0
    %2305 = vmatpush1.msra.mxu0 0.0
    %2306 = vmatprep.subr.mxu0 0.0
    %2307 = vmatpush1.msra.mxu0 0.0
    %2308 = vmatprep.subr.mxu0 0.0
    %2309 = vmatpush1.msra.mxu0 0.0
    %2310 = vmatprep.subr.mxu0 0.0
    %2311 = vmatpush1.msra.mxu0 0.0
    %2312 = vmatprep.subr.mxu0 0.0
    %2313 = vmatpush1.msra.mxu0 0.0
    %2314 = vmatprep.subr.mxu0 0.0
    %2315 = vmatpush1.msra.mxu0 0.0
    %2316 = vmatprep.subr.mxu0 0.0
    %2317 = vmatpush1.msra.mxu0 0.0
    %2318 = vmatprep.subr.mxu0 %v2221
    %2319 = vmatpush1.msra.mxu0 %v2220
    %2320 = vmatprep.subr.mxu0 %v2213
    %2321 = vmatpush1.msra.mxu0 %v2212
    %2322 = vmatprep.subr.mxu0 %v2205
    %2323 = vmatpush1.msra.mxu0 %v2204
    %2324 = vmatprep.subr.mxu0 %v2197
    %2325 = vmatpush1.msra.mxu0 %v2196
    %2326 = vmatprep.subr.mxu0 %v2189
    %2327 = vmatpush1.msra.mxu0 %v2188
    %2328 = vmatprep.subr.mxu0 %v2181
    %2329 = vmatpush1.msra.mxu0 %v2180
    %2330 = vmatprep.subr.mxu0 %v2173
    %2331 = vmatpush1.msra.mxu0 %v2172
    %2332 = vmatprep.subr.mxu0 %v2165
    %2333 = vmatpush1.msra.mxu0 %v2164
    %2334 = vmatprep.subr.mxu0 0.0
    %2335 = vmatpush2.msra.mxu0 0.0
    %2336 = vmatprep.subr.mxu0 0.0
    %2337 = vmatpush2.msra.mxu0 0.0
    %2338 = vmatprep.subr.mxu0 0.0
    %2339 = vmatpush2.msra.mxu0 0.0
    %2340 = vmatprep.subr.mxu0 0.0
    %2341 = vmatpush2.msra.mxu0 0.0
    %2342 = vmatprep.subr.mxu0 0.0
    %2343 = vmatpush2.msra.mxu0 0.0
    %2344 = vmatprep.subr.mxu0 0.0
    %2345 = vmatpush2.msra.mxu0 0.0
    %2346 = vmatprep.subr.mxu0 0.0
    %2347 = vmatpush2.msra.mxu0 0.0
    %2348 = vmatprep.subr.mxu0 0.0
    %2349 = vmatpush2.msra.mxu0 0.0
    %2350 = vmatprep.subr.mxu0 0.0
    %2351 = vmatpush2.msra.mxu0 0.0
    %2352 = vmatprep.subr.mxu0 0.0
    %2353 = vmatpush2.msra.mxu0 0.0
    %2354 = vmatprep.subr.mxu0 0.0
    %2355 = vmatpush2.msra.mxu0 0.0
    %2356 = vmatprep.subr.mxu0 0.0
    %2357 = vmatpush2.msra.mxu0 0.0
    %2358 = vmatprep.subr.mxu0 0.0
    %2359 = vmatpush2.msra.mxu0 0.0
    %2360 = vmatprep.subr.mxu0 0.0
    %2361 = vmatpush2.msra.mxu0 0.0
    %2362 = vmatprep.subr.mxu0 0.0
    %2363 = vmatpush2.msra.mxu0 0.0
    %2364 = vmatprep.subr.mxu0 0.0
    %2365 = vmatpush2.msra.mxu0 0.0
    %2366 = vmatprep.mubr.f32.mxu0 0.0
    %2367 = vmatmul.mubr.f32.gmra.mxu0 %v2229
    %v2368 = vpop.f32.mrf.mxu0
    %v2369 = vadd.f32 0.0, %v2368
    %v2370 = vpop.f32.mrf.mxu0
    %v2371 = vadd.f32 0.0, %v2370
    %2372 = vdwg.mxu0
    %2373 = vmatprep.subr.mxu0 0.0
    %2374 = vmatpush1.msra.mxu0 0.0
    %2375 = vmatprep.subr.mxu0 0.0
    %2376 = vmatpush1.msra.mxu0 0.0
    %2377 = vmatprep.subr.mxu0 0.0
    %2378 = vmatpush1.msra.mxu0 0.0
    %2379 = vmatprep.subr.mxu0 0.0
    %2380 = vmatpush1.msra.mxu0 0.0
    %2381 = vmatprep.subr.mxu0 0.0
    %2382 = vmatpush1.msra.mxu0 0.0
    %2383 = vmatprep.subr.mxu0 0.0
    %2384 = vmatpush1.msra.mxu0 0.0
    %2385 = vmatprep.subr.mxu0 0.0
    %2386 = vmatpush1.msra.mxu0 0.0
    %2387 = vmatprep.subr.mxu0 0.0
    %2388 = vmatpush1.msra.mxu0 0.0
    %2389 = vmatprep.subr.mxu0 %v2223
    %2390 = vmatpush1.msra.mxu0 %v2222
    %2391 = vmatprep.subr.mxu0 %v2215
    %2392 = vmatpush1.msra.mxu0 %v2214
    %2393 = vmatprep.subr.mxu0 %v2207
    %2394 = vmatpush1.msra.mxu0 %v2206
    %2395 = vmatprep.subr.mxu0 %v2199
    %2396 = vmatpush1.msra.mxu0 %v2198
    %2397 = vmatprep.subr.mxu0 %v2191
    %2398 = vmatpush1.msra.mxu0 %v2190
    %2399 = vmatprep.subr.mxu0 %v2183
    %2400 = vmatpush1.msra.mxu0 %v2182
    %2401 = vmatprep.subr.mxu0 %v2175
    %2402 = vmatpush1.msra.mxu0 %v2174
    %2403 = vmatprep.subr.mxu0 %v2167
    %2404 = vmatpush1.msra.mxu0 %v2166
    %2405 = vmatprep.subr.mxu0 0.0
    %2406 = vmatpush2.msra.mxu0 0.0
    %2407 = vmatprep.subr.mxu0 0.0
    %2408 = vmatpush2.msra.mxu0 0.0
    %2409 = vmatprep.subr.mxu0 0.0
    %2410 = vmatpush2.msra.mxu0 0.0
    %2411 = vmatprep.subr.mxu0 0.0
    %2412 = vmatpush2.msra.mxu0 0.0
    %2413 = vmatprep.subr.mxu0 0.0
    %2414 = vmatpush2.msra.mxu0 0.0
    %2415 = vmatprep.subr.mxu0 0.0
    %2416 = vmatpush2.msra.mxu0 0.0
    %2417 = vmatprep.subr.mxu0 0.0
    %2418 = vmatpush2.msra.mxu0 0.0
    %2419 = vmatprep.subr.mxu0 0.0
    %2420 = vmatpush2.msra.mxu0 0.0
    %2421 = vmatprep.subr.mxu0 0.0
    %2422 = vmatpush2.msra.mxu0 0.0
    %2423 = vmatprep.subr.mxu0 0.0
    %2424 = vmatpush2.msra.mxu0 0.0
    %2425 = vmatprep.subr.mxu0 0.0
    %2426 = vmatpush2.msra.mxu0 0.0
    %2427 = vmatprep.subr.mxu0 0.0
    %2428 = vmatpush2.msra.mxu0 0.0
    %2429 = vmatprep.subr.mxu0 0.0
    %2430 = vmatpush2.msra.mxu0 0.0
    %2431 = vmatprep.subr.mxu0 0.0
    %2432 = vmatpush2.msra.mxu0 0.0
    %2433 = vmatprep.subr.mxu0 0.0
    %2434 = vmatpush2.msra.mxu0 0.0
    %2435 = vmatprep.subr.mxu0 0.0
    %2436 = vmatpush2.msra.mxu0 0.0
    %2437 = vmatprep.mubr.f32.mxu0 0.0
    %2438 = vmatmul.mubr.f32.gmra.mxu0 %v2229
    %v2439 = vpop.f32.mrf.mxu0
    %v2440 = vadd.f32 0.0, %v2439
    %v2441 = vpop.f32.mrf.mxu0
    %v2442 = vadd.f32 0.0, %v2441
    %2443 = vdwg.mxu0
    %2444 = vmatprep.subr.mxu0 0.0
    %2445 = vmatpush1.msra.mxu0 0.0
    %2446 = vmatprep.subr.mxu0 0.0
    %2447 = vmatpush1.msra.mxu0 0.0
    %2448 = vmatprep.subr.mxu0 0.0
    %2449 = vmatpush1.msra.mxu0 0.0
    %2450 = vmatprep.subr.mxu0 0.0
    %2451 = vmatpush1.msra.mxu0 0.0
    %2452 = vmatprep.subr.mxu0 0.0
    %2453 = vmatpush1.msra.mxu0 0.0
    %2454 = vmatprep.subr.mxu0 0.0
    %2455 = vmatpush1.msra.mxu0 0.0
    %2456 = vmatprep.subr.mxu0 0.0
    %2457 = vmatpush1.msra.mxu0 0.0
    %2458 = vmatprep.subr.mxu0 0.0
    %2459 = vmatpush1.msra.mxu0 0.0
    %2460 = vmatprep.subr.mxu0 %v2225
    %2461 = vmatpush1.msra.mxu0 %v2224
    %2462 = vmatprep.subr.mxu0 %v2217
    %2463 = vmatpush1.msra.mxu0 %v2216
    %2464 = vmatprep.subr.mxu0 %v2209
    %2465 = vmatpush1.msra.mxu0 %v2208
    %2466 = vmatprep.subr.mxu0 %v2201
    %2467 = vmatpush1.msra.mxu0 %v2200
    %2468 = vmatprep.subr.mxu0 %v2193
    %2469 = vmatpush1.msra.mxu0 %v2192
    %2470 = vmatprep.subr.mxu0 %v2185
    %2471 = vmatpush1.msra.mxu0 %v2184
    %2472 = vmatprep.subr.mxu0 %v2177
    %2473 = vmatpush1.msra.mxu0 %v2176
    %2474 = vmatprep.subr.mxu0 %v2169
    %2475 = vmatpush1.msra.mxu0 %v2168
    %2476 = vmatprep.subr.mxu0 0.0
    %2477 = vmatpush2.msra.mxu0 0.0
    %2478 = vmatprep.subr.mxu0 0.0
    %2479 = vmatpush2.msra.mxu0 0.0
    %2480 = vmatprep.subr.mxu0 0.0
    %2481 = vmatpush2.msra.mxu0 0.0
    %2482 = vmatprep.subr.mxu0 0.0
    %2483 = vmatpush2.msra.mxu0 0.0
    %2484 = vmatprep.subr.mxu0 0.0
    %2485 = vmatpush2.msra.mxu0 0.0
    %2486 = vmatprep.subr.mxu0 0.0
    %2487 = vmatpush2.msra.mxu0 0.0
    %2488 = vmatprep.subr.mxu0 0.0
    %2489 = vmatpush2.msra.mxu0 0.0
    %2490 = vmatprep.subr.mxu0 0.0
    %2491 = vmatpush2.msra.mxu0 0.0
    %2492 = vmatprep.subr.mxu0 0.0
    %2493 = vmatpush2.msra.mxu0 0.0
    %2494 = vmatprep.subr.mxu0 0.0
    %2495 = vmatpush2.msra.mxu0 0.0
    %2496 = vmatprep.subr.mxu0 0.0
    %2497 = vmatpush2.msra.mxu0 0.0
    %2498 = vmatprep.subr.mxu0 0.0
    %2499 = vmatpush2.msra.mxu0 0.0
    %2500 = vmatprep.subr.mxu0 0.0
    %2501 = vmatpush2.msra.mxu0 0.0
    %2502 = vmatprep.subr.mxu0 0.0
    %2503 = vmatpush2.msra.mxu0 0.0
    %2504 = vmatprep.subr.mxu0 0.0
    %2505 = vmatpush2.msra.mxu0 0.0
    %2506 = vmatprep.subr.mxu0 0.0
    %2507 = vmatpush2.msra.mxu0 0.0
    %2508 = vmatprep.mubr.f32.mxu0 0.0
    %2509 = vmatmul.mubr.f32.gmra.mxu0 %v2229
    %v2510 = vpop.f32.mrf.mxu0
    %v2511 = vadd.f32 0.0, %v2510
    %v2512 = vpop.f32.mrf.mxu0
    %v2513 = vadd.f32 0.0, %v2512
    %2514 = vdwg.mxu0
    %v2515 = vlaneseq
    %v2516 = vshrl.u32 %v2515, 7
    %v2517 = vadd.s32 %v2516, 8
    %v2518 = vadd.s32 %v2516, 16
    %v2519 = vadd.s32 %v2516, 24
    %v2520 = vadd.s32 %v2516, 32
    %v2521 = vadd.s32 %v2516, 40
    %v2522 = vadd.s32 %v2516, 48
    %v2523 = vadd.s32 %v2516, 56
    %v2524 = vadd.s32 %v2516, 64
    %v2525 = vadd.s32 %v2516, 72
    %v2526 = vadd.s32 %v2516, 80
    %v2527 = vadd.s32 %v2516, 88
    %v2528 = vadd.s32 %v2516, 96
    %v2529 = vadd.s32 %v2516, 104
    %v2530 = vadd.s32 %v2516, 112
    %v2531 = vadd.s32 %v2516, 120
    %v2532 = vadd.s32 %v2516, 128
    %v2533 = vadd.s32 %v2516, 136
    %v2534 = vadd.s32 %v2516, 144
    %v2535 = vadd.s32 %v2516, 152
    %v2536 = vadd.s32 %v2516, 160
    %v2537 = vadd.s32 %v2516, 168
    %v2538 = vadd.s32 %v2516, 176
    %v2539 = vadd.s32 %v2516, 184
    %v2540 = vadd.s32 %v2516, 192
    %v2541 = vadd.s32 %v2516, 200
    %v2542 = vadd.s32 %v2516, 208
    %v2543 = vadd.s32 %v2516, 216
    %v2544 = vadd.s32 %v2516, 224
    %v2545 = vadd.s32 %v2516, 232
    %v2546 = vadd.s32 %v2516, 240
    %v2547 = vlaneseq
    %v2548 = vand.u32 %v2547, 127
    %v2549 = vmul.u32 %v2548, 2
    %vm2550 = vcmp.eq.s32.totalorder %v2516, %v2549
    %vm2551 = vcmp.eq.s32.totalorder %v2517, %v2549
    %vm2552 = vcmp.eq.s32.totalorder %v2518, %v2549
    %vm2553 = vcmp.eq.s32.totalorder %v2519, %v2549
    %vm2554 = vcmp.eq.s32.totalorder %v2520, %v2549
    %vm2555 = vcmp.eq.s32.totalorder %v2521, %v2549
    %vm2556 = vcmp.eq.s32.totalorder %v2522, %v2549
    %vm2557 = vcmp.eq.s32.totalorder %v2523, %v2549
    %vm2558 = vcmp.eq.s32.totalorder %v2524, %v2549
    %vm2559 = vcmp.eq.s32.totalorder %v2525, %v2549
    %vm2560 = vcmp.eq.s32.totalorder %v2526, %v2549
    %vm2561 = vcmp.eq.s32.totalorder %v2527, %v2549
    %vm2562 = vcmp.eq.s32.totalorder %v2528, %v2549
    %vm2563 = vcmp.eq.s32.totalorder %v2529, %v2549
    %vm2564 = vcmp.eq.s32.totalorder %v2530, %v2549
    %vm2565 = vcmp.eq.s32.totalorder %v2531, %v2549
    %vm2566 = vcmp.eq.s32.totalorder %v2532, %v2549
    %vm2567 = vcmp.eq.s32.totalorder %v2533, %v2549
    %vm2568 = vcmp.eq.s32.totalorder %v2534, %v2549
    %vm2569 = vcmp.eq.s32.totalorder %v2535, %v2549
    %vm2570 = vcmp.eq.s32.totalorder %v2536, %v2549
    %vm2571 = vcmp.eq.s32.totalorder %v2537, %v2549
    %vm2572 = vcmp.eq.s32.totalorder %v2538, %v2549
    %vm2573 = vcmp.eq.s32.totalorder %v2539, %v2549
    %vm2574 = vcmp.eq.s32.totalorder %v2540, %v2549
    %vm2575 = vcmp.eq.s32.totalorder %v2541, %v2549
    %vm2576 = vcmp.eq.s32.totalorder %v2542, %v2549
    %vm2577 = vcmp.eq.s32.totalorder %v2543, %v2549
    %vm2578 = vcmp.eq.s32.totalorder %v2544, %v2549
    %vm2579 = vcmp.eq.s32.totalorder %v2545, %v2549
    %vm2580 = vcmp.eq.s32.totalorder %v2546, %v2549
    %v2581 = vsel %vm2550, 1, 0
    %v2582 = vsel %vm2551, 1, 0
    %v2583 = vsel %vm2552, 1, 0
    %v2584 = vsel %vm2553, 1, 0
    %v2585 = vsel %vm2554, 1, 0
    %v2586 = vsel %vm2555, 1, 0
    %v2587 = vsel %vm2556, 1, 0
    %v2588 = vsel %vm2557, 1, 0
    %v2589 = vsel %vm2558, 1, 0
    %v2590 = vsel %vm2559, 1, 0
    %v2591 = vsel %vm2560, 1, 0
    %v2592 = vsel %vm2561, 1, 0
    %v2593 = vsel %vm2562, 1, 0
    %v2594 = vsel %vm2563, 1, 0
    %v2595 = vsel %vm2564, 1, 0
    %v2596 = vsel %vm2565, 1, 0
    %v2597 = vsel %vm2566, 1, 0
    %v2598 = vsel %vm2567, 1, 0
    %v2599 = vsel %vm2568, 1, 0
    %v2600 = vsel %vm2569, 1, 0
    %v2601 = vsel %vm2570, 1, 0
    %v2602 = vsel %vm2571, 1, 0
    %v2603 = vsel %vm2572, 1, 0
    %v2604 = vsel %vm2573, 1, 0
    %v2605 = vsel %vm2574, 1, 0
    %v2606 = vsel %vm2575, 1, 0
    %v2607 = vsel %vm2576, 1, 0
    %v2608 = vsel %vm2577, 1, 0
    %v2609 = vsel %vm2578, 1, 0
    %v2610 = vsel %vm2579, 1, 0
    %v2611 = vsel %vm2580, 1, 0
    %v2612 = vcvt.s32.f32 %v2581
    %v2613 = vcvt.s32.f32 %v2582
    %v2614 = vcvt.s32.f32 %v2583
    %v2615 = vcvt.s32.f32 %v2584
    %v2616 = vcvt.s32.f32 %v2585
    %v2617 = vcvt.s32.f32 %v2586
    %v2618 = vcvt.s32.f32 %v2587
    %v2619 = vcvt.s32.f32 %v2588
    %v2620 = vcvt.s32.f32 %v2589
    %v2621 = vcvt.s32.f32 %v2590
    %v2622 = vcvt.s32.f32 %v2591
    %v2623 = vcvt.s32.f32 %v2592
    %v2624 = vcvt.s32.f32 %v2593
    %v2625 = vcvt.s32.f32 %v2594
    %v2626 = vcvt.s32.f32 %v2595
    %v2627 = vcvt.s32.f32 %v2596
    %v2628 = vcvt.s32.f32 %v2597
    %v2629 = vcvt.s32.f32 %v2598
    %v2630 = vcvt.s32.f32 %v2599
    %v2631 = vcvt.s32.f32 %v2600
    %v2632 = vcvt.s32.f32 %v2601
    %v2633 = vcvt.s32.f32 %v2602
    %v2634 = vcvt.s32.f32 %v2603
    %v2635 = vcvt.s32.f32 %v2604
    %v2636 = vcvt.s32.f32 %v2605
    %v2637 = vcvt.s32.f32 %v2606
    %v2638 = vcvt.s32.f32 %v2607
    %v2639 = vcvt.s32.f32 %v2608
    %v2640 = vcvt.s32.f32 %v2609
    %v2641 = vcvt.s32.f32 %v2610
    %v2642 = vcvt.s32.f32 %v2611
    %v2643 = vld [vmem:[%s4] sm:$0x3]
    %2645 = vset.pattern.permute.xlu0 0
    %2646 = vperm.xlu0 %2645, %v2643
    %v2647 = vpop.permute.xlu0 %2646
    %vm2649 = vcmask 965632
    %v2651 = vsel %vm2649, %v2300, 0
    %vm2653 = vcmask 1045504
    %v2655 = vsel %vm2653, %v2642, 0
    %2657 = vmatprep.subr.mxu0 0.0
    %2658 = vmatpush1.msra.mxu0 %v2627
    %2659 = vmatprep.subr.mxu0 0.0
    %2660 = vmatpush1.msra.mxu0 %v2626
    %2661 = vmatprep.subr.mxu0 0.0
    %2662 = vmatpush1.msra.mxu0 %v2625
    %2663 = vmatprep.subr.mxu0 0.0
    %2664 = vmatpush1.msra.mxu0 %v2624
    %2665 = vmatprep.subr.mxu0 0.0
    %2666 = vmatpush1.msra.mxu0 %v2623
    %2667 = vmatprep.subr.mxu0 0.0
    %2668 = vmatpush1.msra.mxu0 %v2622
    %2669 = vmatprep.subr.mxu0 0.0
    %2670 = vmatpush1.msra.mxu0 %v2621
    %2671 = vmatprep.subr.mxu0 0.0
    %2672 = vmatpush1.msra.mxu0 %v2620
    %2673 = vmatprep.subr.mxu0 0.0
    %2674 = vmatpush1.msra.mxu0 %v2619
    %2675 = vmatprep.subr.mxu0 0.0
    %2676 = vmatpush1.msra.mxu0 %v2618
    %2677 = vmatprep.subr.mxu0 0.0
    %2678 = vmatpush1.msra.mxu0 %v2617
    %2679 = vmatprep.subr.mxu0 0.0
    %2680 = vmatpush1.msra.mxu0 %v2616
    %2681 = vmatprep.subr.mxu0 0.0
    %2682 = vmatpush1.msra.mxu0 %v2615
    %2683 = vmatprep.subr.mxu0 0.0
    %2684 = vmatpush1.msra.mxu0 %v2614
    %2685 = vmatprep.subr.mxu0 0.0
    %2686 = vmatpush1.msra.mxu0 %v2613
    %2687 = vmatprep.subr.mxu0 0.0
    %2688 = vmatpush1.msra.mxu0 %v2612
    %2689 = vmatprep.subr.mxu0 0.0
    %2690 = vmatpush2.msra.mxu0 0.0
    %2691 = vmatprep.subr.mxu0 0.0
    %2692 = vmatpush2.msra.mxu0 %v2655
    %2693 = vmatprep.subr.mxu0 0.0
    %2694 = vmatpush2.msra.mxu0 %v2641
    %2695 = vmatprep.subr.mxu0 0.0
    %2696 = vmatpush2.msra.mxu0 %v2640
    %2697 = vmatprep.subr.mxu0 0.0
    %2698 = vmatpush2.msra.mxu0 %v2639
    %2699 = vmatprep.subr.mxu0 0.0
    %2700 = vmatpush2.msra.mxu0 %v2638
    %2701 = vmatprep.subr.mxu0 0.0
    %2702 = vmatpush2.msra.mxu0 %v2637
    %2703 = vmatprep.subr.mxu0 0.0
    %2704 = vmatpush2.msra.mxu0 %v2636
    %2705 = vmatprep.subr.mxu0 0.0
    %2706 = vmatpush2.msra.mxu0 %v2635
    %2707 = vmatprep.subr.mxu0 0.0
    %2708 = vmatpush2.msra.mxu0 %v2634
    %2709 = vmatprep.subr.mxu0 0.0
    %2710 = vmatpush2.msra.mxu0 %v2633
    %2711 = vmatprep.subr.mxu0 0.0
    %2712 = vmatpush2.msra.mxu0 %v2632
    %2713 = vmatprep.subr.mxu0 0.0
    %2714 = vmatpush2.msra.mxu0 %v2631
    %2715 = vmatprep.subr.mxu0 0.0
    %2716 = vmatpush2.msra.mxu0 %v2630
    %2717 = vmatprep.subr.mxu0 0.0
    %2718 = vmatpush2.msra.mxu0 %v2629
    %2719 = vmatprep.subr.mxu0 0.0
    %2720 = vmatpush2.msra.mxu0 %v2628
    %2721 = vmatprep.mubr.f32.mxu0 %v2651
    %2722 = vmatmul.mubr.f32.gmra.mxu0 %v2298
    %v2723 = vpop.f32.mrf.mxu0
    %v2724 = vadd.f32 %v2647, %v2723
    %v2725 = vpop.f32.mrf.mxu0
    %2726 = vdwg.mxu0
    %vm2727 = vcmp.gt.f32.partialorder %v2724, 0.0
    %v2728 = vmin.f32 %v2724, 0.0
    %v2729 = vmul.f32 %v2728, 1.442695
    %v2730 = vpow.pop %v2729
    %v2731 = vsub.f32 %v2730, 1.0
    %v2732 = vsel %vm2727, %v2724, %v2731
    %vm2733 = vcmp.eq.s32.totalorder %v2516, 0
    %v2734 = vlaneseq
    %v2735 = vshrl.u32 %v2734, 7
    %v2736 = vsub.s32 0, %v2735
    %v2737 = vrot.slane %v2732, %v2736
    %v2738 = vsel %vm2733, %v2737, 0.0
    %v2739 = vlaneseq
    %v2740 = vshrl.u32 %v2739, 7
    %v2741 = vsub.s32 1, %v2740
    %v2742 = vrot.slane %v2732, %v2741
    %v2743 = vsel %vm2733, %v2742, 0.0
    %v2745 = vsel %vm2649, %v2371, 0
    %2747 = vmatprep.subr.mxu0 0.0
    %2748 = vmatpush1.msra.mxu0 %v2627
    %2749 = vmatprep.subr.mxu0 0.0
    %2750 = vmatpush1.msra.mxu0 %v2626
    %2751 = vmatprep.subr.mxu0 0.0
    %2752 = vmatpush1.msra.mxu0 %v2625
    %2753 = vmatprep.subr.mxu0 0.0
    %2754 = vmatpush1.msra.mxu0 %v2624
    %2755 = vmatprep.subr.mxu0 0.0
    %2756 = vmatpush1.msra.mxu0 %v2623
    %2757 = vmatprep.subr.mxu0 0.0
    %2758 = vmatpush1.msra.mxu0 %v2622
    %2759 = vmatprep.subr.mxu0 0.0
    %2760 = vmatpush1.msra.mxu0 %v2621
    %2761 = vmatprep.subr.mxu0 0.0
    %2762 = vmatpush1.msra.mxu0 %v2620
    %2763 = vmatprep.subr.mxu0 0.0
    %2764 = vmatpush1.msra.mxu0 %v2619
    %2765 = vmatprep.subr.mxu0 0.0
    %2766 = vmatpush1.msra.mxu0 %v2618
    %2767 = vmatprep.subr.mxu0 0.0
    %2768 = vmatpush1.msra.mxu0 %v2617
    %2769 = vmatprep.subr.mxu0 0.0
    %2770 = vmatpush1.msra.mxu0 %v2616
    %2771 = vmatprep.subr.mxu0 0.0
    %2772 = vmatpush1.msra.mxu0 %v2615
    %2773 = vmatprep.subr.mxu0 0.0
    %2774 = vmatpush1.msra.mxu0 %v2614
    %2775 = vmatprep.subr.mxu0 0.0
    %2776 = vmatpush1.msra.mxu0 %v2613
    %2777 = vmatprep.subr.mxu0 0.0
    %2778 = vmatpush1.msra.mxu0 %v2612
    %2779 = vmatprep.subr.mxu0 0.0
    %2780 = vmatpush2.msra.mxu0 0.0
    %2781 = vmatprep.subr.mxu0 0.0
    %2782 = vmatpush2.msra.mxu0 %v2655
    %2783 = vmatprep.subr.mxu0 0.0
    %2784 = vmatpush2.msra.mxu0 %v2641
    %2785 = vmatprep.subr.mxu0 0.0
    %2786 = vmatpush2.msra.mxu0 %v2640
    %2787 = vmatprep.subr.mxu0 0.0
    %2788 = vmatpush2.msra.mxu0 %v2639
    %2789 = vmatprep.subr.mxu0 0.0
    %2790 = vmatpush2.msra.mxu0 %v2638
    %2791 = vmatprep.subr.mxu0 0.0
    %2792 = vmatpush2.msra.mxu0 %v2637
    %2793 = vmatprep.subr.mxu0 0.0
    %2794 = vmatpush2.msra.mxu0 %v2636
    %2795 = vmatprep.subr.mxu0 0.0
    %2796 = vmatpush2.msra.mxu0 %v2635
    %2797 = vmatprep.subr.mxu0 0.0
    %2798 = vmatpush2.msra.mxu0 %v2634
    %2799 = vmatprep.subr.mxu0 0.0
    %2800 = vmatpush2.msra.mxu0 %v2633
    %2801 = vmatprep.subr.mxu0 0.0
    %2802 = vmatpush2.msra.mxu0 %v2632
    %2803 = vmatprep.subr.mxu0 0.0
    %2804 = vmatpush2.msra.mxu0 %v2631
    %2805 = vmatprep.subr.mxu0 0.0
    %2806 = vmatpush2.msra.mxu0 %v2630
    %2807 = vmatprep.subr.mxu0 0.0
    %2808 = vmatpush2.msra.mxu0 %v2629
    %2809 = vmatprep.subr.mxu0 0.0
    %2810 = vmatpush2.msra.mxu0 %v2628
    %2811 = vmatprep.mubr.f32.mxu0 %v2745
    %2812 = vmatmul.mubr.f32.gmra.mxu0 %v2369
    %v2813 = vpop.f32.mrf.mxu0
    %v2814 = vadd.f32 %v2647, %v2813
    %v2815 = vpop.f32.mrf.mxu0
    %2816 = vdwg.mxu0
    %vm2817 = vcmp.gt.f32.partialorder %v2814, 0.0
    %v2818 = vmin.f32 %v2814, 0.0
    %v2819 = vmul.f32 %v2818, 1.442695
    %v2820 = vpow.pop %v2819
    %v2821 = vsub.f32 %v2820, 1.0
    %v2822 = vsel %vm2817, %v2814, %v2821
    %vm2823 = vcmp.eq.s32.totalorder %v2516, 1
    %v2824 = vlaneseq
    %v2825 = vshrl.u32 %v2824, 7
    %v2826 = vsub.s32 0, %v2825
    %v2827 = vrot.slane %v2822, %v2826
    %v2828 = vsel %vm2823, %v2827, %v2738
    %v2829 = vlaneseq
    %v2830 = vshrl.u32 %v2829, 7
    %v2831 = vsub.s32 1, %v2830
    %v2832 = vrot.slane %v2822, %v2831
    %v2833 = vsel %vm2823, %v2832, %v2743
    %v2835 = vsel %vm2649, %v2442, 0
    %2837 = vmatprep.subr.mxu0 0.0
    %2838 = vmatpush1.msra.mxu0 %v2627
    %2839 = vmatprep.subr.mxu0 0.0
    %2840 = vmatpush1.msra.mxu0 %v2626
    %2841 = vmatprep.subr.mxu0 0.0
    %2842 = vmatpush1.msra.mxu0 %v2625
    %2843 = vmatprep.subr.mxu0 0.0
    %2844 = vmatpush1.msra.mxu0 %v2624
    %2845 = vmatprep.subr.mxu0 0.0
    %2846 = vmatpush1.msra.mxu0 %v2623
    %2847 = vmatprep.subr.mxu0 0.0
    %2848 = vmatpush1.msra.mxu0 %v2622
    %2849 = vmatprep.subr.mxu0 0.0
    %2850 = vmatpush1.msra.mxu0 %v2621
    %2851 = vmatprep.subr.mxu0 0.0
    %2852 = vmatpush1.msra.mxu0 %v2620
    %2853 = vmatprep.subr.mxu0 0.0
    %2854 = vmatpush1.msra.mxu0 %v2619
    %2855 = vmatprep.subr.mxu0 0.0
    %2856 = vmatpush1.msra.mxu0 %v2618
    %2857 = vmatprep.subr.mxu0 0.0
    %2858 = vmatpush1.msra.mxu0 %v2617
    %2859 = vmatprep.subr.mxu0 0.0
    %2860 = vmatpush1.msra.mxu0 %v2616
    %2861 = vmatprep.subr.mxu0 0.0
    %2862 = vmatpush1.msra.mxu0 %v2615
    %2863 = vmatprep.subr.mxu0 0.0
    %2864 = vmatpush1.msra.mxu0 %v2614
    %2865 = vmatprep.subr.mxu0 0.0
    %2866 = vmatpush1.msra.mxu0 %v2613
    %2867 = vmatprep.subr.mxu0 0.0
    %2868 = vmatpush1.msra.mxu0 %v2612
    %2869 = vmatprep.subr.mxu0 0.0
    %2870 = vmatpush2.msra.mxu0 0.0
    %2871 = vmatprep.subr.mxu0 0.0
    %2872 = vmatpush2.msra.mxu0 %v2655
    %2873 = vmatprep.subr.mxu0 0.0
    %2874 = vmatpush2.msra.mxu0 %v2641
    %2875 = vmatprep.subr.mxu0 0.0
    %2876 = vmatpush2.msra.mxu0 %v2640
    %2877 = vmatprep.subr.mxu0 0.0
    %2878 = vmatpush2.msra.mxu0 %v2639
    %2879 = vmatprep.subr.mxu0 0.0
    %2880 = vmatpush2.msra.mxu0 %v2638
    %2881 = vmatprep.subr.mxu0 0.0
    %2882 = vmatpush2.msra.mxu0 %v2637
    %2883 = vmatprep.subr.mxu0 0.0
    %2884 = vmatpush2.msra.mxu0 %v2636
    %2885 = vmatprep.subr.mxu0 0.0
    %2886 = vmatpush2.msra.mxu0 %v2635
    %2887 = vmatprep.subr.mxu0 0.0
    %2888 = vmatpush2.msra.mxu0 %v2634
    %2889 = vmatprep.subr.mxu0 0.0
    %2890 = vmatpush2.msra.mxu0 %v2633
    %2891 = vmatprep.subr.mxu0 0.0
    %2892 = vmatpush2.msra.mxu0 %v2632
    %2893 = vmatprep.subr.mxu0 0.0
    %2894 = vmatpush2.msra.mxu0 %v2631
    %2895 = vmatprep.subr.mxu0 0.0
    %2896 = vmatpush2.msra.mxu0 %v2630
    %2897 = vmatprep.subr.mxu0 0.0
    %2898 = vmatpush2.msra.mxu0 %v2629
    %2899 = vmatprep.subr.mxu0 0.0
    %2900 = vmatpush2.msra.mxu0 %v2628
    %2901 = vmatprep.mubr.f32.mxu0 %v2835
    %2902 = vmatmul.mubr.f32.gmra.mxu0 %v2440
    %v2903 = vpop.f32.mrf.mxu0
    %v2904 = vadd.f32 %v2647, %v2903
    %v2905 = vpop.f32.mrf.mxu0
    %2906 = vdwg.mxu0
    %vm2907 = vcmp.gt.f32.partialorder %v2904, 0.0
    %v2908 = vmin.f32 %v2904, 0.0
    %v2909 = vmul.f32 %v2908, 1.442695
    %v2910 = vpow.pop %v2909
    %v2911 = vsub.f32 %v2910, 1.0
    %v2912 = vsel %vm2907, %v2904, %v2911
    %vm2913 = vcmp.eq.s32.totalorder %v2516, 2
    %v2914 = vlaneseq
    %v2915 = vshrl.u32 %v2914, 7
    %v2916 = vsub.s32 0, %v2915
    %v2917 = vrot.slane %v2912, %v2916
    %v2918 = vsel %vm2913, %v2917, %v2828
    %v2919 = vlaneseq
    %v2920 = vshrl.u32 %v2919, 7
    %v2921 = vsub.s32 1, %v2920
    %v2922 = vrot.slane %v2912, %v2921
    %v2923 = vsel %vm2913, %v2922, %v2833
    %v2925 = vsel %vm2649, %v2513, 0
    %2927 = vmatprep.subr.mxu0 0.0
    %2928 = vmatpush1.msra.mxu0 %v2627
    %2929 = vmatprep.subr.mxu0 0.0
    %2930 = vmatpush1.msra.mxu0 %v2626
    %2931 = vmatprep.subr.mxu0 0.0
    %2932 = vmatpush1.msra.mxu0 %v2625
    %2933 = vmatprep.subr.mxu0 0.0
    %2934 = vmatpush1.msra.mxu0 %v2624
    %2935 = vmatprep.subr.mxu0 0.0
    %2936 = vmatpush1.msra.mxu0 %v2623
    %2937 = vmatprep.subr.mxu0 0.0
    %2938 = vmatpush1.msra.mxu0 %v2622
    %2939 = vmatprep.subr.mxu0 0.0
    %2940 = vmatpush1.msra.mxu0 %v2621
    %2941 = vmatprep.subr.mxu0 0.0
    %2942 = vmatpush1.msra.mxu0 %v2620
    %2943 = vmatprep.subr.mxu0 0.0
    %2944 = vmatpush1.msra.mxu0 %v2619
    %2945 = vmatprep.subr.mxu0 0.0
    %2946 = vmatpush1.msra.mxu0 %v2618
    %2947 = vmatprep.subr.mxu0 0.0
    %2948 = vmatpush1.msra.mxu0 %v2617
    %2949 = vmatprep.subr.mxu0 0.0
    %2950 = vmatpush1.msra.mxu0 %v2616
    %2951 = vmatprep.subr.mxu0 0.0
    %2952 = vmatpush1.msra.mxu0 %v2615
    %2953 = vmatprep.subr.mxu0 0.0
    %2954 = vmatpush1.msra.mxu0 %v2614
    %2955 = vmatprep.subr.mxu0 0.0
    %2956 = vmatpush1.msra.mxu0 %v2613
    %2957 = vmatprep.subr.mxu0 0.0
    %2958 = vmatpush1.msra.mxu0 %v2612
    %2959 = vmatprep.subr.mxu0 0.0
    %2960 = vmatpush2.msra.mxu0 0.0
    %2961 = vmatprep.subr.mxu0 0.0
    %2962 = vmatpush2.msra.mxu0 %v2655
    %2963 = vmatprep.subr.mxu0 0.0
    %2964 = vmatpush2.msra.mxu0 %v2641
    %2965 = vmatprep.subr.mxu0 0.0
    %2966 = vmatpush2.msra.mxu0 %v2640
    %2967 = vmatprep.subr.mxu0 0.0
    %2968 = vmatpush2.msra.mxu0 %v2639
    %2969 = vmatprep.subr.mxu0 0.0
    %2970 = vmatpush2.msra.mxu0 %v2638
    %2971 = vmatprep.subr.mxu0 0.0
    %2972 = vmatpush2.msra.mxu0 %v2637
    %2973 = vmatprep.subr.mxu0 0.0
    %2974 = vmatpush2.msra.mxu0 %v2636
    %2975 = vmatprep.subr.mxu0 0.0
    %2976 = vmatpush2.msra.mxu0 %v2635
    %2977 = vmatprep.subr.mxu0 0.0
    %2978 = vmatpush2.msra.mxu0 %v2634
    %2979 = vmatprep.subr.mxu0 0.0
    %2980 = vmatpush2.msra.mxu0 %v2633
    %2981 = vmatprep.subr.mxu0 0.0
    %2982 = vmatpush2.msra.mxu0 %v2632
    %2983 = vmatprep.subr.mxu0 0.0
    %2984 = vmatpush2.msra.mxu0 %v2631
    %2985 = vmatprep.subr.mxu0 0.0
    %2986 = vmatpush2.msra.mxu0 %v2630
    %2987 = vmatprep.subr.mxu0 0.0
    %2988 = vmatpush2.msra.mxu0 %v2629
    %2989 = vmatprep.subr.mxu0 0.0
    %2990 = vmatpush2.msra.mxu0 %v2628
    %2991 = vmatprep.mubr.f32.mxu0 %v2925
    %2992 = vmatmul.mubr.f32.gmra.mxu0 %v2511
    %v2993 = vpop.f32.mrf.mxu0
    %v2994 = vadd.f32 %v2647, %v2993
    %v2995 = vpop.f32.mrf.mxu0
    %2996 = vdwg.mxu0
    %vm2997 = vcmp.gt.f32.partialorder %v2994, 0.0
    %v2998 = vmin.f32 %v2994, 0.0
    %v2999 = vmul.f32 %v2998, 1.442695
    %v3000 = vpow.pop %v2999
    %v3001 = vsub.f32 %v3000, 1.0
    %v3002 = vsel %vm2997, %v2994, %v3001
    %vm3003 = vcmp.eq.s32.totalorder %v2516, 3
    %v3004 = vlaneseq
    %v3005 = vshrl.u32 %v3004, 7
    %v3006 = vsub.s32 0, %v3005
    %v3007 = vrot.slane %v3002, %v3006
    %v3008 = vsel %vm3003, %v3007, %v2918
    %v3009 = vlaneseq
    %v3010 = vshrl.u32 %v3009, 7
    %v3011 = vsub.s32 1, %v3010
    %v3012 = vrot.slane %v3002, %v3011
    %v3013 = vsel %vm3003, %v3012, %v2923
    %v3014 = vld [vmem:[%s5] sm:$0xff]
    %v3015 = vld [vmem:[%s5 + $0x8] sm:$0xff]
    %v3016 = vld [vmem:[%s5 + $0x10] sm:$0xff]
    %v3017 = vld [vmem:[%s5 + $0x18] sm:$0xff]
    %v3018 = vld [vmem:[%s5 + $0x20] sm:$0xff]
    %v3019 = vld [vmem:[%s5 + $0x28] sm:$0xff]
    %v3020 = vld [vmem:[%s5 + $0x30] sm:$0xff]
    %v3021 = vld [vmem:[%s5 + $0x38] sm:$0xff]
    %v3022 = vld [vmem:[%s5 + $0x40] sm:$0xff]
    %v3023 = vld [vmem:[%s5 + $0x48] sm:$0xff]
    %v3024 = vld [vmem:[%s5 + $0x50] sm:$0xff]
    %v3025 = vld [vmem:[%s5 + $0x58] sm:$0xff]
    %v3026 = vld [vmem:[%s5 + $0x60] sm:$0xff]
    %v3027 = vld [vmem:[%s5 + $0x68] sm:$0xff]
    %v3028 = vld [vmem:[%s5 + $0x70] sm:$0xff]
    %v3029 = vld [vmem:[%s5 + $0x78] sm:$0x33]
    %v3030 = vunpack.c.l.bf16 %v3014
    %v3031 = vunpack.c.h.bf16 %v3014
    %v3032 = vunpack.c.l.bf16 %v3015
    %v3033 = vunpack.c.h.bf16 %v3015
    %v3034 = vunpack.c.l.bf16 %v3016
    %v3035 = vunpack.c.h.bf16 %v3016
    %v3036 = vunpack.c.l.bf16 %v3017
    %v3037 = vunpack.c.h.bf16 %v3017
    %v3038 = vunpack.c.l.bf16 %v3018
    %v3039 = vunpack.c.h.bf16 %v3018
    %v3040 = vunpack.c.l.bf16 %v3019
    %v3041 = vunpack.c.h.bf16 %v3019
    %v3042 = vunpack.c.l.bf16 %v3020
    %v3043 = vunpack.c.h.bf16 %v3020
    %v3044 = vunpack.c.l.bf16 %v3021
    %v3045 = vunpack.c.h.bf16 %v3021
    %v3046 = vunpack.c.l.bf16 %v3022
    %v3047 = vunpack.c.h.bf16 %v3022
    %v3048 = vunpack.c.l.bf16 %v3023
    %v3049 = vunpack.c.h.bf16 %v3023
    %v3050 = vunpack.c.l.bf16 %v3024
    %v3051 = vunpack.c.h.bf16 %v3024
    %v3052 = vunpack.c.l.bf16 %v3025
    %v3053 = vunpack.c.h.bf16 %v3025
    %v3054 = vunpack.c.l.bf16 %v3026
    %v3055 = vunpack.c.h.bf16 %v3026
    %v3056 = vunpack.c.l.bf16 %v3027
    %v3057 = vunpack.c.h.bf16 %v3027
    %v3058 = vunpack.c.l.bf16 %v3028
    %v3059 = vunpack.c.h.bf16 %v3028
    %v3060 = vunpack.c.l.bf16 %v3029
    %v3061 = vunpack.c.h.bf16 %v3029
    %v3062 = vld [vmem:[%s6] sm:$0xff]
    %v3063 = vld [vmem:[%s6 + $0x8] sm:$0xff]
    %v3064 = vld [vmem:[%s6 + $0x10] sm:$0xff]
    %v3065 = vld [vmem:[%s6 + $0x18] sm:$0xff]
    %v3066 = vld [vmem:[%s6 + $0x20] sm:$0xff]
    %v3067 = vld [vmem:[%s6 + $0x28] sm:$0xff]
    %v3068 = vld [vmem:[%s6 + $0x30] sm:$0xff]
    %v3069 = vld [vmem:[%s6 + $0x38] sm:$0xff]
    %v3070 = vld [vmem:[%s6 + $0x40] sm:$0xff]
    %v3071 = vld [vmem:[%s6 + $0x48] sm:$0xff]
    %v3072 = vld [vmem:[%s6 + $0x50] sm:$0xff]
    %v3073 = vld [vmem:[%s6 + $0x58] sm:$0xff]
    %v3074 = vld [vmem:[%s6 + $0x60] sm:$0xff]
    %v3075 = vld [vmem:[%s6 + $0x68] sm:$0xff]
    %v3076 = vld [vmem:[%s6 + $0x70] sm:$0xff]
    %v3077 = vld [vmem:[%s6 + $0x78] sm:$0x33]
    %v3078 = vunpack.c.l.bf16 %v3062
    %v3079 = vunpack.c.h.bf16 %v3062
    %v3080 = vunpack.c.l.bf16 %v3063
    %v3081 = vunpack.c.h.bf16 %v3063
    %v3082 = vunpack.c.l.bf16 %v3064
    %v3083 = vunpack.c.h.bf16 %v3064
    %v3084 = vunpack.c.l.bf16 %v3065
    %v3085 = vunpack.c.h.bf16 %v3065
    %v3086 = vunpack.c.l.bf16 %v3066
    %v3087 = vunpack.c.h.bf16 %v3066
    %v3088 = vunpack.c.l.bf16 %v3067
    %v3089 = vunpack.c.h.bf16 %v3067
    %v3090 = vunpack.c.l.bf16 %v3068
    %v3091 = vunpack.c.h.bf16 %v3068
    %v3092 = vunpack.c.l.bf16 %v3069
    %v3093 = vunpack.c.h.bf16 %v3069
    %v3094 = vunpack.c.l.bf16 %v3070
    %v3095 = vunpack.c.h.bf16 %v3070
    %v3096 = vunpack.c.l.bf16 %v3071
    %v3097 = vunpack.c.h.bf16 %v3071
    %v3098 = vunpack.c.l.bf16 %v3072
    %v3099 = vunpack.c.h.bf16 %v3072
    %v3100 = vunpack.c.l.bf16 %v3073
    %v3101 = vunpack.c.h.bf16 %v3073
    %v3102 = vunpack.c.l.bf16 %v3074
    %v3103 = vunpack.c.h.bf16 %v3074
    %v3104 = vunpack.c.l.bf16 %v3075
    %v3105 = vunpack.c.h.bf16 %v3075
    %v3106 = vunpack.c.l.bf16 %v3076
    %v3107 = vunpack.c.h.bf16 %v3076
    %v3108 = vunpack.c.l.bf16 %v3077
    %v3109 = vunpack.c.h.bf16 %v3077
    %vm3110 = vcmask 1006592
    %v3112 = vsel %vm3110, %v3013, 0
    %vm3114 = vcmask 1042432
    %v3116 = vsel %vm3114, %v3108, 0
    %v3119 = vsel %vm3114, %v3109, 0
    %3121 = vmatprep.subr.mxu0 %v3119
    %3122 = vmatpush1.msra.mxu0 %v3116
    %3123 = vmatprep.subr.mxu0 %v3107
    %3124 = vmatpush1.msra.mxu0 %v3106
    %3125 = vmatprep.subr.mxu0 %v3105
    %3126 = vmatpush1.msra.mxu0 %v3104
    %3127 = vmatprep.subr.mxu0 %v3103
    %3128 = vmatpush1.msra.mxu0 %v3102
    %3129 = vmatprep.subr.mxu0 %v3101
    %3130 = vmatpush1.msra.mxu0 %v3100
    %3131 = vmatprep.subr.mxu0 %v3099
    %3132 = vmatpush1.msra.mxu0 %v3098
    %3133 = vmatprep.subr.mxu0 %v3097
    %3134 = vmatpush1.msra.mxu0 %v3096
    %3135 = vmatprep.subr.mxu0 %v3095
    %3136 = vmatpush1.msra.mxu0 %v3094
    %3137 = vmatprep.subr.mxu0 %v3093
    %3138 = vmatpush1.msra.mxu0 %v3092
    %3139 = vmatprep.subr.mxu0 %v3091
    %3140 = vmatpush1.msra.mxu0 %v3090
    %3141 = vmatprep.subr.mxu0 %v3089
    %3142 = vmatpush1.msra.mxu0 %v3088
    %3143 = vmatprep.subr.mxu0 %v3087
    %3144 = vmatpush1.msra.mxu0 %v3086
    %3145 = vmatprep.subr.mxu0 %v3085
    %3146 = vmatpush1.msra.mxu0 %v3084
    %3147 = vmatprep.subr.mxu0 %v3083
    %3148 = vmatpush1.msra.mxu0 %v3082
    %3149 = vmatprep.subr.mxu0 %v3081
    %3150 = vmatpush1.msra.mxu0 %v3080
    %3151 = vmatprep.subr.mxu0 %v3079
    %3152 = vmatpush1.msra.mxu0 %v3078
    %3153 = vmatprep.subr.mxu0 0.0
    %3154 = vmatpush2.msra.mxu0 0.0
    %3155 = vmatprep.subr.mxu0 0.0
    %3156 = vmatpush2.msra.mxu0 0.0
    %3157 = vmatprep.subr.mxu0 0.0
    %3158 = vmatpush2.msra.mxu0 0.0
    %3159 = vmatprep.subr.mxu0 0.0
    %3160 = vmatpush2.msra.mxu0 0.0
    %3161 = vmatprep.subr.mxu0 0.0
    %3162 = vmatpush2.msra.mxu0 0.0
    %3163 = vmatprep.subr.mxu0 0.0
    %3164 = vmatpush2.msra.mxu0 0.0
    %3165 = vmatprep.subr.mxu0 0.0
    %3166 = vmatpush2.msra.mxu0 0.0
    %3167 = vmatprep.subr.mxu0 0.0
    %3168 = vmatpush2.msra.mxu0 0.0
    %3169 = vmatprep.subr.mxu0 0.0
    %3170 = vmatpush2.msra.mxu0 0.0
    %3171 = vmatprep.subr.mxu0 0.0
    %3172 = vmatpush2.msra.mxu0 0.0
    %3173 = vmatprep.subr.mxu0 0.0
    %3174 = vmatpush2.msra.mxu0 0.0
    %3175 = vmatprep.subr.mxu0 0.0
    %3176 = vmatpush2.msra.mxu0 0.0
    %3177 = vmatprep.subr.mxu0 0.0
    %3178 = vmatpush2.msra.mxu0 0.0
    %3179 = vmatprep.subr.mxu0 0.0
    %3180 = vmatpush2.msra.mxu0 0.0
    %3181 = vmatprep.subr.mxu0 0.0
    %3182 = vmatpush2.msra.mxu0 0.0
    %3183 = vmatprep.subr.mxu0 0.0
    %3184 = vmatpush2.msra.mxu0 0.0
    %3185 = vmatprep.mubr.f32.mxu0 0.0
    %3186 = vmatmul.mubr.f32.gmra.mxu0 %v3112
    %v3187 = vpop.f32.mrf.mxu0
    %v3188 = vadd.f32 0.0, %v3187
    %v3189 = vpop.f32.mrf.mxu0
    %v3190 = vadd.f32 0.0, %v3189
    %3191 = vdwg.mxu0
    %v3193 = vsel %vm3110, %v3008, 0
    %v3196 = vsel %vm3114, %v3060, 0
    %v3199 = vsel %vm3114, %v3061, 0
    %3201 = vmatprep.subr.mxu0 %v3199
    %3202 = vmatpush1.msra.mxu0 %v3196
    %3203 = vmatprep.subr.mxu0 %v3059
    %3204 = vmatpush1.msra.mxu0 %v3058
    %3205 = vmatprep.subr.mxu0 %v3057
    %3206 = vmatpush1.msra.mxu0 %v3056
    %3207 = vmatprep.subr.mxu0 %v3055
    %3208 = vmatpush1.msra.mxu0 %v3054
    %3209 = vmatprep.subr.mxu0 %v3053
    %3210 = vmatpush1.msra.mxu0 %v3052
    %3211 = vmatprep.subr.mxu0 %v3051
    %3212 = vmatpush1.msra.mxu0 %v3050
    %3213 = vmatprep.subr.mxu0 %v3049
    %3214 = vmatpush1.msra.mxu0 %v3048
    %3215 = vmatprep.subr.mxu0 %v3047
    %3216 = vmatpush1.msra.mxu0 %v3046
    %3217 = vmatprep.subr.mxu0 %v3045
    %3218 = vmatpush1.msra.mxu0 %v3044
    %3219 = vmatprep.subr.mxu0 %v3043
    %3220 = vmatpush1.msra.mxu0 %v3042
    %3221 = vmatprep.subr.mxu0 %v3041
    %3222 = vmatpush1.msra.mxu0 %v3040
    %3223 = vmatprep.subr.mxu0 %v3039
    %3224 = vmatpush1.msra.mxu0 %v3038
    %3225 = vmatprep.subr.mxu0 %v3037
    %3226 = vmatpush1.msra.mxu0 %v3036
    %3227 = vmatprep.subr.mxu0 %v3035
    %3228 = vmatpush1.msra.mxu0 %v3034
    %3229 = vmatprep.subr.mxu0 %v3033
    %3230 = vmatpush1.msra.mxu0 %v3032
    %3231 = vmatprep.subr.mxu0 %v3031
    %3232 = vmatpush1.msra.mxu0 %v3030
    %3233 = vmatprep.subr.mxu0 0.0
    %3234 = vmatpush2.msra.mxu0 0.0
    %3235 = vmatprep.subr.mxu0 0.0
    %3236 = vmatpush2.msra.mxu0 0.0
    %3237 = vmatprep.subr.mxu0 0.0
    %3238 = vmatpush2.msra.mxu0 0.0
    %3239 = vmatprep.subr.mxu0 0.0
    %3240 = vmatpush2.msra.mxu0 0.0
    %3241 = vmatprep.subr.mxu0 0.0
    %3242 = vmatpush2.msra.mxu0 0.0
    %3243 = vmatprep.subr.mxu0 0.0
    %3244 = vmatpush2.msra.mxu0 0.0
    %3245 = vmatprep.subr.mxu0 0.0
    %3246 = vmatpush2.msra.mxu0 0.0
    %3247 = vmatprep.subr.mxu0 0.0
    %3248 = vmatpush2.msra.mxu0 0.0
    %3249 = vmatprep.subr.mxu0 0.0
    %3250 = vmatpush2.msra.mxu0 0.0
    %3251 = vmatprep.subr.mxu0 0.0
    %3252 = vmatpush2.msra.mxu0 0.0
    %3253 = vmatprep.subr.mxu0 0.0
    %3254 = vmatpush2.msra.mxu0 0.0
    %3255 = vmatprep.subr.mxu0 0.0
    %3256 = vmatpush2.msra.mxu0 0.0
    %3257 = vmatprep.subr.mxu0 0.0
    %3258 = vmatpush2.msra.mxu0 0.0
    %3259 = vmatprep.subr.mxu0 0.0
    %3260 = vmatpush2.msra.mxu0 0.0
    %3261 = vmatprep.subr.mxu0 0.0
    %3262 = vmatpush2.msra.mxu0 0.0
    %3263 = vmatprep.subr.mxu0 0.0
    %3264 = vmatpush2.msra.mxu0 0.0
    %3265 = vmatprep.mubr.f32.mxu0 0.0
    %3266 = vmatmul.mubr.f32.gmra.mxu0 %v3193
    %v3267 = vpop.f32.mrf.mxu0
    %v3268 = vadd.f32 %v3188, %v3267
    %v3269 = vpop.f32.mrf.mxu0
    %v3270 = vadd.f32 %v3190, %v3269
    %3271 = vdwg.mxu0
    %v3272 = vld [vmem:[%s7] sm:$0x3]
    %v3274 = vlaneseq
    %v3275 = vshrl.u32 %v3274, 7
    %v3276 = vsub.s32 0, %v3275
    %v3277 = vrot.slane %v3272, %v3276
    %v3278 = vlaneseq
    %v3279 = vshrl.u32 %v3278, 7
    %v3280 = vsub.s32 1, %v3279
    %v3281 = vrot.slane %v3272, %v3280
    %v3284 = vadd.f32 %v3268, %v3277
    %v3285 = vadd.f32 %v3270, %v3281
    %vm3286 = vcmp.gt.f32.partialorder %v3284, 0.0
    %vm3287 = vcmp.gt.f32.partialorder %v3285, 0.0
    %v3288 = vmin.f32 %v3284, 0.0
    %v3289 = vmin.f32 %v3285, 0.0
    %v3290 = vmul.f32 %v3288, 1.442695
    %v3291 = vpow.pop %v3290
    %v3292 = vmul.f32 %v3289, 1.442695
    %v3293 = vpow.pop %v3292
    %v3294 = vsub.f32 %v3291, 1.0
    %v3295 = vsub.f32 %v3293, 1.0
    %v3296 = vsel %vm3286, %v3284, %v3294
    %v3297 = vsel %vm3287, %v3285, %v3295
    %v3298 = vld [vmem:[%s8] sm:$0xff]
    %v3299 = vld [vmem:[%s8 + $0x8] sm:$0xff]
    %v3300 = vld [vmem:[%s8 + $0x10] sm:$0xff]
    %v3301 = vld [vmem:[%s8 + $0x18] sm:$0xff]
    %v3302 = vld [vmem:[%s8 + $0x20] sm:$0xff]
    %v3303 = vld [vmem:[%s8 + $0x28] sm:$0xff]
    %v3304 = vld [vmem:[%s8 + $0x30] sm:$0xff]
    %v3305 = vld [vmem:[%s8 + $0x38] sm:$0xff]
    %v3306 = vld [vmem:[%s8 + $0x40] sm:$0xff]
    %v3307 = vld [vmem:[%s8 + $0x48] sm:$0xff]
    %v3308 = vld [vmem:[%s8 + $0x50] sm:$0xff]
    %v3309 = vld [vmem:[%s8 + $0x58] sm:$0xff]
    %v3310 = vld [vmem:[%s8 + $0x60] sm:$0xff]
    %v3311 = vld [vmem:[%s8 + $0x68] sm:$0xff]
    %v3312 = vld [vmem:[%s8 + $0x70] sm:$0xff]
    %v3313 = vld [vmem:[%s8 + $0x78] sm:$0xff]
    %v3314 = vld [vmem:[%s8 + $0x80] sm:$0xff]
    %v3315 = vld [vmem:[%s8 + $0x88] sm:$0xff]
    %v3316 = vld [vmem:[%s8 + $0x90] sm:$0xff]
    %v3317 = vld [vmem:[%s8 + $0x98] sm:$0xff]
    %v3318 = vld [vmem:[%s8 + $0xa0] sm:$0xff]
    %v3319 = vld [vmem:[%s8 + $0xa8] sm:$0xff]
    %v3320 = vld [vmem:[%s8 + $0xb0] sm:$0xff]
    %v3321 = vld [vmem:[%s8 + $0xb8] sm:$0xff]
    %v3322 = vld [vmem:[%s8 + $0xc0] sm:$0xff]
    %v3323 = vunpack.c.l.bf16 %v3298
    %v3324 = vunpack.c.h.bf16 %v3298
    %v3325 = vunpack.c.l.bf16 %v3299
    %v3326 = vunpack.c.h.bf16 %v3299
    %v3327 = vunpack.c.l.bf16 %v3300
    %v3328 = vunpack.c.h.bf16 %v3300
    %v3329 = vunpack.c.l.bf16 %v3301
    %v3330 = vunpack.c.h.bf16 %v3301
    %v3331 = vunpack.c.l.bf16 %v3302
    %v3332 = vunpack.c.h.bf16 %v3302
    %v3333 = vunpack.c.l.bf16 %v3303
    %v3334 = vunpack.c.h.bf16 %v3303
    %v3335 = vunpack.c.l.bf16 %v3304
    %v3336 = vunpack.c.h.bf16 %v3304
    %v3337 = vunpack.c.l.bf16 %v3305
    %v3338 = vunpack.c.h.bf16 %v3305
    %v3339 = vunpack.c.l.bf16 %v3306
    %v3340 = vunpack.c.h.bf16 %v3306
    %v3341 = vunpack.c.l.bf16 %v3307
    %v3342 = vunpack.c.h.bf16 %v3307
    %v3343 = vunpack.c.l.bf16 %v3308
    %v3344 = vunpack.c.h.bf16 %v3308
    %v3345 = vunpack.c.l.bf16 %v3309
    %v3346 = vunpack.c.h.bf16 %v3309
    %v3347 = vunpack.c.l.bf16 %v3310
    %v3348 = vunpack.c.h.bf16 %v3310
    %v3349 = vunpack.c.l.bf16 %v3311
    %v3350 = vunpack.c.h.bf16 %v3311
    %v3351 = vunpack.c.l.bf16 %v3312
    %v3352 = vunpack.c.h.bf16 %v3312
    %v3353 = vunpack.c.l.bf16 %v3313
    %v3354 = vunpack.c.h.bf16 %v3313
    %v3355 = vunpack.c.l.bf16 %v3314
    %v3356 = vunpack.c.h.bf16 %v3314
    %v3357 = vunpack.c.l.bf16 %v3315
    %v3358 = vunpack.c.h.bf16 %v3315
    %v3359 = vunpack.c.l.bf16 %v3316
    %v3360 = vunpack.c.h.bf16 %v3316
    %v3361 = vunpack.c.l.bf16 %v3317
    %v3362 = vunpack.c.h.bf16 %v3317
    %v3363 = vunpack.c.l.bf16 %v3318
    %v3364 = vunpack.c.h.bf16 %v3318
    %v3365 = vunpack.c.l.bf16 %v3319
    %v3366 = vunpack.c.h.bf16 %v3319
    %v3367 = vunpack.c.l.bf16 %v3320
    %v3368 = vunpack.c.h.bf16 %v3320
    %v3369 = vunpack.c.l.bf16 %v3321
    %v3370 = vunpack.c.h.bf16 %v3321
    %v3371 = vunpack.c.l.bf16 %v3322
    %v3372 = vunpack.c.h.bf16 %v3322
    %v3373 = vld [vmem:[%s9] sm:$0x3]
    %v3375 = vlaneseq
    %v3376 = vshrl.u32 %v3375, 7
    %v3377 = vsub.s32 0, %v3376
    %v3378 = vrot.slane %v3373, %v3377
    %v3379 = vlaneseq
    %v3380 = vshrl.u32 %v3379, 7
    %v3381 = vsub.s32 1, %v3380
    %v3382 = vrot.slane %v3373, %v3381
    %vm3385 = vcmask 588800
    %v3387 = vsel %vm3385, %v3297, 0
    %3389 = vmatprep.subr.mxu0 %v3354
    %3390 = vmatpush1.msra.mxu0 %v3353
    %3391 = vmatprep.subr.mxu0 %v3352
    %3392 = vmatpush1.msra.mxu0 %v3351
    %3393 = vmatprep.subr.mxu0 %v3350
    %3394 = vmatpush1.msra.mxu0 %v3349
    %3395 = vmatprep.subr.mxu0 %v3348
    %3396 = vmatpush1.msra.mxu0 %v3347
    %3397 = vmatprep.subr.mxu0 %v3346
    %3398 = vmatpush1.msra.mxu0 %v3345
    %3399 = vmatprep.subr.mxu0 %v3344
    %3400 = vmatpush1.msra.mxu0 %v3343
    %3401 = vmatprep.subr.mxu0 %v3342
    %3402 = vmatpush1.msra.mxu0 %v3341
    %3403 = vmatprep.subr.mxu0 %v3340
    %3404 = vmatpush1.msra.mxu0 %v3339
    %3405 = vmatprep.subr.mxu0 %v3338
    %3406 = vmatpush1.msra.mxu0 %v3337
    %3407 = vmatprep.subr.mxu0 %v3336
    %3408 = vmatpush1.msra.mxu0 %v3335
    %3409 = vmatprep.subr.mxu0 %v3334
    %3410 = vmatpush1.msra.mxu0 %v3333
    %3411 = vmatprep.subr.mxu0 %v3332
    %3412 = vmatpush1.msra.mxu0 %v3331
    %3413 = vmatprep.subr.mxu0 %v3330
    %3414 = vmatpush1.msra.mxu0 %v3329
    %3415 = vmatprep.subr.mxu0 %v3328
    %3416 = vmatpush1.msra.mxu0 %v3327
    %3417 = vmatprep.subr.mxu0 %v3326
    %3418 = vmatpush1.msra.mxu0 %v3325
    %3419 = vmatprep.subr.mxu0 %v3324
    %3420 = vmatpush1.msra.mxu0 %v3323
    %3421 = vmatprep.subr.mxu0 0.0
    %3422 = vmatpush2.msra.mxu0 0.0
    %3423 = vmatprep.subr.mxu0 0.0
    %3424 = vmatpush2.msra.mxu0 0.0
    %3425 = vmatprep.subr.mxu0 0.0
    %3426 = vmatpush2.msra.mxu0 0.0
    %3427 = vmatprep.subr.mxu0 0.0
    %3428 = vmatpush2.msra.mxu0 0.0
    %3429 = vmatprep.subr.mxu0 0.0
    %3430 = vmatpush2.msra.mxu0 0.0
    %3431 = vmatprep.subr.mxu0 0.0
    %3432 = vmatpush2.msra.mxu0 0.0
    %3433 = vmatprep.subr.mxu0 0.0
    %3434 = vmatpush2.msra.mxu0 0.0
    %3435 = vmatprep.subr.mxu0 %v3372
    %3436 = vmatpush2.msra.mxu0 %v3371
    %3437 = vmatprep.subr.mxu0 %v3370
    %3438 = vmatpush2.msra.mxu0 %v3369
    %3439 = vmatprep.subr.mxu0 %v3368
    %3440 = vmatpush2.msra.mxu0 %v3367
    %3441 = vmatprep.subr.mxu0 %v3366
    %3442 = vmatpush2.msra.mxu0 %v3365
    %3443 = vmatprep.subr.mxu0 %v3364
    %3444 = vmatpush2.msra.mxu0 %v3363
    %3445 = vmatprep.subr.mxu0 %v3362
    %3446 = vmatpush2.msra.mxu0 %v3361
    %3447 = vmatprep.subr.mxu0 %v3360
    %3448 = vmatpush2.msra.mxu0 %v3359
    %3449 = vmatprep.subr.mxu0 %v3358
    %3450 = vmatpush2.msra.mxu0 %v3357
    %3451 = vmatprep.subr.mxu0 %v3356
    %3452 = vmatpush2.msra.mxu0 %v3355
    %3453 = vmatprep.mubr.f32.mxu0 %v3387
    %3454 = vmatmul.mubr.f32.gmra.mxu0 %v3296
    %v3455 = vpop.f32.mrf.mxu0
    %v3456 = vadd.f32 %v3378, %v3455
    %v3457 = vpop.f32.mrf.mxu0
    %v3458 = vadd.f32 %v3382, %v3457
    %3459 = vdwg.mxu0
    %vm3460 = vcmp.gt.f32.partialorder %v3456, 0.0
    %vm3461 = vcmp.gt.f32.partialorder %v3458, 0.0
    %v3462 = vmin.f32 %v3456, 0.0
    %v3463 = vmin.f32 %v3458, 0.0
    %v3464 = vmul.f32 %v3462, 1.442695
    %v3465 = vpow.pop %v3464
    %v3466 = vmul.f32 %v3463, 1.442695
    %v3467 = vpow.pop %v3466
    %v3468 = vsub.f32 %v3465, 1.0
    %v3469 = vsub.f32 %v3467, 1.0
    %v3470 = vsel %vm3460, %v3456, %v3468
    %v3471 = vsel %vm3461, %v3458, %v3469
    %v3472 = vld [vmem:[%s10] sm:$0xf]
    %v3473 = vld [vmem:[%s10 + $0x4] sm:$0xf]
    %v3474 = vld [vmem:[%s10 + $0x8] sm:$0xf]
    %v3475 = vld [vmem:[%s10 + $0xc] sm:$0xf]
    %v3476 = vld [vmem:[%s10 + $0x10] sm:$0xf]
    %v3477 = vld [vmem:[%s10 + $0x14] sm:$0xf]
    %v3478 = vld [vmem:[%s10 + $0x18] sm:$0xf]
    %v3479 = vld [vmem:[%s10 + $0x1c] sm:$0xf]
    %v3480 = vld [vmem:[%s10 + $0x20] sm:$0xf]
    %v3481 = vld [vmem:[%s10 + $0x24] sm:$0xf]
    %v3482 = vld [vmem:[%s10 + $0x28] sm:$0xf]
    %v3483 = vld [vmem:[%s10 + $0x2c] sm:$0xf]
    %v3484 = vld [vmem:[%s10 + $0x30] sm:$0xf]
    %v3485 = vld [vmem:[%s10 + $0x34] sm:$0xf]
    %v3486 = vld [vmem:[%s10 + $0x38] sm:$0xf]
    %v3487 = vld [vmem:[%s10 + $0x3c] sm:$0xf]
    %v3488 = vld [vmem:[%s10 + $0x40] sm:$0xf]
    %v3489 = vld [vmem:[%s10 + $0x44] sm:$0xf]
    %v3490 = vld [vmem:[%s10 + $0x48] sm:$0xf]
    %v3491 = vld [vmem:[%s10 + $0x4c] sm:$0xf]
    %v3492 = vld [vmem:[%s10 + $0x50] sm:$0xf]
    %v3493 = vld [vmem:[%s10 + $0x54] sm:$0xf]
    %v3494 = vld [vmem:[%s10 + $0x58] sm:$0xf]
    %v3495 = vld [vmem:[%s10 + $0x5c] sm:$0xf]
    %v3496 = vld [vmem:[%s10 + $0x60] sm:$0xf]
    %v3497 = vunpack.c.l.bf16 %v3472
    %v3498 = vunpack.c.l.bf16 %v3473
    %v3499 = vunpack.c.l.bf16 %v3474
    %v3500 = vunpack.c.l.bf16 %v3475
    %v3501 = vunpack.c.l.bf16 %v3476
    %v3502 = vunpack.c.l.bf16 %v3477
    %v3503 = vunpack.c.l.bf16 %v3478
    %v3504 = vunpack.c.l.bf16 %v3479
    %v3505 = vunpack.c.l.bf16 %v3480
    %v3506 = vunpack.c.l.bf16 %v3481
    %v3507 = vunpack.c.l.bf16 %v3482
    %v3508 = vunpack.c.l.bf16 %v3483
    %v3509 = vunpack.c.l.bf16 %v3484
    %v3510 = vunpack.c.l.bf16 %v3485
    %v3511 = vunpack.c.l.bf16 %v3486
    %v3512 = vunpack.c.l.bf16 %v3487
    %v3513 = vunpack.c.l.bf16 %v3488
    %v3514 = vunpack.c.l.bf16 %v3489
    %v3515 = vunpack.c.l.bf16 %v3490
    %v3516 = vunpack.c.l.bf16 %v3491
    %v3517 = vunpack.c.l.bf16 %v3492
    %v3518 = vunpack.c.l.bf16 %v3493
    %v3519 = vunpack.c.l.bf16 %v3494
    %v3520 = vunpack.c.l.bf16 %v3495
    %v3521 = vunpack.c.l.bf16 %v3496
    %v3522 = vld [vmem:[%s11] sm:$0x1]
    %v3524 = vlaneseq
    %v3525 = vshrl.u32 %v3524, 7
    %v3526 = vsub.s32 0, %v3525
    %v3527 = vrot.slane %v3522, %v3526
    %v3530 = vsel %vm3385, %v3471, 0
    %3532 = vmatprep.subr.mxu0 0.0
    %3533 = vmatpush1.msra.mxu0 %v3512
    %3534 = vmatprep.subr.mxu0 0.0
    %3535 = vmatpush1.msra.mxu0 %v3511
    %3536 = vmatprep.subr.mxu0 0.0
    %3537 = vmatpush1.msra.mxu0 %v3510
    %3538 = vmatprep.subr.mxu0 0.0
    %3539 = vmatpush1.msra.mxu0 %v3509
    %3540 = vmatprep.subr.mxu0 0.0
    %3541 = vmatpush1.msra.mxu0 %v3508
    %3542 = vmatprep.subr.mxu0 0.0
    %3543 = vmatpush1.msra.mxu0 %v3507
    %3544 = vmatprep.subr.mxu0 0.0
    %3545 = vmatpush1.msra.mxu0 %v3506
    %3546 = vmatprep.subr.mxu0 0.0
    %3547 = vmatpush1.msra.mxu0 %v3505
    %3548 = vmatprep.subr.mxu0 0.0
    %3549 = vmatpush1.msra.mxu0 %v3504
    %3550 = vmatprep.subr.mxu0 0.0
    %3551 = vmatpush1.msra.mxu0 %v3503
    %3552 = vmatprep.subr.mxu0 0.0
    %3553 = vmatpush1.msra.mxu0 %v3502
    %3554 = vmatprep.subr.mxu0 0.0
    %3555 = vmatpush1.msra.mxu0 %v3501
    %3556 = vmatprep.subr.mxu0 0.0
    %3557 = vmatpush1.msra.mxu0 %v3500
    %3558 = vmatprep.subr.mxu0 0.0
    %3559 = vmatpush1.msra.mxu0 %v3499
    %3560 = vmatprep.subr.mxu0 0.0
    %3561 = vmatpush1.msra.mxu0 %v3498
    %3562 = vmatprep.subr.mxu0 0.0
    %3563 = vmatpush1.msra.mxu0 %v3497
    %3564 = vmatprep.subr.mxu0 0.0
    %3565 = vmatpush2.msra.mxu0 0.0
    %3566 = vmatprep.subr.mxu0 0.0
    %3567 = vmatpush2.msra.mxu0 0.0
    %3568 = vmatprep.subr.mxu0 0.0
    %3569 = vmatpush2.msra.mxu0 0.0
    %3570 = vmatprep.subr.mxu0 0.0
    %3571 = vmatpush2.msra.mxu0 0.0
    %3572 = vmatprep.subr.mxu0 0.0
    %3573 = vmatpush2.msra.mxu0 0.0
    %3574 = vmatprep.subr.mxu0 0.0
    %3575 = vmatpush2.msra.mxu0 0.0
    %3576 = vmatprep.subr.mxu0 0.0
    %3577 = vmatpush2.msra.mxu0 0.0
    %3578 = vmatprep.subr.mxu0 0.0
    %3579 = vmatpush2.msra.mxu0 %v3521
    %3580 = vmatprep.subr.mxu0 0.0
    %3581 = vmatpush2.msra.mxu0 %v3520
    %3582 = vmatprep.subr.mxu0 0.0
    %3583 = vmatpush2.msra.mxu0 %v3519
    %3584 = vmatprep.subr.mxu0 0.0
    %3585 = vmatpush2.msra.mxu0 %v3518
    %3586 = vmatprep.subr.mxu0 0.0
    %3587 = vmatpush2.msra.mxu0 %v3517
    %3588 = vmatprep.subr.mxu0 0.0
    %3589 = vmatpush2.msra.mxu0 %v3516
    %3590 = vmatprep.subr.mxu0 0.0
    %3591 = vmatpush2.msra.mxu0 %v3515
    %3592 = vmatprep.subr.mxu0 0.0
    %3593 = vmatpush2.msra.mxu0 %v3514
    %3594 = vmatprep.subr.mxu0 0.0
    %3595 = vmatpush2.msra.mxu0 %v3513
    %3596 = vmatprep.mubr.f32.mxu0 %v3530
    %3597 = vmatmul.mubr.f32.gmra.mxu0 %v3470
    %v3598 = vpop.f32.mrf.mxu0
    %v3599 = vadd.f32 %v3527, %v3598
    %v3600 = vpop.f32.mrf.mxu0
    %3601 = vdwg.mxu0
    %vm3602 = vcmp.gt.f32.partialorder %v3599, 0.0
    %v3603 = vmin.f32 %v3599, 0.0
    %v3604 = vmul.f32 %v3603, 1.442695
    %v3605 = vpow.pop %v3604
    %v3606 = vsub.f32 %v3605, 1.0
    %v3607 = vsel %vm3602, %v3599, %v3606
    %v3608 = vld [vmem:[%s12] sm:$0xf]
    %v3609 = vld [vmem:[%s12 + $0x4] sm:$0xf]
    %v3610 = vld [vmem:[%s12 + $0x8] sm:$0xf]
    %v3611 = vld [vmem:[%s12 + $0xc] sm:$0xf]
    %v3612 = vld [vmem:[%s12 + $0x10] sm:$0xf]
    %v3613 = vld [vmem:[%s12 + $0x14] sm:$0xf]
    %v3614 = vld [vmem:[%s12 + $0x18] sm:$0xf]
    %v3615 = vld [vmem:[%s12 + $0x1c] sm:$0xf]
    %v3616 = vld [vmem:[%s12 + $0x20] sm:$0xf]
    %v3617 = vld [vmem:[%s12 + $0x24] sm:$0xf]
    %v3618 = vld [vmem:[%s12 + $0x28] sm:$0xf]
    %v3619 = vld [vmem:[%s12 + $0x2c] sm:$0xf]
    %v3620 = vld [vmem:[%s12 + $0x30] sm:$0x3]
    %v3621 = vunpack.c.l.bf16 %v3608
    %v3622 = vunpack.c.l.bf16 %v3609
    %v3623 = vunpack.c.l.bf16 %v3610
    %v3624 = vunpack.c.l.bf16 %v3611
    %v3625 = vunpack.c.l.bf16 %v3612
    %v3626 = vunpack.c.l.bf16 %v3613
    %v3627 = vunpack.c.l.bf16 %v3614
    %v3628 = vunpack.c.l.bf16 %v3615
    %v3629 = vunpack.c.l.bf16 %v3616
    %v3630 = vunpack.c.l.bf16 %v3617
    %v3631 = vunpack.c.l.bf16 %v3618
    %v3632 = vunpack.c.l.bf16 %v3619
    %v3633 = vunpack.c.l.bf16 %v3620
    %v3634 = vld [vmem:[%s13] sm:$0x1]
    %v3636 = vlaneseq
    %v3637 = vshrl.u32 %v3636, 7
    %v3638 = vsub.s32 0, %v3637
    %v3639 = vrot.slane %v3634, %v3638
    %vm3641 = vcmask 818176
    %v3643 = vsel %vm3641, %v3607, 0
    %vm3645 = vcmask 1043456
    %v3647 = vsel %vm3645, %v3633, 0
    %3649 = vmatprep.subr.mxu0 0.0
    %3650 = vmatpush1.msra.mxu0 0.0
    %3651 = vmatprep.subr.mxu0 0.0
    %3652 = vmatpush1.msra.mxu0 0.0
    %3653 = vmatprep.subr.mxu0 0.0
    %3654 = vmatpush1.msra.mxu0 0.0
    %3655 = vmatprep.subr.mxu0 0.0
    %3656 = vmatpush1.msra.mxu0 %v3647
    %3657 = vmatprep.subr.mxu0 0.0
    %3658 = vmatpush1.msra.mxu0 %v3632
    %3659 = vmatprep.subr.mxu0 0.0
    %3660 = vmatpush1.msra.mxu0 %v3631
    %3661 = vmatprep.subr.mxu0 0.0
    %3662 = vmatpush1.msra.mxu0 %v3630
    %3663 = vmatprep.subr.mxu0 0.0
    %3664 = vmatpush1.msra.mxu0 %v3629
    %3665 = vmatprep.subr.mxu0 0.0
    %3666 = vmatpush1.msra.mxu0 %v3628
    %3667 = vmatprep.subr.mxu0 0.0
    %3668 = vmatpush1.msra.mxu0 %v3627
    %3669 = vmatprep.subr.mxu0 0.0
    %3670 = vmatpush1.msra.mxu0 %v3626
    %3671 = vmatprep.subr.mxu0 0.0
    %3672 = vmatpush1.msra.mxu0 %v3625
    %3673 = vmatprep.subr.mxu0 0.0
    %3674 = vmatpush1.msra.mxu0 %v3624
    %3675 = vmatprep.subr.mxu0 0.0
    %3676 = vmatpush1.msra.mxu0 %v3623
    %3677 = vmatprep.subr.mxu0 0.0
    %3678 = vmatpush1.msra.mxu0 %v3622
    %3679 = vmatprep.subr.mxu0 0.0
    %3680 = vmatpush1.msra.mxu0 %v3621
    %3681 = vmatprep.subr.mxu0 0.0
    %3682 = vmatpush2.msra.mxu0 0.0
    %3683 = vmatprep.subr.mxu0 0.0
    %3684 = vmatpush2.msra.mxu0 0.0
    %3685 = vmatprep.subr.mxu0 0.0
    %3686 = vmatpush2.msra.mxu0 0.0
    %3687 = vmatprep.subr.mxu0 0.0
    %3688 = vmatpush2.msra.mxu0 0.0
    %3689 = vmatprep.subr.mxu0 0.0
    %3690 = vmatpush2.msra.mxu0 0.0
    %3691 = vmatprep.subr.mxu0 0.0
    %3692 = vmatpush2.msra.mxu0 0.0
    %3693 = vmatprep.subr.mxu0 0.0
    %3694 = vmatpush2.msra.mxu0 0.0
    %3695 = vmatprep.subr.mxu0 0.0
    %3696 = vmatpush2.msra.mxu0 0.0
    %3697 = vmatprep.subr.mxu0 0.0
    %3698 = vmatpush2.msra.mxu0 0.0
    %3699 = vmatprep.subr.mxu0 0.0
    %3700 = vmatpush2.msra.mxu0 0.0
    %3701 = vmatprep.subr.mxu0 0.0
    %3702 = vmatpush2.msra.mxu0 0.0
    %3703 = vmatprep.subr.mxu0 0.0
    %3704 = vmatpush2.msra.mxu0 0.0
    %3705 = vmatprep.subr.mxu0 0.0
    %3706 = vmatpush2.msra.mxu0 0.0
    %3707 = vmatprep.subr.mxu0 0.0
    %3708 = vmatpush2.msra.mxu0 0.0
    %3709 = vmatprep.subr.mxu0 0.0
    %3710 = vmatpush2.msra.mxu0 0.0
    %3711 = vmatprep.subr.mxu0 0.0
    %3712 = vmatpush2.msra.mxu0 0.0
    %3713 = vmatprep.mubr.f32.mxu0 0.0
    %3714 = vmatmul.mubr.f32.gmra.mxu0 %v3643
    %v3715 = vpop.f32.mrf.mxu0
    %v3716 = vadd.f32 %v3639, %v3715
    %v3717 = vpop.f32.mrf.mxu0
    %3718 = vdwg.mxu0
    %vm3719 = vcmask 76800
    %3720 = vst.msk [vmem:[#allocation5] sm:$0xf] %vm3719, %v3716
    // Predicated region
    $region62: #{tpu_custom_call.1} parent=1 // pred_check
      _
    $region63: #{tpu_custom_call.1} parent=1 // pred_check_branch
      %3722 = sbr.rel (0) target = $region65
    $region64: #{tpu_custom_call.1} parent=1 // pred_region
      %s3724 = ssub.s32 64, 64
      %3725 = vsyncadd [#allocation4], %s3724
      %s3727 = sshll.u32 [#allocation5], 4
      %s3728 = int_to_ptr.vmem [resolvable:$true] %s3727
      %3730 = dma.vmem_to_hbm [thread:$0]  %s3728, 64, %s14, [#allocation4]
    $region65: #{tpu_custom_call.1} parent=1 // pred_fallthru
      _
    // Predicated region
    $region66: #{tpu_custom_call.1} parent=1 // pred_check
      _
    $region67: #{tpu_custom_call.1} parent=1 // pred_check_branch
      %3732 = sbr.rel (0) target = $region69
    $region68: #{tpu_custom_call.1} parent=1 // pred_region
      %3733 = dma.done [#allocation4], 64
    $region69: #{tpu_custom_call.1} parent=1 // pred_fallthru
      _
    %3734 = vsyncpa [#allocation3], 1
    %3735 = vsyncpa [#allocation4], 1

</llo_original>
